<compile_context>
chip_gen: v7x
topology: tpu7x:2x2x1
jax: 0.10.0
libtpu: 0.0.40
codegen_flags: <defaults>
</compile_context>

<pallas_src>
import functools

import jax
import jax.numpy as jnp
from jax.experimental import pallas as pl
from jax.experimental.pallas import tpu as pltpu  # noqa: F401  (TPU backend)


# ----------------------------------------------------------------------------
# Fully fused kernel:
#   conv1+ReLU -> conv2+ReLU -> GAP -> cls0+ReLU -> [cls1 || dom0+ReLU] -> dom1
# ----------------------------------------------------------------------------
def _dann_fused_kernel(x_ref, w1_ref, b1_ref, w2_ref, b2_ref,
                       w3_ref, b3_ref, wcd_ref, bcd_ref,
                       wd1_ref, bd1_ref, o_ref,
                       *, B, H, W, n_cls, n_dom, out_w):
    """Whole DANN forward for the full batch in one VMEM-resident step.

    x_ref  : (B, H, W, Cin)   NHWC input (unpadded)
    w1_ref : (9*Cin, C1)      conv1 weight, im2col layout (dh, dw, cin)
    b1_ref : (1, C1)
    w2_ref : (9*C1, C2)       conv2 weight, im2col layout
    b2_ref : (1, C2)
    w3_ref : (C2, D0)         cls0 weight, pre-scaled by 1/(H*W) (GAP folded in)
    b3_ref : (1, D0)
    wcd_ref: (D0, n_cls+Dd)   [cls1_w || dom0_w] merged head weight
    bcd_ref: (1, n_cls+Dd)
    wd1_ref: (Dd, n_dom)      dom1 weight
    bd1_ref: (1, n_dom)
    o_ref  : (B, out_w)       lane-dense slab [feats32 || class || domain || 0]
    """

    def conv3x3_relu(x, w_ref, b_ref):
        # x: (B, H, W, Cin) -> (B*H*W, Cout) via one batched im2col matmul.
        cin = x.shape[-1]
        # 1-pixel zero halo for the whole batch at once.
        zh = jnp.zeros((B, 1, W, cin), x.dtype)
        xp = jnp.concatenate([zh, x, zh], axis=1)            # (B, H+2, W,   Cin)
        zw = jnp.zeros((B, H + 2, 1, cin), x.dtype)
        xp = jnp.concatenate([zw, xp, zw], axis=2)           # (B, H+2, W+2, Cin)
        # 9 taps, concatenated along lanes first, reshaped ONCE.
        taps = [xp[:, dh:dh + H, dw:dw + W, :]
                for dh in range(3) for dw in range(3)]
        patches = jnp.concatenate(taps, axis=-1)             # (B, H, W, 9*Cin)
        patches = patches.reshape(B * H * W, 9 * cin)        # single reshape
        y = jnp.dot(patches, w_ref[...],
                    preferred_element_type=jnp.float32)      # (B*H*W, Cout)
        return jnp.maximum(y + b_ref[...], 0.0)

    # features: two convs, each one MXU matmul for the whole batch.
    h1 = conv3x3_relu(x_ref[...], w1_ref, b1_ref)            # (B*H*W, C1)
    c1 = h1.shape[-1]
    h2 = conv3x3_relu(h1.reshape(B, H, W, c1), w2_ref, b2_ref)  # (B*H*W, C2)

    # pooling: global average pool (1/(H*W) folded into w3) + flatten.
    rows = []
    for b in range(B):  # B is small & static; per-image cross-sublane sum.
        rows.append(jnp.sum(h2[b * H * W:(b + 1) * H * W, :],
                            axis=0, keepdims=True))          # (1, C2)
    pooled = jnp.concatenate(rows, axis=0)                   # (B, C2)

    # class_classifier[0]: Linear + ReLU (GAP scale already folded into w3).
    feats = jnp.maximum(
        jnp.dot(pooled, w3_ref[...],
                preferred_element_type=jnp.float32) + b3_ref[...], 0.0)  # (B,D0)

    # class_classifier[1] and domain_classifier[0] as ONE merged matmul.
    # (GradientReversalLayer is identity in the forward pass, so the domain
    #  branch reads the same activations as the class branch.)
    merged = jnp.dot(feats, wcd_ref[...],
                     preferred_element_type=jnp.float32) + bcd_ref[...]
    cls_logits = merged[:, :n_cls]                           # (B, n_cls)
    dom_h = jnp.maximum(merged[:, n_cls:], 0.0)              # (B, Dd)
    dom_logits = jnp.dot(dom_h, wd1_ref[...],
                         preferred_element_type=jnp.float32) + bd1_ref[...]

    # Single lane-dense output slab.
    d0 = feats.shape[-1]
    pad = out_w - (d0 + n_cls + n_dom)
    o_ref[...] = jnp.concatenate(
        [feats, cls_logits, dom_logits, jnp.zeros((B, pad), jnp.float32)],
        axis=-1)


def _dann_fused(x_nhwc, p):
    B, H, W, Cin = x_nhwc.shape
    C1 = p["conv1_w"].shape[-1]
    C2 = p["conv2_w"].shape[-1]
    D0 = p["cls0_w"].shape[-1]
    n_cls = p["cls1_w"].shape[-1]
    n_dom = p["dom1_w"].shape[-1]
    out_w = max(128, -(-(D0 + n_cls + n_dom) // 128) * 128)  # lane-dense width

    # Trace-time weight prep (free): im2col layout, GAP fold, head merge.
    w1 = p["conv1_w"].reshape(9 * Cin, C1)
    w2 = p["conv2_w"].reshape(9 * C1, C2)
    w3 = p["cls0_w"] * (1.0 / (H * W))
    wcd = jnp.concatenate([p["cls1_w"], p["dom0_w"]], axis=1)
    bcd = jnp.concatenate([p["cls1_b"], p["dom0_b"]]).reshape(1, -1)

    slab = pl.pallas_call(
        functools.partial(_dann_fused_kernel, B=B, H=H, W=W,
                          n_cls=n_cls, n_dom=n_dom, out_w=out_w),
        out_shape=jax.ShapeDtypeStruct((B, out_w), jnp.float32),
    )(x_nhwc, w1, p["conv1_b"].reshape(1, C1),
      w2, p["conv2_b"].reshape(1, C2),
      w3, p["cls0_b"].reshape(1, D0),
      wcd, bcd,
      p["dom1_w"], p["dom1_b"].reshape(1, n_dom))

    feats32 = slab[:, :D0]
    class_logits = slab[:, D0:D0 + n_cls]
    domain_logits = slab[:, D0 + n_cls:D0 + n_cls + n_dom]
    return feats32, class_logits, domain_logits


# ----------------------------------------------------------------------------
# Gradient reversal layer (identity forward, -alpha * grad backward).
# ----------------------------------------------------------------------------
@jax.custom_vjp
def gradient_reversal(x, alpha):
    return x


def _grl_fwd(x, alpha):
    return x, alpha


def _grl_bwd(alpha, g):
    return (-alpha * g, None)


gradient_reversal.defvjp(_grl_fwd, _grl_bwd)


# ----------------------------------------------------------------------------
# DANN model
# ----------------------------------------------------------------------------
def init_params(key):
    ks = jax.random.split(key, 12)
    s = 0.1
    return {
        "conv1_w": jax.random.normal(ks[0], (3, 3, 4, 8), jnp.float32) * s,
        "conv1_b": jax.random.normal(ks[1], (8,), jnp.float32) * s,
        "conv2_w": jax.random.normal(ks[2], (3, 3, 8, 16), jnp.float32) * s,
        "conv2_b": jax.random.normal(ks[3], (16,), jnp.float32) * s,
        "cls0_w": jax.random.normal(ks[4], (16, 32), jnp.float32) * s,
        "cls0_b": jax.random.normal(ks[5], (32,), jnp.float32) * s,
        "cls1_w": jax.random.normal(ks[6], (32, 10), jnp.float32) * s,
        "cls1_b": jax.random.normal(ks[7], (10,), jnp.float32) * s,
        "dom0_w": jax.random.normal(ks[8], (32, 16), jnp.float32) * s,
        "dom0_b": jax.random.normal(ks[9], (16,), jnp.float32) * s,
        "dom1_w": jax.random.normal(ks[10], (16, 2), jnp.float32) * s,
        "dom1_b": jax.random.normal(ks[11], (2,), jnp.float32) * s,
    }


def dann_forward(params, x_nchw, rev_grad_alpha=1.0):
    # layout: NCHW (PyTorch) -> NHWC for the TPU kernel.
    x = jnp.transpose(x_nchw, (0, 2, 3, 1)).astype(jnp.float32)

    # The gradient reversal layer is identity in the forward pass, so the
    # domain head is computed directly from feats32 inside the fused kernel.
    # TODO(synk): for training, split the head kernel at the GRL boundary and
    # wrap the Pallas calls in custom_vjp so -rev_grad_alpha gradients flow
    # (see `gradient_reversal` above); the fused path is inference-only.
    feats32, class_logits, domain_logits = _dann_fused(x, params)

    return {
        "class": class_logits,                        # [B, 10]
        "domain": domain_logits,                      # [B, 2]
        "classifier_layers": [feats32, class_logits],
    }


if __name__ == "__main__":
    key = jax.random.PRNGKey(0)
    k_param, k_input = jax.random.split(key)
    params = init_params(k_param)
    x = jax.random.normal(k_input, (2, 4, 16, 16), jnp.float32)  # NCHW

    out = jax.jit(dann_forward)(params, x)
    jax.block_until_ready(out)

    assert out["class"].shape == (2, 10)
    assert out["domain"].shape == (2, 2)
    assert len(out["classifier_layers"]) == 2
    assert out["classifier_layers"][0].shape == (2, 32)
    print("KERNEL_OK")
</pallas_src>

<mosaic_0001>
module attributes {stable_mosaic.version = 11 : i64} {
  func.func @_dann_fused_kernel(%arg0: memref<2x16x16x4xf32, #tpu.memory_space<vmem>>, %arg1: memref<36x8xf32, #tpu.memory_space<vmem>>, %arg2: memref<1x8xf32, #tpu.memory_space<vmem>>, %arg3: memref<72x16xf32, #tpu.memory_space<vmem>>, %arg4: memref<1x16xf32, #tpu.memory_space<vmem>>, %arg5: memref<16x32xf32, #tpu.memory_space<vmem>>, %arg6: memref<1x32xf32, #tpu.memory_space<vmem>>, %arg7: memref<32x26xf32, #tpu.memory_space<vmem>>, %arg8: memref<1x26xf32, #tpu.memory_space<vmem>>, %arg9: memref<16x2xf32, #tpu.memory_space<vmem>>, %arg10: memref<1x2xf32, #tpu.memory_space<vmem>>, %arg11: memref<2x128xf32, #tpu.memory_space<vmem>>) attributes {dimension_semantics = [], scalar_prefetch = 0 : i64, scratch_operands = 0 : i64, tpu.core_type = #tpu.core_type<tc>} {
    %c0 = arith.constant 0 : index
    %c0_0 = arith.constant 0 : index
    %c0_1 = arith.constant 0 : index
    %c0_2 = arith.constant 0 : index
    %0 = vector.load %arg0[%c0, %c0_0, %c0_1, %c0_2] : memref<2x16x16x4xf32, #tpu.memory_space<vmem>>, vector<2x16x16x4xf32>
    %cst = arith.constant 0.000000e+00 : f32
    %1 = vector.broadcast %cst : f32 to vector<2x1x16x4xf32>
    %2 = tpu.concatenate %1, %0, %1 in 1 : vector<2x1x16x4xf32>, vector<2x16x16x4xf32>, vector<2x1x16x4xf32> -> vector<2x18x16x4xf32>
    %cst_3 = arith.constant 0.000000e+00 : f32
    %3 = vector.broadcast %cst_3 : f32 to vector<2x18x1x4xf32>
    %4 = tpu.concatenate %3, %2, %3 in 2 : vector<2x18x1x4xf32>, vector<2x18x16x4xf32>, vector<2x18x1x4xf32> -> vector<2x18x18x4xf32>
    %5 = vector.extract_strided_slice %4 {offsets = [0, 0, 0, 0], sizes = [2, 16, 16, 4], strides = [1, 1, 1, 1]} : vector<2x18x18x4xf32> to vector<2x16x16x4xf32>
    %6 = vector.extract_strided_slice %4 {offsets = [0, 0, 1, 0], sizes = [2, 16, 16, 4], strides = [1, 1, 1, 1]} : vector<2x18x18x4xf32> to vector<2x16x16x4xf32>
    %7 = vector.extract_strided_slice %4 {offsets = [0, 0, 2, 0], sizes = [2, 16, 16, 4], strides = [1, 1, 1, 1]} : vector<2x18x18x4xf32> to vector<2x16x16x4xf32>
    %8 = vector.extract_strided_slice %4 {offsets = [0, 1, 0, 0], sizes = [2, 16, 16, 4], strides = [1, 1, 1, 1]} : vector<2x18x18x4xf32> to vector<2x16x16x4xf32>
    %9 = vector.extract_strided_slice %4 {offsets = [0, 1, 1, 0], sizes = [2, 16, 16, 4], strides = [1, 1, 1, 1]} : vector<2x18x18x4xf32> to vector<2x16x16x4xf32>
    %10 = vector.extract_strided_slice %4 {offsets = [0, 1, 2, 0], sizes = [2, 16, 16, 4], strides = [1, 1, 1, 1]} : vector<2x18x18x4xf32> to vector<2x16x16x4xf32>
    %11 = vector.extract_strided_slice %4 {offsets = [0, 2, 0, 0], sizes = [2, 16, 16, 4], strides = [1, 1, 1, 1]} : vector<2x18x18x4xf32> to vector<2x16x16x4xf32>
    %12 = vector.extract_strided_slice %4 {offsets = [0, 2, 1, 0], sizes = [2, 16, 16, 4], strides = [1, 1, 1, 1]} : vector<2x18x18x4xf32> to vector<2x16x16x4xf32>
    %13 = vector.extract_strided_slice %4 {offsets = [0, 2, 2, 0], sizes = [2, 16, 16, 4], strides = [1, 1, 1, 1]} : vector<2x18x18x4xf32> to vector<2x16x16x4xf32>
    %14 = tpu.concatenate %5, %6, %7, %8, %9, %10, %11, %12, %13 in 3 : vector<2x16x16x4xf32>, vector<2x16x16x4xf32>, vector<2x16x16x4xf32>, vector<2x16x16x4xf32>, vector<2x16x16x4xf32>, vector<2x16x16x4xf32>, vector<2x16x16x4xf32>, vector<2x16x16x4xf32>, vector<2x16x16x4xf32> -> vector<2x16x16x36xf32>
    %15 = vector.shape_cast %14 : vector<2x16x16x36xf32> to vector<512x36xf32>
    %c0_4 = arith.constant 0 : index
    %c0_5 = arith.constant 0 : index
    %16 = vector.load %arg1[%c0_4, %c0_5] : memref<36x8xf32, #tpu.memory_space<vmem>>, vector<36x8xf32>
    %cst_6 = arith.constant dense<0.000000e+00> : vector<512x8xf32>
    %17 = tpu.matmul %15, %16, %cst_6 {dimension_numbers = #tpu.dot_dimension_numbers<[1], [0], [0], [1], [0, 0, 1, 1], [], []>} : vector<512x36xf32>, vector<36x8xf32>, vector<512x8xf32> -> vector<512x8xf32>
    %c0_7 = arith.constant 0 : index
    %c0_8 = arith.constant 0 : index
    %18 = vector.load %arg2[%c0_7, %c0_8] : memref<1x8xf32, #tpu.memory_space<vmem>>, vector<1x8xf32>
    %19 = vector.broadcast %18 : vector<1x8xf32> to vector<512x8xf32>
    %20 = arith.addf %17, %19 : vector<512x8xf32>
    %cst_9 = arith.constant 0.000000e+00 : f32
    %21 = vector.broadcast %cst_9 : f32 to vector<512x8xf32>
    %22 = arith.maximumf %20, %21 : vector<512x8xf32>
    %23 = vector.shape_cast %22 : vector<512x8xf32> to vector<2x16x16x8xf32>
    %cst_10 = arith.constant 0.000000e+00 : f32
    %24 = vector.broadcast %cst_10 : f32 to vector<2x1x16x8xf32>
    %25 = tpu.concatenate %24, %23, %24 in 1 : vector<2x1x16x8xf32>, vector<2x16x16x8xf32>, vector<2x1x16x8xf32> -> vector<2x18x16x8xf32>
    %cst_11 = arith.constant 0.000000e+00 : f32
    %26 = vector.broadcast %cst_11 : f32 to vector<2x18x1x8xf32>
    %27 = tpu.concatenate %26, %25, %26 in 2 : vector<2x18x1x8xf32>, vector<2x18x16x8xf32>, vector<2x18x1x8xf32> -> vector<2x18x18x8xf32>
    %28 = vector.extract_strided_slice %27 {offsets = [0, 0, 0, 0], sizes = [2, 16, 16, 8], strides = [1, 1, 1, 1]} : vector<2x18x18x8xf32> to vector<2x16x16x8xf32>
    %29 = vector.extract_strided_slice %27 {offsets = [0, 0, 1, 0], sizes = [2, 16, 16, 8], strides = [1, 1, 1, 1]} : vector<2x18x18x8xf32> to vector<2x16x16x8xf32>
    %30 = vector.extract_strided_slice %27 {offsets = [0, 0, 2, 0], sizes = [2, 16, 16, 8], strides = [1, 1, 1, 1]} : vector<2x18x18x8xf32> to vector<2x16x16x8xf32>
    %31 = vector.extract_strided_slice %27 {offsets = [0, 1, 0, 0], sizes = [2, 16, 16, 8], strides = [1, 1, 1, 1]} : vector<2x18x18x8xf32> to vector<2x16x16x8xf32>
    %32 = vector.extract_strided_slice %27 {offsets = [0, 1, 1, 0], sizes = [2, 16, 16, 8], strides = [1, 1, 1, 1]} : vector<2x18x18x8xf32> to vector<2x16x16x8xf32>
    %33 = vector.extract_strided_slice %27 {offsets = [0, 1, 2, 0], sizes = [2, 16, 16, 8], strides = [1, 1, 1, 1]} : vector<2x18x18x8xf32> to vector<2x16x16x8xf32>
    %34 = vector.extract_strided_slice %27 {offsets = [0, 2, 0, 0], sizes = [2, 16, 16, 8], strides = [1, 1, 1, 1]} : vector<2x18x18x8xf32> to vector<2x16x16x8xf32>
    %35 = vector.extract_strided_slice %27 {offsets = [0, 2, 1, 0], sizes = [2, 16, 16, 8], strides = [1, 1, 1, 1]} : vector<2x18x18x8xf32> to vector<2x16x16x8xf32>
    %36 = vector.extract_strided_slice %27 {offsets = [0, 2, 2, 0], sizes = [2, 16, 16, 8], strides = [1, 1, 1, 1]} : vector<2x18x18x8xf32> to vector<2x16x16x8xf32>
    %37 = tpu.concatenate %28, %29, %30, %31, %32, %33, %34, %35, %36 in 3 : vector<2x16x16x8xf32>, vector<2x16x16x8xf32>, vector<2x16x16x8xf32>, vector<2x16x16x8xf32>, vector<2x16x16x8xf32>, vector<2x16x16x8xf32>, vector<2x16x16x8xf32>, vector<2x16x16x8xf32>, vector<2x16x16x8xf32> -> vector<2x16x16x72xf32>
    %38 = vector.shape_cast %37 : vector<2x16x16x72xf32> to vector<512x72xf32>
    %c0_12 = arith.constant 0 : index
    %c0_13 = arith.constant 0 : index
    %39 = vector.load %arg3[%c0_12, %c0_13] : memref<72x16xf32, #tpu.memory_space<vmem>>, vector<72x16xf32>
    %cst_14 = arith.constant dense<0.000000e+00> : vector<512x16xf32>
    %40 = tpu.matmul %38, %39, %cst_14 {dimension_numbers = #tpu.dot_dimension_numbers<[1], [0], [0], [1], [0, 0, 1, 1], [], []>} : vector<512x72xf32>, vector<72x16xf32>, vector<512x16xf32> -> vector<512x16xf32>
    %c0_15 = arith.constant 0 : index
    %c0_16 = arith.constant 0 : index
    %41 = vector.load %arg4[%c0_15, %c0_16] : memref<1x16xf32, #tpu.memory_space<vmem>>, vector<1x16xf32>
    %42 = vector.broadcast %41 : vector<1x16xf32> to vector<512x16xf32>
    %43 = arith.addf %40, %42 : vector<512x16xf32>
    %cst_17 = arith.constant 0.000000e+00 : f32
    %44 = vector.broadcast %cst_17 : f32 to vector<512x16xf32>
    %45 = arith.maximumf %43, %44 : vector<512x16xf32>
    %46 = vector.extract_strided_slice %45 {offsets = [0, 0], sizes = [256, 16], strides = [1, 1]} : vector<512x16xf32> to vector<256x16xf32>
    %cst_18 = arith.constant dense<0.000000e+00> : vector<16xf32>
    %47 = vector.multi_reduction <add>, %46, %cst_18 [0] : vector<256x16xf32> to vector<16xf32>
    %48 = vector.shape_cast %47 : vector<16xf32> to vector<1x16xf32>
    %49 = vector.extract_strided_slice %45 {offsets = [256, 0], sizes = [256, 16], strides = [1, 1]} : vector<512x16xf32> to vector<256x16xf32>
    %cst_19 = arith.constant dense<0.000000e+00> : vector<16xf32>
    %50 = vector.multi_reduction <add>, %49, %cst_19 [0] : vector<256x16xf32> to vector<16xf32>
    %51 = vector.shape_cast %50 : vector<16xf32> to vector<1x16xf32>
    %52 = tpu.concatenate %48, %51 in 0 : vector<1x16xf32>, vector<1x16xf32> -> vector<2x16xf32>
    %c0_20 = arith.constant 0 : index
    %c0_21 = arith.constant 0 : index
    %53 = vector.load %arg5[%c0_20, %c0_21] : memref<16x32xf32, #tpu.memory_space<vmem>>, vector<16x32xf32>
    %cst_22 = arith.constant dense<0.000000e+00> : vector<2x32xf32>
    %54 = tpu.matmul %52, %53, %cst_22 {dimension_numbers = #tpu.dot_dimension_numbers<[1], [0], [0], [1], [0, 0, 1, 1], [], []>} : vector<2x16xf32>, vector<16x32xf32>, vector<2x32xf32> -> vector<2x32xf32>
    %c0_23 = arith.constant 0 : index
    %c0_24 = arith.constant 0 : index
    %55 = vector.load %arg6[%c0_23, %c0_24] : memref<1x32xf32, #tpu.memory_space<vmem>>, vector<1x32xf32>
    %56 = vector.broadcast %55 : vector<1x32xf32> to vector<2x32xf32>
    %57 = arith.addf %54, %56 : vector<2x32xf32>
    %cst_25 = arith.constant 0.000000e+00 : f32
    %58 = vector.broadcast %cst_25 : f32 to vector<2x32xf32>
    %59 = arith.maximumf %57, %58 : vector<2x32xf32>
    %c0_26 = arith.constant 0 : index
    %c0_27 = arith.constant 0 : index
    %60 = vector.load %arg7[%c0_26, %c0_27] : memref<32x26xf32, #tpu.memory_space<vmem>>, vector<32x26xf32>
    %cst_28 = arith.constant dense<0.000000e+00> : vector<2x26xf32>
    %61 = tpu.matmul %59, %60, %cst_28 {dimension_numbers = #tpu.dot_dimension_numbers<[1], [0], [0], [1], [0, 0, 1, 1], [], []>} : vector<2x32xf32>, vector<32x26xf32>, vector<2x26xf32> -> vector<2x26xf32>
    %c0_29 = arith.constant 0 : index
    %c0_30 = arith.constant 0 : index
    %62 = vector.load %arg8[%c0_29, %c0_30] : memref<1x26xf32, #tpu.memory_space<vmem>>, vector<1x26xf32>
    %63 = vector.broadcast %62 : vector<1x26xf32> to vector<2x26xf32>
    %64 = arith.addf %61, %63 : vector<2x26xf32>
    %65 = vector.extract_strided_slice %64 {offsets = [0, 0], sizes = [2, 10], strides = [1, 1]} : vector<2x26xf32> to vector<2x10xf32>
    %66 = vector.extract_strided_slice %64 {offsets = [0, 10], sizes = [2, 16], strides = [1, 1]} : vector<2x26xf32> to vector<2x16xf32>
    %cst_31 = arith.constant 0.000000e+00 : f32
    %67 = vector.broadcast %cst_31 : f32 to vector<2x16xf32>
    %68 = arith.maximumf %66, %67 : vector<2x16xf32>
    %c0_32 = arith.constant 0 : index
    %c0_33 = arith.constant 0 : index
    %69 = vector.load %arg9[%c0_32, %c0_33] : memref<16x2xf32, #tpu.memory_space<vmem>>, vector<16x2xf32>
    %cst_34 = arith.constant dense<0.000000e+00> : vector<2x2xf32>
    %70 = tpu.matmul %68, %69, %cst_34 {dimension_numbers = #tpu.dot_dimension_numbers<[1], [0], [0], [1], [0, 0, 1, 1], [], []>} : vector<2x16xf32>, vector<16x2xf32>, vector<2x2xf32> -> vector<2x2xf32>
    %c0_35 = arith.constant 0 : index
    %c0_36 = arith.constant 0 : index
    %71 = vector.load %arg10[%c0_35, %c0_36] : memref<1x2xf32, #tpu.memory_space<vmem>>, vector<1x2xf32>
    %72 = vector.broadcast %71 : vector<1x2xf32> to vector<2x2xf32>
    %73 = arith.addf %70, %72 : vector<2x2xf32>
    %cst_37 = arith.constant 0.000000e+00 : f32
    %74 = vector.broadcast %cst_37 : f32 to vector<2x84xf32>
    %75 = tpu.concatenate %59, %65, %73, %74 in 1 : vector<2x32xf32>, vector<2x10xf32>, vector<2x2xf32>, vector<2x84xf32> -> vector<2x128xf32>
    %c0_38 = arith.constant 0 : index
    %c0_39 = arith.constant 0 : index
    %76 = vector.load %arg11[%c0_38, %c0_39] : memref<2x128xf32, #tpu.memory_space<vmem>>, vector<2x128xf32>
    tpu.vector_store %arg11[%c0_38, %c0_39], %75 {strides = array<i32>} : memref<2x128xf32, #tpu.memory_space<vmem>>, vector<2x128xf32>,
    return
  }
}

</mosaic_0001>

<llo_original>
// kernel: dann_forward.1
$region0: #{dann_forward.1}
  #allocation0 [shape = 'u32[]', space=smem, size = 0x4, offset = 0x4, fixed_abs, tag = 'smem constant byte address 0x4 - core index']
  #allocation1 [shape = 'u32[144,128]{1,0:T(1,128)}', space=vmem, size = 0x12000, scoped, tag = 'internal scratch']
  %s0 = inlined_call_operand.vmem [shape: f32[2,16,16,4], index: 0, kind: input, shape index: {}]
  %s1 = inlined_call_operand.vmem [shape: f32[36,8], index: 1, kind: input, shape index: {}]
  %s2 = inlined_call_operand.vmem [shape: f32[1,8], index: 2, kind: input, shape index: {}]
  %s3 = inlined_call_operand.vmem [shape: f32[72,16], index: 3, kind: input, shape index: {}]
  %s4 = inlined_call_operand.vmem [shape: f32[1,16], index: 4, kind: input, shape index: {}]
  %s5 = inlined_call_operand.vmem [shape: f32[16,32], index: 5, kind: input, shape index: {}]
  %s6 = inlined_call_operand.vmem [shape: f32[1,32], index: 6, kind: input, shape index: {}]
  %s7 = inlined_call_operand.vmem [shape: f32[32,26], index: 7, kind: input, shape index: {}]
  %s8 = inlined_call_operand.vmem [shape: f32[1,26], index: 8, kind: input, shape index: {}]
  %s9 = inlined_call_operand.vmem [shape: f32[16,2], index: 9, kind: input, shape index: {}]
  %s10 = inlined_call_operand.vmem [shape: f32[1,2], index: 10, kind: input, shape index: {}]
  %s11 = inlined_call_operand.vmem [shape: f32[2,128], index: 11, kind: output, shape index: {}]
  %s12 = sld [smem:[#allocation0]]
  $region54: #{dann_forward.1} parent=0
    _
  %s14 = ssub.s32 1, %s12
  %s15 = scalar_select 0, %s14, %s12
  // Predicated region
  $region2: #{dann_forward.1} parent=0 // pred_check
    _
  $region3: #{dann_forward.1} parent=0 // pred_check_branch
    %17 = sbr.rel (0) target = $region5
  $region4: #{dann_forward.1} parent=0 // pred_region
    _
  $region5: #{dann_forward.1} parent=0 // pred_fallthru
    _
  // Predicated region
  $region6: #{dann_forward.1} parent=0 // pred_check
    _
  $region7: #{dann_forward.1} parent=0 // pred_check_branch
    %19 = sbr.rel (0) target = $region9
  $region8: #{dann_forward.1} parent=0 // pred_region
    _
  $region9: #{dann_forward.1} parent=0 // pred_fallthru
    _
  // Predicated region
  $region10: #{dann_forward.1} parent=0 // pred_check
    _
  $region11: #{dann_forward.1} parent=0 // pred_check_branch
    %21 = sbr.rel (0) target = $region13
  $region12: #{dann_forward.1} parent=0 // pred_region
    _
  $region13: #{dann_forward.1} parent=0 // pred_fallthru
    _
  // Predicated region
  $region14: #{dann_forward.1} parent=0 // pred_check
    _
  $region15: #{dann_forward.1} parent=0 // pred_check_branch
    %23 = sbr.rel (0) target = $region17
  $region16: #{dann_forward.1} parent=0 // pred_region
    _
  $region17: #{dann_forward.1} parent=0 // pred_fallthru
    _
  // Predicated region
  $region18: #{dann_forward.1} parent=0 // pred_check
    _
  $region19: #{dann_forward.1} parent=0 // pred_check_branch
    %25 = sbr.rel (0) target = $region21
  $region20: #{dann_forward.1} parent=0 // pred_region
    _
  $region21: #{dann_forward.1} parent=0 // pred_fallthru
    _
  // Predicated region
  $region22: #{dann_forward.1} parent=0 // pred_check
    _
  $region23: #{dann_forward.1} parent=0 // pred_check_branch
    %27 = sbr.rel (0) target = $region25
  $region24: #{dann_forward.1} parent=0 // pred_region
    _
  $region25: #{dann_forward.1} parent=0 // pred_fallthru
    _
  // Predicated region
  $region26: #{dann_forward.1} parent=0 // pred_check
    _
  $region27: #{dann_forward.1} parent=0 // pred_check_branch
    %29 = sbr.rel (0) target = $region29
  $region28: #{dann_forward.1} parent=0 // pred_region
    _
  $region29: #{dann_forward.1} parent=0 // pred_fallthru
    _
  // Predicated region
  $region30: #{dann_forward.1} parent=0 // pred_check
    _
  $region31: #{dann_forward.1} parent=0 // pred_check_branch
    %31 = sbr.rel (0) target = $region33
  $region32: #{dann_forward.1} parent=0 // pred_region
    _
  $region33: #{dann_forward.1} parent=0 // pred_fallthru
    _
  // Predicated region
  $region34: #{dann_forward.1} parent=0 // pred_check
    _
  $region35: #{dann_forward.1} parent=0 // pred_check_branch
    %33 = sbr.rel (0) target = $region37
  $region36: #{dann_forward.1} parent=0 // pred_region
    _
  $region37: #{dann_forward.1} parent=0 // pred_fallthru
    _
  // Predicated region
  $region38: #{dann_forward.1} parent=0 // pred_check
    _
  $region39: #{dann_forward.1} parent=0 // pred_check_branch
    %35 = sbr.rel (0) target = $region41
  $region40: #{dann_forward.1} parent=0 // pred_region
    _
  $region41: #{dann_forward.1} parent=0 // pred_fallthru
    _
  // Predicated region
  $region42: #{dann_forward.1} parent=0 // pred_check
    _
  $region43: #{dann_forward.1} parent=0 // pred_check_branch
    %37 = sbr.rel (0) target = $region45
  $region44: #{dann_forward.1} parent=0 // pred_region
    _
  $region45: #{dann_forward.1} parent=0 // pred_fallthru
    _
  %v38 = vld [vmem:[%s0] sm:$0xff]
  %v39 = vld [vmem:[%s0 + $0x8] sm:$0xff]
  %v40 = vld [vmem:[%s0 + $0x10] sm:$0xff]
  %v41 = vld [vmem:[%s0 + $0x18] sm:$0xff]
  %v42 = vld [vmem:[%s0 + $0x20] sm:$0xff]
  %v43 = vld [vmem:[%s0 + $0x28] sm:$0xff]
  %v44 = vld [vmem:[%s0 + $0x30] sm:$0xff]
  %v45 = vld [vmem:[%s0 + $0x38] sm:$0xff]
  %v46 = vld [vmem:[%s0 + $0x40] sm:$0xff]
  %v47 = vld [vmem:[%s0 + $0x48] sm:$0xff]
  %v48 = vld [vmem:[%s0 + $0x50] sm:$0xff]
  %v49 = vld [vmem:[%s0 + $0x58] sm:$0xff]
  %v50 = vld [vmem:[%s0 + $0x60] sm:$0xff]
  %v51 = vld [vmem:[%s0 + $0x68] sm:$0xff]
  %v52 = vld [vmem:[%s0 + $0x70] sm:$0xff]
  %v53 = vld [vmem:[%s0 + $0x78] sm:$0xff]
  %v54 = vld [vmem:[%s0 + $0x80] sm:$0xff]
  %v55 = vld [vmem:[%s0 + $0x88] sm:$0xff]
  %v56 = vld [vmem:[%s0 + $0x90] sm:$0xff]
  %v57 = vld [vmem:[%s0 + $0x98] sm:$0xff]
  %v58 = vld [vmem:[%s0 + $0xa0] sm:$0xff]
  %v59 = vld [vmem:[%s0 + $0xa8] sm:$0xff]
  %v60 = vld [vmem:[%s0 + $0xb0] sm:$0xff]
  %v61 = vld [vmem:[%s0 + $0xb8] sm:$0xff]
  %v62 = vld [vmem:[%s0 + $0xc0] sm:$0xff]
  %v63 = vld [vmem:[%s0 + $0xc8] sm:$0xff]
  %v64 = vld [vmem:[%s0 + $0xd0] sm:$0xff]
  %v65 = vld [vmem:[%s0 + $0xd8] sm:$0xff]
  %v66 = vld [vmem:[%s0 + $0xe0] sm:$0xff]
  %v67 = vld [vmem:[%s0 + $0xe8] sm:$0xff]
  %v68 = vld [vmem:[%s0 + $0xf0] sm:$0xff]
  %v69 = vld [vmem:[%s0 + $0xf8] sm:$0xff]
  %v70 = vld [vmem:[%s0 + $0x100] sm:$0xff]
  %v71 = vld [vmem:[%s0 + $0x108] sm:$0xff]
  %v72 = vld [vmem:[%s0 + $0x110] sm:$0xff]
  %v73 = vld [vmem:[%s0 + $0x118] sm:$0xff]
  %v74 = vld [vmem:[%s0 + $0x120] sm:$0xff]
  %v75 = vld [vmem:[%s0 + $0x128] sm:$0xff]
  %v76 = vld [vmem:[%s0 + $0x130] sm:$0xff]
  %v77 = vld [vmem:[%s0 + $0x138] sm:$0xff]
  %v78 = vld [vmem:[%s0 + $0x140] sm:$0xff]
  %v79 = vld [vmem:[%s0 + $0x148] sm:$0xff]
  %v80 = vld [vmem:[%s0 + $0x150] sm:$0xff]
  %v81 = vld [vmem:[%s0 + $0x158] sm:$0xff]
  %v82 = vld [vmem:[%s0 + $0x160] sm:$0xff]
  %v83 = vld [vmem:[%s0 + $0x168] sm:$0xff]
  %v84 = vld [vmem:[%s0 + $0x170] sm:$0xff]
  %v85 = vld [vmem:[%s0 + $0x178] sm:$0xff]
  %v86 = vld [vmem:[%s0 + $0x180] sm:$0xff]
  %v87 = vld [vmem:[%s0 + $0x188] sm:$0xff]
  %v88 = vld [vmem:[%s0 + $0x190] sm:$0xff]
  %v89 = vld [vmem:[%s0 + $0x198] sm:$0xff]
  %v90 = vld [vmem:[%s0 + $0x1a0] sm:$0xff]
  %v91 = vld [vmem:[%s0 + $0x1a8] sm:$0xff]
  %v92 = vld [vmem:[%s0 + $0x1b0] sm:$0xff]
  %v93 = vld [vmem:[%s0 + $0x1b8] sm:$0xff]
  %v94 = vld [vmem:[%s0 + $0x1c0] sm:$0xff]
  %v95 = vld [vmem:[%s0 + $0x1c8] sm:$0xff]
  %v96 = vld [vmem:[%s0 + $0x1d0] sm:$0xff]
  %v97 = vld [vmem:[%s0 + $0x1d8] sm:$0xff]
  %v98 = vld [vmem:[%s0 + $0x1e0] sm:$0xff]
  %v99 = vld [vmem:[%s0 + $0x1e8] sm:$0xff]
  %v100 = vld [vmem:[%s0 + $0x1f0] sm:$0xff]
  %v101 = vld [vmem:[%s0 + $0x1f8] sm:$0xff]
  %vm167 = vcmask 1040384
  %v168 = vrot.slane 0.0, 7
  %v169 = vsel %vm167, %v168, %v168
  %v170 = vrot.slane %v38, 7
  %v171 = vrot.slane %v39, 7
  %v172 = vsel %vm167, %v170, %v171
  %v173 = vrot.slane %v40, 7
  %v174 = vrot.slane %v41, 7
  %v175 = vsel %vm167, %v173, %v174
  %v176 = vrot.slane %v42, 7
  %v177 = vrot.slane %v43, 7
  %v178 = vsel %vm167, %v176, %v177
  %v179 = vrot.slane %v44, 7
  %v180 = vrot.slane %v45, 7
  %v181 = vsel %vm167, %v179, %v180
  %v182 = vrot.slane %v46, 7
  %v183 = vrot.slane %v47, 7
  %v184 = vsel %vm167, %v182, %v183
  %v185 = vrot.slane %v48, 7
  %v186 = vrot.slane %v49, 7
  %v187 = vsel %vm167, %v185, %v186
  %v188 = vrot.slane %v50, 7
  %v189 = vrot.slane %v51, 7
  %v190 = vsel %vm167, %v188, %v189
  %v191 = vrot.slane %v52, 7
  %v192 = vrot.slane %v53, 7
  %v193 = vsel %vm167, %v191, %v192
  %v194 = vrot.slane %v54, 7
  %v195 = vrot.slane %v55, 7
  %v196 = vsel %vm167, %v194, %v195
  %v197 = vrot.slane %v56, 7
  %v198 = vrot.slane %v57, 7
  %v199 = vsel %vm167, %v197, %v198
  %v200 = vrot.slane %v58, 7
  %v201 = vrot.slane %v59, 7
  %v202 = vsel %vm167, %v200, %v201
  %v203 = vrot.slane %v60, 7
  %v204 = vrot.slane %v61, 7
  %v205 = vsel %vm167, %v203, %v204
  %v206 = vrot.slane %v62, 7
  %v207 = vrot.slane %v63, 7
  %v208 = vsel %vm167, %v206, %v207
  %v209 = vrot.slane %v64, 7
  %v210 = vrot.slane %v65, 7
  %v211 = vsel %vm167, %v209, %v210
  %v212 = vrot.slane %v66, 7
  %v213 = vrot.slane %v67, 7
  %v214 = vsel %vm167, %v212, %v213
  %v215 = vrot.slane %v68, 7
  %v216 = vrot.slane %v69, 7
  %v217 = vsel %vm167, %v215, %v216
  %v218 = vrot.slane %v70, 7
  %v219 = vrot.slane %v71, 7
  %v220 = vsel %vm167, %v218, %v219
  %v221 = vrot.slane %v72, 7
  %v222 = vrot.slane %v73, 7
  %v223 = vsel %vm167, %v221, %v222
  %v224 = vrot.slane %v74, 7
  %v225 = vrot.slane %v75, 7
  %v226 = vsel %vm167, %v224, %v225
  %v227 = vrot.slane %v76, 7
  %v228 = vrot.slane %v77, 7
  %v229 = vsel %vm167, %v227, %v228
  %v230 = vrot.slane %v78, 7
  %v231 = vrot.slane %v79, 7
  %v232 = vsel %vm167, %v230, %v231
  %v233 = vrot.slane %v80, 7
  %v234 = vrot.slane %v81, 7
  %v235 = vsel %vm167, %v233, %v234
  %v236 = vrot.slane %v82, 7
  %v237 = vrot.slane %v83, 7
  %v238 = vsel %vm167, %v236, %v237
  %v239 = vrot.slane %v84, 7
  %v240 = vrot.slane %v85, 7
  %v241 = vsel %vm167, %v239, %v240
  %v242 = vrot.slane %v86, 7
  %v243 = vrot.slane %v87, 7
  %v244 = vsel %vm167, %v242, %v243
  %v245 = vrot.slane %v88, 7
  %v246 = vrot.slane %v89, 7
  %v247 = vsel %vm167, %v245, %v246
  %v248 = vrot.slane %v90, 7
  %v249 = vrot.slane %v91, 7
  %v250 = vsel %vm167, %v248, %v249
  %v251 = vrot.slane %v92, 7
  %v252 = vrot.slane %v93, 7
  %v253 = vsel %vm167, %v251, %v252
  %v254 = vrot.slane %v94, 7
  %v255 = vrot.slane %v95, 7
  %v256 = vsel %vm167, %v254, %v255
  %v257 = vrot.slane %v96, 7
  %v258 = vrot.slane %v97, 7
  %v259 = vsel %vm167, %v257, %v258
  %v260 = vrot.slane %v98, 7
  %v261 = vrot.slane %v99, 7
  %v262 = vsel %vm167, %v260, %v261
  %v263 = vrot.slane %v100, 7
  %v264 = vrot.slane %v101, 7
  %v265 = vsel %vm167, %v263, %v264
  %v362 = vsel %vm167, 0.0, %v168
  %v363 = vsel %vm167, 0.0, %v170
  %v364 = vsel %vm167, 0.0, %v173
  %v365 = vsel %vm167, 0.0, %v176
  %v366 = vsel %vm167, 0.0, %v179
  %v367 = vsel %vm167, 0.0, %v182
  %v368 = vsel %vm167, 0.0, %v185
  %v369 = vsel %vm167, 0.0, %v188
  %v370 = vsel %vm167, 0.0, %v191
  %v371 = vsel %vm167, 0.0, %v194
  %v372 = vsel %vm167, 0.0, %v197
  %v373 = vsel %vm167, 0.0, %v200
  %v374 = vsel %vm167, 0.0, %v203
  %v375 = vsel %vm167, 0.0, %v206
  %v376 = vsel %vm167, 0.0, %v209
  %v377 = vsel %vm167, 0.0, %v212
  %v378 = vsel %vm167, 0.0, %v215
  %v379 = vsel %vm167, 0.0, %v218
  %v380 = vsel %vm167, 0.0, %v221
  %v381 = vsel %vm167, 0.0, %v224
  %v382 = vsel %vm167, 0.0, %v227
  %v383 = vsel %vm167, 0.0, %v230
  %v384 = vsel %vm167, 0.0, %v233
  %v385 = vsel %vm167, 0.0, %v236
  %v386 = vsel %vm167, 0.0, %v239
  %v387 = vsel %vm167, 0.0, %v242
  %v388 = vsel %vm167, 0.0, %v245
  %v389 = vsel %vm167, 0.0, %v248
  %v390 = vsel %vm167, 0.0, %v251
  %v391 = vsel %vm167, 0.0, %v254
  %v392 = vsel %vm167, 0.0, %v257
  %v393 = vsel %vm167, 0.0, %v260
  %v394 = vsel %vm167, 0.0, %v263
  %v395 = vsel %vm167, %v168, 0.0
  %v396 = vsel %vm167, %v171, 0.0
  %v397 = vsel %vm167, %v174, 0.0
  %v398 = vsel %vm167, %v177, 0.0
  %v399 = vsel %vm167, %v180, 0.0
  %v400 = vsel %vm167, %v183, 0.0
  %v401 = vsel %vm167, %v186, 0.0
  %v402 = vsel %vm167, %v189, 0.0
  %v403 = vsel %vm167, %v192, 0.0
  %v404 = vsel %vm167, %v195, 0.0
  %v405 = vsel %vm167, %v198, 0.0
  %v406 = vsel %vm167, %v201, 0.0
  %v407 = vsel %vm167, %v204, 0.0
  %v408 = vsel %vm167, %v207, 0.0
  %v409 = vsel %vm167, %v210, 0.0
  %v410 = vsel %vm167, %v213, 0.0
  %v411 = vsel %vm167, %v216, 0.0
  %v412 = vsel %vm167, %v219, 0.0
  %v413 = vsel %vm167, %v222, 0.0
  %v414 = vsel %vm167, %v225, 0.0
  %v415 = vsel %vm167, %v228, 0.0
  %v416 = vsel %vm167, %v231, 0.0
  %v417 = vsel %vm167, %v234, 0.0
  %v418 = vsel %vm167, %v237, 0.0
  %v419 = vsel %vm167, %v240, 0.0
  %v420 = vsel %vm167, %v243, 0.0
  %v421 = vsel %vm167, %v246, 0.0
  %v422 = vsel %vm167, %v249, 0.0
  %v423 = vsel %vm167, %v252, 0.0
  %v424 = vsel %vm167, %v255, 0.0
  %v425 = vsel %vm167, %v258, 0.0
  %v426 = vsel %vm167, %v261, 0.0
  %v427 = vsel %vm167, %v264, 0.0
  %vm490 = vcmask 1046528
  %v491 = vrot.slane %v362, 1
  %v492 = vrot.slane %v169, 1
  %v493 = vsel %vm490, %v491, %v492
  %v494 = vrot.slane %v395, 1
  %v495 = vsel %vm490, %v492, %v494
  %v496 = vrot.slane %v363, 1
  %v497 = vrot.slane %v172, 1
  %v498 = vsel %vm490, %v496, %v497
  %v499 = vrot.slane %v396, 1
  %v500 = vsel %vm490, %v497, %v499
  %v501 = vrot.slane %v364, 1
  %v502 = vrot.slane %v175, 1
  %v503 = vsel %vm490, %v501, %v502
  %v504 = vrot.slane %v397, 1
  %v505 = vsel %vm490, %v502, %v504
  %v506 = vrot.slane %v365, 1
  %v507 = vrot.slane %v178, 1
  %v508 = vsel %vm490, %v506, %v507
  %v509 = vrot.slane %v398, 1
  %v510 = vsel %vm490, %v507, %v509
  %v511 = vrot.slane %v366, 1
  %v512 = vrot.slane %v181, 1
  %v513 = vsel %vm490, %v511, %v512
  %v514 = vrot.slane %v399, 1
  %v515 = vsel %vm490, %v512, %v514
  %v516 = vrot.slane %v367, 1
  %v517 = vrot.slane %v184, 1
  %v518 = vsel %vm490, %v516, %v517
  %v519 = vrot.slane %v400, 1
  %v520 = vsel %vm490, %v517, %v519
  %v521 = vrot.slane %v368, 1
  %v522 = vrot.slane %v187, 1
  %v523 = vsel %vm490, %v521, %v522
  %v524 = vrot.slane %v401, 1
  %v525 = vsel %vm490, %v522, %v524
  %v526 = vrot.slane %v369, 1
  %v527 = vrot.slane %v190, 1
  %v528 = vsel %vm490, %v526, %v527
  %v529 = vrot.slane %v402, 1
  %v530 = vsel %vm490, %v527, %v529
  %v531 = vrot.slane %v370, 1
  %v532 = vrot.slane %v193, 1
  %v533 = vsel %vm490, %v531, %v532
  %v534 = vrot.slane %v403, 1
  %v535 = vsel %vm490, %v532, %v534
  %v536 = vrot.slane %v371, 1
  %v537 = vrot.slane %v196, 1
  %v538 = vsel %vm490, %v536, %v537
  %v539 = vrot.slane %v404, 1
  %v540 = vsel %vm490, %v537, %v539
  %v541 = vrot.slane %v372, 1
  %v542 = vrot.slane %v199, 1
  %v543 = vsel %vm490, %v541, %v542
  %v544 = vrot.slane %v405, 1
  %v545 = vsel %vm490, %v542, %v544
  %v546 = vrot.slane %v373, 1
  %v547 = vrot.slane %v202, 1
  %v548 = vsel %vm490, %v546, %v547
  %v549 = vrot.slane %v406, 1
  %v550 = vsel %vm490, %v547, %v549
  %v551 = vrot.slane %v374, 1
  %v552 = vrot.slane %v205, 1
  %v553 = vsel %vm490, %v551, %v552
  %v554 = vrot.slane %v407, 1
  %v555 = vsel %vm490, %v552, %v554
  %v556 = vrot.slane %v375, 1
  %v557 = vrot.slane %v208, 1
  %v558 = vsel %vm490, %v556, %v557
  %v559 = vrot.slane %v408, 1
  %v560 = vsel %vm490, %v557, %v559
  %v561 = vrot.slane %v376, 1
  %v562 = vrot.slane %v211, 1
  %v563 = vsel %vm490, %v561, %v562
  %v564 = vrot.slane %v409, 1
  %v565 = vsel %vm490, %v562, %v564
  %v566 = vrot.slane %v377, 1
  %v567 = vrot.slane %v214, 1
  %v568 = vsel %vm490, %v566, %v567
  %v569 = vrot.slane %v410, 1
  %v570 = vsel %vm490, %v567, %v569
  %v571 = vrot.slane %v379, 1
  %v572 = vrot.slane %v220, 1
  %v573 = vsel %vm490, %v571, %v572
  %v574 = vrot.slane %v412, 1
  %v575 = vsel %vm490, %v572, %v574
  %v576 = vrot.slane %v380, 1
  %v577 = vrot.slane %v223, 1
  %v578 = vsel %vm490, %v576, %v577
  %v579 = vrot.slane %v413, 1
  %v580 = vsel %vm490, %v577, %v579
  %v581 = vrot.slane %v381, 1
  %v582 = vrot.slane %v226, 1
  %v583 = vsel %vm490, %v581, %v582
  %v584 = vrot.slane %v414, 1
  %v585 = vsel %vm490, %v582, %v584
  %v586 = vrot.slane %v382, 1
  %v587 = vrot.slane %v229, 1
  %v588 = vsel %vm490, %v586, %v587
  %v589 = vrot.slane %v415, 1
  %v590 = vsel %vm490, %v587, %v589
  %v591 = vrot.slane %v383, 1
  %v592 = vrot.slane %v232, 1
  %v593 = vsel %vm490, %v591, %v592
  %v594 = vrot.slane %v416, 1
  %v595 = vsel %vm490, %v592, %v594
  %v596 = vrot.slane %v384, 1
  %v597 = vrot.slane %v235, 1
  %v598 = vsel %vm490, %v596, %v597
  %v599 = vrot.slane %v417, 1
  %v600 = vsel %vm490, %v597, %v599
  %v601 = vrot.slane %v385, 1
  %v602 = vrot.slane %v238, 1
  %v603 = vsel %vm490, %v601, %v602
  %v604 = vrot.slane %v418, 1
  %v605 = vsel %vm490, %v602, %v604
  %v606 = vrot.slane %v386, 1
  %v607 = vrot.slane %v241, 1
  %v608 = vsel %vm490, %v606, %v607
  %v609 = vrot.slane %v419, 1
  %v610 = vsel %vm490, %v607, %v609
  %v611 = vrot.slane %v387, 1
  %v612 = vrot.slane %v244, 1
  %v613 = vsel %vm490, %v611, %v612
  %v614 = vrot.slane %v420, 1
  %v615 = vsel %vm490, %v612, %v614
  %v616 = vrot.slane %v388, 1
  %v617 = vrot.slane %v247, 1
  %v618 = vsel %vm490, %v616, %v617
  %v619 = vrot.slane %v421, 1
  %v620 = vsel %vm490, %v617, %v619
  %v621 = vrot.slane %v389, 1
  %v622 = vrot.slane %v250, 1
  %v623 = vsel %vm490, %v621, %v622
  %v624 = vrot.slane %v422, 1
  %v625 = vsel %vm490, %v622, %v624
  %v626 = vrot.slane %v390, 1
  %v627 = vrot.slane %v253, 1
  %v628 = vsel %vm490, %v626, %v627
  %v629 = vrot.slane %v423, 1
  %v630 = vsel %vm490, %v627, %v629
  %v631 = vrot.slane %v391, 1
  %v632 = vrot.slane %v256, 1
  %v633 = vsel %vm490, %v631, %v632
  %v634 = vrot.slane %v424, 1
  %v635 = vsel %vm490, %v632, %v634
  %v636 = vrot.slane %v392, 1
  %v637 = vrot.slane %v259, 1
  %v638 = vsel %vm490, %v636, %v637
  %v639 = vrot.slane %v425, 1
  %v640 = vsel %vm490, %v637, %v639
  %v641 = vrot.slane %v393, 1
  %v642 = vrot.slane %v262, 1
  %v643 = vsel %vm490, %v641, %v642
  %v644 = vrot.slane %v426, 1
  %v645 = vsel %vm490, %v642, %v644
  %646 = vrot.lane.b32.xlu0 %v493, 4
  %v647 = vpop.permute.xlu0 %646
  %648 = vrot.lane.b32.xlu0 %v495, 4
  %v649 = vpop.permute.xlu0 %648
  %650 = vrot.lane.b32.xlu0 %v498, 4
  %v651 = vpop.permute.xlu0 %650
  %652 = vrot.lane.b32.xlu0 %v500, 4
  %v653 = vpop.permute.xlu0 %652
  %654 = vrot.lane.b32.xlu0 %v503, 4
  %v655 = vpop.permute.xlu0 %654
  %656 = vrot.lane.b32.xlu0 %v505, 4
  %v657 = vpop.permute.xlu0 %656
  %658 = vrot.lane.b32.xlu0 %v508, 4
  %v659 = vpop.permute.xlu0 %658
  %660 = vrot.lane.b32.xlu0 %v510, 4
  %v661 = vpop.permute.xlu0 %660
  %662 = vrot.lane.b32.xlu0 %v513, 4
  %v663 = vpop.permute.xlu0 %662
  %664 = vrot.lane.b32.xlu0 %v515, 4
  %v665 = vpop.permute.xlu0 %664
  %666 = vrot.lane.b32.xlu0 %v518, 4
  %v667 = vpop.permute.xlu0 %666
  %668 = vrot.lane.b32.xlu0 %v520, 4
  %v669 = vpop.permute.xlu0 %668
  %670 = vrot.lane.b32.xlu0 %v523, 4
  %v671 = vpop.permute.xlu0 %670
  %672 = vrot.lane.b32.xlu0 %v525, 4
  %v673 = vpop.permute.xlu0 %672
  %674 = vrot.lane.b32.xlu0 %v528, 4
  %v675 = vpop.permute.xlu0 %674
  %676 = vrot.lane.b32.xlu0 %v530, 4
  %v677 = vpop.permute.xlu0 %676
  %678 = vrot.lane.b32.xlu0 %v533, 4
  %v679 = vpop.permute.xlu0 %678
  %680 = vrot.lane.b32.xlu0 %v535, 4
  %v681 = vpop.permute.xlu0 %680
  %682 = vrot.lane.b32.xlu0 %v538, 4
  %v683 = vpop.permute.xlu0 %682
  %684 = vrot.lane.b32.xlu0 %v540, 4
  %v685 = vpop.permute.xlu0 %684
  %686 = vrot.lane.b32.xlu0 %v543, 4
  %v687 = vpop.permute.xlu0 %686
  %688 = vrot.lane.b32.xlu0 %v545, 4
  %v689 = vpop.permute.xlu0 %688
  %690 = vrot.lane.b32.xlu0 %v548, 4
  %v691 = vpop.permute.xlu0 %690
  %692 = vrot.lane.b32.xlu0 %v550, 4
  %v693 = vpop.permute.xlu0 %692
  %694 = vrot.lane.b32.xlu0 %v553, 4
  %v695 = vpop.permute.xlu0 %694
  %696 = vrot.lane.b32.xlu0 %v555, 4
  %v697 = vpop.permute.xlu0 %696
  %698 = vrot.lane.b32.xlu0 %v558, 4
  %v699 = vpop.permute.xlu0 %698
  %700 = vrot.lane.b32.xlu0 %v560, 4
  %v701 = vpop.permute.xlu0 %700
  %702 = vrot.lane.b32.xlu0 %v563, 4
  %v703 = vpop.permute.xlu0 %702
  %704 = vrot.lane.b32.xlu0 %v565, 4
  %v705 = vpop.permute.xlu0 %704
  %706 = vrot.lane.b32.xlu0 %v568, 4
  %v707 = vpop.permute.xlu0 %706
  %708 = vrot.lane.b32.xlu0 %v570, 4
  %v709 = vpop.permute.xlu0 %708
  %710 = vrot.lane.b32.xlu0 %v573, 4
  %v711 = vpop.permute.xlu0 %710
  %712 = vrot.lane.b32.xlu0 %v575, 4
  %v713 = vpop.permute.xlu0 %712
  %714 = vrot.lane.b32.xlu0 %v578, 4
  %v715 = vpop.permute.xlu0 %714
  %716 = vrot.lane.b32.xlu0 %v580, 4
  %v717 = vpop.permute.xlu0 %716
  %718 = vrot.lane.b32.xlu0 %v583, 4
  %v719 = vpop.permute.xlu0 %718
  %720 = vrot.lane.b32.xlu0 %v585, 4
  %v721 = vpop.permute.xlu0 %720
  %722 = vrot.lane.b32.xlu0 %v588, 4
  %v723 = vpop.permute.xlu0 %722
  %724 = vrot.lane.b32.xlu0 %v590, 4
  %v725 = vpop.permute.xlu0 %724
  %726 = vrot.lane.b32.xlu0 %v593, 4
  %v727 = vpop.permute.xlu0 %726
  %728 = vrot.lane.b32.xlu0 %v595, 4
  %v729 = vpop.permute.xlu0 %728
  %730 = vrot.lane.b32.xlu0 %v598, 4
  %v731 = vpop.permute.xlu0 %730
  %732 = vrot.lane.b32.xlu0 %v600, 4
  %v733 = vpop.permute.xlu0 %732
  %734 = vrot.lane.b32.xlu0 %v603, 4
  %v735 = vpop.permute.xlu0 %734
  %736 = vrot.lane.b32.xlu0 %v605, 4
  %v737 = vpop.permute.xlu0 %736
  %738 = vrot.lane.b32.xlu0 %v608, 4
  %v739 = vpop.permute.xlu0 %738
  %740 = vrot.lane.b32.xlu0 %v610, 4
  %v741 = vpop.permute.xlu0 %740
  %742 = vrot.lane.b32.xlu0 %v613, 4
  %v743 = vpop.permute.xlu0 %742
  %744 = vrot.lane.b32.xlu0 %v615, 4
  %v745 = vpop.permute.xlu0 %744
  %746 = vrot.lane.b32.xlu0 %v618, 4
  %v747 = vpop.permute.xlu0 %746
  %748 = vrot.lane.b32.xlu0 %v620, 4
  %v749 = vpop.permute.xlu0 %748
  %750 = vrot.lane.b32.xlu0 %v623, 4
  %v751 = vpop.permute.xlu0 %750
  %752 = vrot.lane.b32.xlu0 %v625, 4
  %v753 = vpop.permute.xlu0 %752
  %754 = vrot.lane.b32.xlu0 %v628, 4
  %v755 = vpop.permute.xlu0 %754
  %756 = vrot.lane.b32.xlu0 %v630, 4
  %v757 = vpop.permute.xlu0 %756
  %758 = vrot.lane.b32.xlu0 %v633, 4
  %v759 = vpop.permute.xlu0 %758
  %760 = vrot.lane.b32.xlu0 %v635, 4
  %v761 = vpop.permute.xlu0 %760
  %762 = vrot.lane.b32.xlu0 %v638, 4
  %v763 = vpop.permute.xlu0 %762
  %764 = vrot.lane.b32.xlu0 %v640, 4
  %v765 = vpop.permute.xlu0 %764
  %766 = vrot.lane.b32.xlu0 %v643, 4
  %v767 = vpop.permute.xlu0 %766
  %768 = vrot.lane.b32.xlu0 %v645, 4
  %v769 = vpop.permute.xlu0 %768
  %vm832 = vcmask 1045504
  %v833 = vrot.slane %v362, 2
  %v834 = vrot.slane %v169, 2
  %v835 = vsel %vm832, %v833, %v834
  %v836 = vrot.slane %v395, 2
  %v837 = vsel %vm832, %v834, %v836
  %v838 = vrot.slane %v363, 2
  %v839 = vrot.slane %v172, 2
  %v840 = vsel %vm832, %v838, %v839
  %v841 = vrot.slane %v396, 2
  %v842 = vsel %vm832, %v839, %v841
  %v843 = vrot.slane %v364, 2
  %v844 = vrot.slane %v175, 2
  %v845 = vsel %vm832, %v843, %v844
  %v846 = vrot.slane %v397, 2
  %v847 = vsel %vm832, %v844, %v846
  %v848 = vrot.slane %v365, 2
  %v849 = vrot.slane %v178, 2
  %v850 = vsel %vm832, %v848, %v849
  %v851 = vrot.slane %v398, 2
  %v852 = vsel %vm832, %v849, %v851
  %v853 = vrot.slane %v366, 2
  %v854 = vrot.slane %v181, 2
  %v855 = vsel %vm832, %v853, %v854
  %v856 = vrot.slane %v399, 2
  %v857 = vsel %vm832, %v854, %v856
  %v858 = vrot.slane %v367, 2
  %v859 = vrot.slane %v184, 2
  %v860 = vsel %vm832, %v858, %v859
  %v861 = vrot.slane %v400, 2
  %v862 = vsel %vm832, %v859, %v861
  %v863 = vrot.slane %v368, 2
  %v864 = vrot.slane %v187, 2
  %v865 = vsel %vm832, %v863, %v864
  %v866 = vrot.slane %v401, 2
  %v867 = vsel %vm832, %v864, %v866
  %v868 = vrot.slane %v369, 2
  %v869 = vrot.slane %v190, 2
  %v870 = vsel %vm832, %v868, %v869
  %v871 = vrot.slane %v402, 2
  %v872 = vsel %vm832, %v869, %v871
  %v873 = vrot.slane %v370, 2
  %v874 = vrot.slane %v193, 2
  %v875 = vsel %vm832, %v873, %v874
  %v876 = vrot.slane %v403, 2
  %v877 = vsel %vm832, %v874, %v876
  %v878 = vrot.slane %v371, 2
  %v879 = vrot.slane %v196, 2
  %v880 = vsel %vm832, %v878, %v879
  %v881 = vrot.slane %v404, 2
  %v882 = vsel %vm832, %v879, %v881
  %v883 = vrot.slane %v372, 2
  %v884 = vrot.slane %v199, 2
  %v885 = vsel %vm832, %v883, %v884
  %v886 = vrot.slane %v405, 2
  %v887 = vsel %vm832, %v884, %v886
  %v888 = vrot.slane %v373, 2
  %v889 = vrot.slane %v202, 2
  %v890 = vsel %vm832, %v888, %v889
  %v891 = vrot.slane %v406, 2
  %v892 = vsel %vm832, %v889, %v891
  %v893 = vrot.slane %v374, 2
  %v894 = vrot.slane %v205, 2
  %v895 = vsel %vm832, %v893, %v894
  %v896 = vrot.slane %v407, 2
  %v897 = vsel %vm832, %v894, %v896
  %v898 = vrot.slane %v375, 2
  %v899 = vrot.slane %v208, 2
  %v900 = vsel %vm832, %v898, %v899
  %v901 = vrot.slane %v408, 2
  %v902 = vsel %vm832, %v899, %v901
  %v903 = vrot.slane %v376, 2
  %v904 = vrot.slane %v211, 2
  %v905 = vsel %vm832, %v903, %v904
  %v906 = vrot.slane %v409, 2
  %v907 = vsel %vm832, %v904, %v906
  %v908 = vrot.slane %v377, 2
  %v909 = vrot.slane %v214, 2
  %v910 = vsel %vm832, %v908, %v909
  %v911 = vrot.slane %v410, 2
  %v912 = vsel %vm832, %v909, %v911
  %v913 = vrot.slane %v379, 2
  %v914 = vrot.slane %v220, 2
  %v915 = vsel %vm832, %v913, %v914
  %v916 = vrot.slane %v412, 2
  %v917 = vsel %vm832, %v914, %v916
  %v918 = vrot.slane %v380, 2
  %v919 = vrot.slane %v223, 2
  %v920 = vsel %vm832, %v918, %v919
  %v921 = vrot.slane %v413, 2
  %v922 = vsel %vm832, %v919, %v921
  %v923 = vrot.slane %v381, 2
  %v924 = vrot.slane %v226, 2
  %v925 = vsel %vm832, %v923, %v924
  %v926 = vrot.slane %v414, 2
  %v927 = vsel %vm832, %v924, %v926
  %v928 = vrot.slane %v382, 2
  %v929 = vrot.slane %v229, 2
  %v930 = vsel %vm832, %v928, %v929
  %v931 = vrot.slane %v415, 2
  %v932 = vsel %vm832, %v929, %v931
  %v933 = vrot.slane %v383, 2
  %v934 = vrot.slane %v232, 2
  %v935 = vsel %vm832, %v933, %v934
  %v936 = vrot.slane %v416, 2
  %v937 = vsel %vm832, %v934, %v936
  %v938 = vrot.slane %v384, 2
  %v939 = vrot.slane %v235, 2
  %v940 = vsel %vm832, %v938, %v939
  %v941 = vrot.slane %v417, 2
  %v942 = vsel %vm832, %v939, %v941
  %v943 = vrot.slane %v385, 2
  %v944 = vrot.slane %v238, 2
  %v945 = vsel %vm832, %v943, %v944
  %v946 = vrot.slane %v418, 2
  %v947 = vsel %vm832, %v944, %v946
  %v948 = vrot.slane %v386, 2
  %v949 = vrot.slane %v241, 2
  %v950 = vsel %vm832, %v948, %v949
  %v951 = vrot.slane %v419, 2
  %v952 = vsel %vm832, %v949, %v951
  %v953 = vrot.slane %v387, 2
  %v954 = vrot.slane %v244, 2
  %v955 = vsel %vm832, %v953, %v954
  %v956 = vrot.slane %v420, 2
  %v957 = vsel %vm832, %v954, %v956
  %v958 = vrot.slane %v388, 2
  %v959 = vrot.slane %v247, 2
  %v960 = vsel %vm832, %v958, %v959
  %v961 = vrot.slane %v421, 2
  %v962 = vsel %vm832, %v959, %v961
  %v963 = vrot.slane %v389, 2
  %v964 = vrot.slane %v250, 2
  %v965 = vsel %vm832, %v963, %v964
  %v966 = vrot.slane %v422, 2
  %v967 = vsel %vm832, %v964, %v966
  %v968 = vrot.slane %v390, 2
  %v969 = vrot.slane %v253, 2
  %v970 = vsel %vm832, %v968, %v969
  %v971 = vrot.slane %v423, 2
  %v972 = vsel %vm832, %v969, %v971
  %v973 = vrot.slane %v391, 2
  %v974 = vrot.slane %v256, 2
  %v975 = vsel %vm832, %v973, %v974
  %v976 = vrot.slane %v424, 2
  %v977 = vsel %vm832, %v974, %v976
  %v978 = vrot.slane %v392, 2
  %v979 = vrot.slane %v259, 2
  %v980 = vsel %vm832, %v978, %v979
  %v981 = vrot.slane %v425, 2
  %v982 = vsel %vm832, %v979, %v981
  %v983 = vrot.slane %v393, 2
  %v984 = vrot.slane %v262, 2
  %v985 = vsel %vm832, %v983, %v984
  %v986 = vrot.slane %v426, 2
  %v987 = vsel %vm832, %v984, %v986
  %988 = vrot.lane.b32.xlu0 %v835, 8
  %v989 = vpop.permute.xlu0 %988
  %990 = vrot.lane.b32.xlu0 %v837, 8
  %v991 = vpop.permute.xlu0 %990
  %992 = vrot.lane.b32.xlu0 %v840, 8
  %v993 = vpop.permute.xlu0 %992
  %994 = vrot.lane.b32.xlu0 %v842, 8
  %v995 = vpop.permute.xlu0 %994
  %996 = vrot.lane.b32.xlu0 %v845, 8
  %v997 = vpop.permute.xlu0 %996
  %998 = vrot.lane.b32.xlu0 %v847, 8
  %v999 = vpop.permute.xlu0 %998
  %1000 = vrot.lane.b32.xlu0 %v850, 8
  %v1001 = vpop.permute.xlu0 %1000
  %1002 = vrot.lane.b32.xlu0 %v852, 8
  %v1003 = vpop.permute.xlu0 %1002
  %1004 = vrot.lane.b32.xlu0 %v855, 8
  %v1005 = vpop.permute.xlu0 %1004
  %1006 = vrot.lane.b32.xlu0 %v857, 8
  %v1007 = vpop.permute.xlu0 %1006
  %1008 = vrot.lane.b32.xlu0 %v860, 8
  %v1009 = vpop.permute.xlu0 %1008
  %1010 = vrot.lane.b32.xlu0 %v862, 8
  %v1011 = vpop.permute.xlu0 %1010
  %1012 = vrot.lane.b32.xlu0 %v865, 8
  %v1013 = vpop.permute.xlu0 %1012
  %1014 = vrot.lane.b32.xlu0 %v867, 8
  %v1015 = vpop.permute.xlu0 %1014
  %1016 = vrot.lane.b32.xlu0 %v870, 8
  %v1017 = vpop.permute.xlu0 %1016
  %1018 = vrot.lane.b32.xlu0 %v872, 8
  %v1019 = vpop.permute.xlu0 %1018
  %1020 = vrot.lane.b32.xlu0 %v875, 8
  %v1021 = vpop.permute.xlu0 %1020
  %1022 = vrot.lane.b32.xlu0 %v877, 8
  %v1023 = vpop.permute.xlu0 %1022
  %1024 = vrot.lane.b32.xlu0 %v880, 8
  %v1025 = vpop.permute.xlu0 %1024
  %1026 = vrot.lane.b32.xlu0 %v882, 8
  %v1027 = vpop.permute.xlu0 %1026
  %1028 = vrot.lane.b32.xlu0 %v885, 8
  %v1029 = vpop.permute.xlu0 %1028
  %1030 = vrot.lane.b32.xlu0 %v887, 8
  %v1031 = vpop.permute.xlu0 %1030
  %1032 = vrot.lane.b32.xlu0 %v890, 8
  %v1033 = vpop.permute.xlu0 %1032
  %1034 = vrot.lane.b32.xlu0 %v892, 8
  %v1035 = vpop.permute.xlu0 %1034
  %1036 = vrot.lane.b32.xlu0 %v895, 8
  %v1037 = vpop.permute.xlu0 %1036
  %1038 = vrot.lane.b32.xlu0 %v897, 8
  %v1039 = vpop.permute.xlu0 %1038
  %1040 = vrot.lane.b32.xlu0 %v900, 8
  %v1041 = vpop.permute.xlu0 %1040
  %1042 = vrot.lane.b32.xlu0 %v902, 8
  %v1043 = vpop.permute.xlu0 %1042
  %1044 = vrot.lane.b32.xlu0 %v905, 8
  %v1045 = vpop.permute.xlu0 %1044
  %1046 = vrot.lane.b32.xlu0 %v907, 8
  %v1047 = vpop.permute.xlu0 %1046
  %1048 = vrot.lane.b32.xlu0 %v910, 8
  %v1049 = vpop.permute.xlu0 %1048
  %1050 = vrot.lane.b32.xlu0 %v912, 8
  %v1051 = vpop.permute.xlu0 %1050
  %1052 = vrot.lane.b32.xlu0 %v915, 8
  %v1053 = vpop.permute.xlu0 %1052
  %1054 = vrot.lane.b32.xlu0 %v917, 8
  %v1055 = vpop.permute.xlu0 %1054
  %1056 = vrot.lane.b32.xlu0 %v920, 8
  %v1057 = vpop.permute.xlu0 %1056
  %1058 = vrot.lane.b32.xlu0 %v922, 8
  %v1059 = vpop.permute.xlu0 %1058
  %1060 = vrot.lane.b32.xlu0 %v925, 8
  %v1061 = vpop.permute.xlu0 %1060
  %1062 = vrot.lane.b32.xlu0 %v927, 8
  %v1063 = vpop.permute.xlu0 %1062
  %1064 = vrot.lane.b32.xlu0 %v930, 8
  %v1065 = vpop.permute.xlu0 %1064
  %1066 = vrot.lane.b32.xlu0 %v932, 8
  %v1067 = vpop.permute.xlu0 %1066
  %1068 = vrot.lane.b32.xlu0 %v935, 8
  %v1069 = vpop.permute.xlu0 %1068
  %1070 = vrot.lane.b32.xlu0 %v937, 8
  %v1071 = vpop.permute.xlu0 %1070
  %1072 = vrot.lane.b32.xlu0 %v940, 8
  %v1073 = vpop.permute.xlu0 %1072
  %1074 = vrot.lane.b32.xlu0 %v942, 8
  %v1075 = vpop.permute.xlu0 %1074
  %1076 = vrot.lane.b32.xlu0 %v945, 8
  %v1077 = vpop.permute.xlu0 %1076
  %1078 = vrot.lane.b32.xlu0 %v947, 8
  %v1079 = vpop.permute.xlu0 %1078
  %1080 = vrot.lane.b32.xlu0 %v950, 8
  %v1081 = vpop.permute.xlu0 %1080
  %1082 = vrot.lane.b32.xlu0 %v952, 8
  %v1083 = vpop.permute.xlu0 %1082
  %1084 = vrot.lane.b32.xlu0 %v955, 8
  %v1085 = vpop.permute.xlu0 %1084
  %1086 = vrot.lane.b32.xlu0 %v957, 8
  %v1087 = vpop.permute.xlu0 %1086
  %1088 = vrot.lane.b32.xlu0 %v960, 8
  %v1089 = vpop.permute.xlu0 %1088
  %1090 = vrot.lane.b32.xlu0 %v962, 8
  %v1091 = vpop.permute.xlu0 %1090
  %1092 = vrot.lane.b32.xlu0 %v965, 8
  %v1093 = vpop.permute.xlu0 %1092
  %1094 = vrot.lane.b32.xlu0 %v967, 8
  %v1095 = vpop.permute.xlu0 %1094
  %1096 = vrot.lane.b32.xlu0 %v970, 8
  %v1097 = vpop.permute.xlu0 %1096
  %1098 = vrot.lane.b32.xlu0 %v972, 8
  %v1099 = vpop.permute.xlu0 %1098
  %1100 = vrot.lane.b32.xlu0 %v975, 8
  %v1101 = vpop.permute.xlu0 %1100
  %1102 = vrot.lane.b32.xlu0 %v977, 8
  %v1103 = vpop.permute.xlu0 %1102
  %1104 = vrot.lane.b32.xlu0 %v980, 8
  %v1105 = vpop.permute.xlu0 %1104
  %1106 = vrot.lane.b32.xlu0 %v982, 8
  %v1107 = vpop.permute.xlu0 %1106
  %1108 = vrot.lane.b32.xlu0 %v985, 8
  %v1109 = vpop.permute.xlu0 %1108
  %1110 = vrot.lane.b32.xlu0 %v987, 8
  %v1111 = vpop.permute.xlu0 %1110
  %1176 = vrot.lane.b32.xlu0 %v363, 12
  %v1177 = vpop.permute.xlu0 %1176
  %1178 = vrot.lane.b32.xlu0 %v172, 12
  %v1179 = vpop.permute.xlu0 %1178
  %1180 = vrot.lane.b32.xlu0 %v364, 12
  %v1181 = vpop.permute.xlu0 %1180
  %1182 = vrot.lane.b32.xlu0 %v175, 12
  %v1183 = vpop.permute.xlu0 %1182
  %1184 = vrot.lane.b32.xlu0 %v365, 12
  %v1185 = vpop.permute.xlu0 %1184
  %1186 = vrot.lane.b32.xlu0 %v178, 12
  %v1187 = vpop.permute.xlu0 %1186
  %1188 = vrot.lane.b32.xlu0 %v366, 12
  %v1189 = vpop.permute.xlu0 %1188
  %1190 = vrot.lane.b32.xlu0 %v181, 12
  %v1191 = vpop.permute.xlu0 %1190
  %1192 = vrot.lane.b32.xlu0 %v367, 12
  %v1193 = vpop.permute.xlu0 %1192
  %1194 = vrot.lane.b32.xlu0 %v184, 12
  %v1195 = vpop.permute.xlu0 %1194
  %1196 = vrot.lane.b32.xlu0 %v368, 12
  %v1197 = vpop.permute.xlu0 %1196
  %1198 = vrot.lane.b32.xlu0 %v187, 12
  %v1199 = vpop.permute.xlu0 %1198
  %1200 = vrot.lane.b32.xlu0 %v369, 12
  %v1201 = vpop.permute.xlu0 %1200
  %1202 = vrot.lane.b32.xlu0 %v190, 12
  %v1203 = vpop.permute.xlu0 %1202
  %1204 = vrot.lane.b32.xlu0 %v370, 12
  %v1205 = vpop.permute.xlu0 %1204
  %1206 = vrot.lane.b32.xlu0 %v193, 12
  %v1207 = vpop.permute.xlu0 %1206
  %1208 = vrot.lane.b32.xlu0 %v371, 12
  %v1209 = vpop.permute.xlu0 %1208
  %1210 = vrot.lane.b32.xlu0 %v196, 12
  %v1211 = vpop.permute.xlu0 %1210
  %1212 = vrot.lane.b32.xlu0 %v372, 12
  %v1213 = vpop.permute.xlu0 %1212
  %1214 = vrot.lane.b32.xlu0 %v199, 12
  %v1215 = vpop.permute.xlu0 %1214
  %1216 = vrot.lane.b32.xlu0 %v373, 12
  %v1217 = vpop.permute.xlu0 %1216
  %1218 = vrot.lane.b32.xlu0 %v202, 12
  %v1219 = vpop.permute.xlu0 %1218
  %1220 = vrot.lane.b32.xlu0 %v374, 12
  %v1221 = vpop.permute.xlu0 %1220
  %1222 = vrot.lane.b32.xlu0 %v205, 12
  %v1223 = vpop.permute.xlu0 %1222
  %1224 = vrot.lane.b32.xlu0 %v375, 12
  %v1225 = vpop.permute.xlu0 %1224
  %1226 = vrot.lane.b32.xlu0 %v208, 12
  %v1227 = vpop.permute.xlu0 %1226
  %1228 = vrot.lane.b32.xlu0 %v376, 12
  %v1229 = vpop.permute.xlu0 %1228
  %1230 = vrot.lane.b32.xlu0 %v211, 12
  %v1231 = vpop.permute.xlu0 %1230
  %1232 = vrot.lane.b32.xlu0 %v377, 12
  %v1233 = vpop.permute.xlu0 %1232
  %1234 = vrot.lane.b32.xlu0 %v214, 12
  %v1235 = vpop.permute.xlu0 %1234
  %1236 = vrot.lane.b32.xlu0 %v378, 12
  %v1237 = vpop.permute.xlu0 %1236
  %1238 = vrot.lane.b32.xlu0 %v217, 12
  %v1239 = vpop.permute.xlu0 %1238
  %1240 = vrot.lane.b32.xlu0 %v379, 12
  %v1241 = vpop.permute.xlu0 %1240
  %1242 = vrot.lane.b32.xlu0 %v220, 12
  %v1243 = vpop.permute.xlu0 %1242
  %1244 = vrot.lane.b32.xlu0 %v380, 12
  %v1245 = vpop.permute.xlu0 %1244
  %1246 = vrot.lane.b32.xlu0 %v223, 12
  %v1247 = vpop.permute.xlu0 %1246
  %1248 = vrot.lane.b32.xlu0 %v381, 12
  %v1249 = vpop.permute.xlu0 %1248
  %1250 = vrot.lane.b32.xlu0 %v226, 12
  %v1251 = vpop.permute.xlu0 %1250
  %1252 = vrot.lane.b32.xlu0 %v382, 12
  %v1253 = vpop.permute.xlu0 %1252
  %1254 = vrot.lane.b32.xlu0 %v229, 12
  %v1255 = vpop.permute.xlu0 %1254
  %1256 = vrot.lane.b32.xlu0 %v383, 12
  %v1257 = vpop.permute.xlu0 %1256
  %1258 = vrot.lane.b32.xlu0 %v232, 12
  %v1259 = vpop.permute.xlu0 %1258
  %1260 = vrot.lane.b32.xlu0 %v384, 12
  %v1261 = vpop.permute.xlu0 %1260
  %1262 = vrot.lane.b32.xlu0 %v235, 12
  %v1263 = vpop.permute.xlu0 %1262
  %1264 = vrot.lane.b32.xlu0 %v385, 12
  %v1265 = vpop.permute.xlu0 %1264
  %1266 = vrot.lane.b32.xlu0 %v238, 12
  %v1267 = vpop.permute.xlu0 %1266
  %1268 = vrot.lane.b32.xlu0 %v386, 12
  %v1269 = vpop.permute.xlu0 %1268
  %1270 = vrot.lane.b32.xlu0 %v241, 12
  %v1271 = vpop.permute.xlu0 %1270
  %1272 = vrot.lane.b32.xlu0 %v387, 12
  %v1273 = vpop.permute.xlu0 %1272
  %1274 = vrot.lane.b32.xlu0 %v244, 12
  %v1275 = vpop.permute.xlu0 %1274
  %1276 = vrot.lane.b32.xlu0 %v388, 12
  %v1277 = vpop.permute.xlu0 %1276
  %1278 = vrot.lane.b32.xlu0 %v247, 12
  %v1279 = vpop.permute.xlu0 %1278
  %1280 = vrot.lane.b32.xlu0 %v389, 12
  %v1281 = vpop.permute.xlu0 %1280
  %1282 = vrot.lane.b32.xlu0 %v250, 12
  %v1283 = vpop.permute.xlu0 %1282
  %1284 = vrot.lane.b32.xlu0 %v390, 12
  %v1285 = vpop.permute.xlu0 %1284
  %1286 = vrot.lane.b32.xlu0 %v253, 12
  %v1287 = vpop.permute.xlu0 %1286
  %1288 = vrot.lane.b32.xlu0 %v391, 12
  %v1289 = vpop.permute.xlu0 %1288
  %1290 = vrot.lane.b32.xlu0 %v256, 12
  %v1291 = vpop.permute.xlu0 %1290
  %1292 = vrot.lane.b32.xlu0 %v392, 12
  %v1293 = vpop.permute.xlu0 %1292
  %1294 = vrot.lane.b32.xlu0 %v259, 12
  %v1295 = vpop.permute.xlu0 %1294
  %1296 = vrot.lane.b32.xlu0 %v393, 12
  %v1297 = vpop.permute.xlu0 %1296
  %1298 = vrot.lane.b32.xlu0 %v262, 12
  %v1299 = vpop.permute.xlu0 %1298
  %1300 = vrot.lane.b32.xlu0 %v394, 12
  %v1301 = vpop.permute.xlu0 %1300
  %1302 = vrot.lane.b32.xlu0 %v265, 12
  %v1303 = vpop.permute.xlu0 %1302
  %v1370 = vrot.slane %v378, 1
  %v1371 = vrot.slane %v217, 1
  %v1372 = vsel %vm490, %v1370, %v1371
  %v1373 = vrot.slane %v411, 1
  %v1374 = vsel %vm490, %v1371, %v1373
  %v1375 = vrot.slane %v394, 1
  %v1376 = vrot.slane %v265, 1
  %v1377 = vsel %vm490, %v1375, %v1376
  %v1378 = vrot.slane %v427, 1
  %v1379 = vsel %vm490, %v1376, %v1378
  %1380 = vrot.lane.b32.xlu0 %v498, 16
  %v1381 = vpop.permute.xlu0 %1380
  %1382 = vrot.lane.b32.xlu0 %v500, 16
  %v1383 = vpop.permute.xlu0 %1382
  %1384 = vrot.lane.b32.xlu0 %v503, 16
  %v1385 = vpop.permute.xlu0 %1384
  %1386 = vrot.lane.b32.xlu0 %v505, 16
  %v1387 = vpop.permute.xlu0 %1386
  %1388 = vrot.lane.b32.xlu0 %v508, 16
  %v1389 = vpop.permute.xlu0 %1388
  %1390 = vrot.lane.b32.xlu0 %v510, 16
  %v1391 = vpop.permute.xlu0 %1390
  %1392 = vrot.lane.b32.xlu0 %v513, 16
  %v1393 = vpop.permute.xlu0 %1392
  %1394 = vrot.lane.b32.xlu0 %v515, 16
  %v1395 = vpop.permute.xlu0 %1394
  %1396 = vrot.lane.b32.xlu0 %v518, 16
  %v1397 = vpop.permute.xlu0 %1396
  %1398 = vrot.lane.b32.xlu0 %v520, 16
  %v1399 = vpop.permute.xlu0 %1398
  %1400 = vrot.lane.b32.xlu0 %v523, 16
  %v1401 = vpop.permute.xlu0 %1400
  %1402 = vrot.lane.b32.xlu0 %v525, 16
  %v1403 = vpop.permute.xlu0 %1402
  %1404 = vrot.lane.b32.xlu0 %v528, 16
  %v1405 = vpop.permute.xlu0 %1404
  %1406 = vrot.lane.b32.xlu0 %v530, 16
  %v1407 = vpop.permute.xlu0 %1406
  %1408 = vrot.lane.b32.xlu0 %v533, 16
  %v1409 = vpop.permute.xlu0 %1408
  %1410 = vrot.lane.b32.xlu0 %v535, 16
  %v1411 = vpop.permute.xlu0 %1410
  %1412 = vrot.lane.b32.xlu0 %v538, 16
  %v1413 = vpop.permute.xlu0 %1412
  %1414 = vrot.lane.b32.xlu0 %v540, 16
  %v1415 = vpop.permute.xlu0 %1414
  %1416 = vrot.lane.b32.xlu0 %v543, 16
  %v1417 = vpop.permute.xlu0 %1416
  %1418 = vrot.lane.b32.xlu0 %v545, 16
  %v1419 = vpop.permute.xlu0 %1418
  %1420 = vrot.lane.b32.xlu0 %v548, 16
  %v1421 = vpop.permute.xlu0 %1420
  %1422 = vrot.lane.b32.xlu0 %v550, 16
  %v1423 = vpop.permute.xlu0 %1422
  %1424 = vrot.lane.b32.xlu0 %v553, 16
  %v1425 = vpop.permute.xlu0 %1424
  %1426 = vrot.lane.b32.xlu0 %v555, 16
  %v1427 = vpop.permute.xlu0 %1426
  %1428 = vrot.lane.b32.xlu0 %v558, 16
  %v1429 = vpop.permute.xlu0 %1428
  %1430 = vrot.lane.b32.xlu0 %v560, 16
  %v1431 = vpop.permute.xlu0 %1430
  %1432 = vrot.lane.b32.xlu0 %v563, 16
  %v1433 = vpop.permute.xlu0 %1432
  %1434 = vrot.lane.b32.xlu0 %v565, 16
  %v1435 = vpop.permute.xlu0 %1434
  %1436 = vrot.lane.b32.xlu0 %v568, 16
  %v1437 = vpop.permute.xlu0 %1436
  %1438 = vrot.lane.b32.xlu0 %v570, 16
  %v1439 = vpop.permute.xlu0 %1438
  %1440 = vrot.lane.b32.xlu0 %v1372, 16
  %v1441 = vpop.permute.xlu0 %1440
  %1442 = vrot.lane.b32.xlu0 %v1374, 16
  %v1443 = vpop.permute.xlu0 %1442
  %1444 = vrot.lane.b32.xlu0 %v573, 16
  %v1445 = vpop.permute.xlu0 %1444
  %1446 = vrot.lane.b32.xlu0 %v575, 16
  %v1447 = vpop.permute.xlu0 %1446
  %1448 = vrot.lane.b32.xlu0 %v578, 16
  %v1449 = vpop.permute.xlu0 %1448
  %1450 = vrot.lane.b32.xlu0 %v580, 16
  %v1451 = vpop.permute.xlu0 %1450
  %1452 = vrot.lane.b32.xlu0 %v583, 16
  %v1453 = vpop.permute.xlu0 %1452
  %1454 = vrot.lane.b32.xlu0 %v585, 16
  %v1455 = vpop.permute.xlu0 %1454
  %1456 = vrot.lane.b32.xlu0 %v588, 16
  %v1457 = vpop.permute.xlu0 %1456
  %1458 = vrot.lane.b32.xlu0 %v590, 16
  %v1459 = vpop.permute.xlu0 %1458
  %1460 = vrot.lane.b32.xlu0 %v593, 16
  %v1461 = vpop.permute.xlu0 %1460
  %1462 = vrot.lane.b32.xlu0 %v595, 16
  %v1463 = vpop.permute.xlu0 %1462
  %1464 = vrot.lane.b32.xlu0 %v598, 16
  %v1465 = vpop.permute.xlu0 %1464
  %1466 = vrot.lane.b32.xlu0 %v600, 16
  %v1467 = vpop.permute.xlu0 %1466
  %1468 = vrot.lane.b32.xlu0 %v603, 16
  %v1469 = vpop.permute.xlu0 %1468
  %1470 = vrot.lane.b32.xlu0 %v605, 16
  %v1471 = vpop.permute.xlu0 %1470
  %1472 = vrot.lane.b32.xlu0 %v608, 16
  %v1473 = vpop.permute.xlu0 %1472
  %1474 = vrot.lane.b32.xlu0 %v610, 16
  %v1475 = vpop.permute.xlu0 %1474
  %1476 = vrot.lane.b32.xlu0 %v613, 16
  %v1477 = vpop.permute.xlu0 %1476
  %1478 = vrot.lane.b32.xlu0 %v615, 16
  %v1479 = vpop.permute.xlu0 %1478
  %1480 = vrot.lane.b32.xlu0 %v618, 16
  %v1481 = vpop.permute.xlu0 %1480
  %1482 = vrot.lane.b32.xlu0 %v620, 16
  %v1483 = vpop.permute.xlu0 %1482
  %1484 = vrot.lane.b32.xlu0 %v623, 16
  %v1485 = vpop.permute.xlu0 %1484
  %1486 = vrot.lane.b32.xlu0 %v625, 16
  %v1487 = vpop.permute.xlu0 %1486
  %1488 = vrot.lane.b32.xlu0 %v628, 16
  %v1489 = vpop.permute.xlu0 %1488
  %1490 = vrot.lane.b32.xlu0 %v630, 16
  %v1491 = vpop.permute.xlu0 %1490
  %1492 = vrot.lane.b32.xlu0 %v633, 16
  %v1493 = vpop.permute.xlu0 %1492
  %1494 = vrot.lane.b32.xlu0 %v635, 16
  %v1495 = vpop.permute.xlu0 %1494
  %1496 = vrot.lane.b32.xlu0 %v638, 16
  %v1497 = vpop.permute.xlu0 %1496
  %1498 = vrot.lane.b32.xlu0 %v640, 16
  %v1499 = vpop.permute.xlu0 %1498
  %1500 = vrot.lane.b32.xlu0 %v643, 16
  %v1501 = vpop.permute.xlu0 %1500
  %1502 = vrot.lane.b32.xlu0 %v645, 16
  %v1503 = vpop.permute.xlu0 %1502
  %1504 = vrot.lane.b32.xlu0 %v1377, 16
  %v1505 = vpop.permute.xlu0 %1504
  %1506 = vrot.lane.b32.xlu0 %v1379, 16
  %v1507 = vpop.permute.xlu0 %1506
  %v1572 = vrot.slane %v378, 2
  %v1573 = vrot.slane %v217, 2
  %v1574 = vsel %vm832, %v1572, %v1573
  %v1575 = vrot.slane %v411, 2
  %v1576 = vsel %vm832, %v1573, %v1575
  %v1577 = vrot.slane %v394, 2
  %v1578 = vrot.slane %v265, 2
  %v1579 = vsel %vm832, %v1577, %v1578
  %v1580 = vrot.slane %v427, 2
  %v1581 = vsel %vm832, %v1578, %v1580
  %1582 = vrot.lane.b32.xlu0 %v840, 20
  %v1583 = vpop.permute.xlu0 %1582
  %1584 = vrot.lane.b32.xlu0 %v842, 20
  %v1585 = vpop.permute.xlu0 %1584
  %1586 = vrot.lane.b32.xlu0 %v845, 20
  %v1587 = vpop.permute.xlu0 %1586
  %1588 = vrot.lane.b32.xlu0 %v847, 20
  %v1589 = vpop.permute.xlu0 %1588
  %1590 = vrot.lane.b32.xlu0 %v850, 20
  %v1591 = vpop.permute.xlu0 %1590
  %1592 = vrot.lane.b32.xlu0 %v852, 20
  %v1593 = vpop.permute.xlu0 %1592
  %1594 = vrot.lane.b32.xlu0 %v855, 20
  %v1595 = vpop.permute.xlu0 %1594
  %1596 = vrot.lane.b32.xlu0 %v857, 20
  %v1597 = vpop.permute.xlu0 %1596
  %1598 = vrot.lane.b32.xlu0 %v860, 20
  %v1599 = vpop.permute.xlu0 %1598
  %1600 = vrot.lane.b32.xlu0 %v862, 20
  %v1601 = vpop.permute.xlu0 %1600
  %1602 = vrot.lane.b32.xlu0 %v865, 20
  %v1603 = vpop.permute.xlu0 %1602
  %1604 = vrot.lane.b32.xlu0 %v867, 20
  %v1605 = vpop.permute.xlu0 %1604
  %1606 = vrot.lane.b32.xlu0 %v870, 20
  %v1607 = vpop.permute.xlu0 %1606
  %1608 = vrot.lane.b32.xlu0 %v872, 20
  %v1609 = vpop.permute.xlu0 %1608
  %1610 = vrot.lane.b32.xlu0 %v875, 20
  %v1611 = vpop.permute.xlu0 %1610
  %1612 = vrot.lane.b32.xlu0 %v877, 20
  %v1613 = vpop.permute.xlu0 %1612
  %1614 = vrot.lane.b32.xlu0 %v880, 20
  %v1615 = vpop.permute.xlu0 %1614
  %1616 = vrot.lane.b32.xlu0 %v882, 20
  %v1617 = vpop.permute.xlu0 %1616
  %1618 = vrot.lane.b32.xlu0 %v885, 20
  %v1619 = vpop.permute.xlu0 %1618
  %1620 = vrot.lane.b32.xlu0 %v887, 20
  %v1621 = vpop.permute.xlu0 %1620
  %1622 = vrot.lane.b32.xlu0 %v890, 20
  %v1623 = vpop.permute.xlu0 %1622
  %1624 = vrot.lane.b32.xlu0 %v892, 20
  %v1625 = vpop.permute.xlu0 %1624
  %1626 = vrot.lane.b32.xlu0 %v895, 20
  %v1627 = vpop.permute.xlu0 %1626
  %1628 = vrot.lane.b32.xlu0 %v897, 20
  %v1629 = vpop.permute.xlu0 %1628
  %1630 = vrot.lane.b32.xlu0 %v900, 20
  %v1631 = vpop.permute.xlu0 %1630
  %1632 = vrot.lane.b32.xlu0 %v902, 20
  %v1633 = vpop.permute.xlu0 %1632
  %1634 = vrot.lane.b32.xlu0 %v905, 20
  %v1635 = vpop.permute.xlu0 %1634
  %1636 = vrot.lane.b32.xlu0 %v907, 20
  %v1637 = vpop.permute.xlu0 %1636
  %1638 = vrot.lane.b32.xlu0 %v910, 20
  %v1639 = vpop.permute.xlu0 %1638
  %1640 = vrot.lane.b32.xlu0 %v912, 20
  %v1641 = vpop.permute.xlu0 %1640
  %1642 = vrot.lane.b32.xlu0 %v1574, 20
  %v1643 = vpop.permute.xlu0 %1642
  %1644 = vrot.lane.b32.xlu0 %v1576, 20
  %v1645 = vpop.permute.xlu0 %1644
  %1646 = vrot.lane.b32.xlu0 %v915, 20
  %v1647 = vpop.permute.xlu0 %1646
  %1648 = vrot.lane.b32.xlu0 %v917, 20
  %v1649 = vpop.permute.xlu0 %1648
  %1650 = vrot.lane.b32.xlu0 %v920, 20
  %v1651 = vpop.permute.xlu0 %1650
  %1652 = vrot.lane.b32.xlu0 %v922, 20
  %v1653 = vpop.permute.xlu0 %1652
  %1654 = vrot.lane.b32.xlu0 %v925, 20
  %v1655 = vpop.permute.xlu0 %1654
  %1656 = vrot.lane.b32.xlu0 %v927, 20
  %v1657 = vpop.permute.xlu0 %1656
  %1658 = vrot.lane.b32.xlu0 %v930, 20
  %v1659 = vpop.permute.xlu0 %1658
  %1660 = vrot.lane.b32.xlu0 %v932, 20
  %v1661 = vpop.permute.xlu0 %1660
  %1662 = vrot.lane.b32.xlu0 %v935, 20
  %v1663 = vpop.permute.xlu0 %1662
  %1664 = vrot.lane.b32.xlu0 %v937, 20
  %v1665 = vpop.permute.xlu0 %1664
  %1666 = vrot.lane.b32.xlu0 %v940, 20
  %v1667 = vpop.permute.xlu0 %1666
  %1668 = vrot.lane.b32.xlu0 %v942, 20
  %v1669 = vpop.permute.xlu0 %1668
  %1670 = vrot.lane.b32.xlu0 %v945, 20
  %v1671 = vpop.permute.xlu0 %1670
  %1672 = vrot.lane.b32.xlu0 %v947, 20
  %v1673 = vpop.permute.xlu0 %1672
  %1674 = vrot.lane.b32.xlu0 %v950, 20
  %v1675 = vpop.permute.xlu0 %1674
  %1676 = vrot.lane.b32.xlu0 %v952, 20
  %v1677 = vpop.permute.xlu0 %1676
  %1678 = vrot.lane.b32.xlu0 %v955, 20
  %v1679 = vpop.permute.xlu0 %1678
  %1680 = vrot.lane.b32.xlu0 %v957, 20
  %v1681 = vpop.permute.xlu0 %1680
  %1682 = vrot.lane.b32.xlu0 %v960, 20
  %v1683 = vpop.permute.xlu0 %1682
  %1684 = vrot.lane.b32.xlu0 %v962, 20
  %v1685 = vpop.permute.xlu0 %1684
  %1686 = vrot.lane.b32.xlu0 %v965, 20
  %v1687 = vpop.permute.xlu0 %1686
  %1688 = vrot.lane.b32.xlu0 %v967, 20
  %v1689 = vpop.permute.xlu0 %1688
  %1690 = vrot.lane.b32.xlu0 %v970, 20
  %v1691 = vpop.permute.xlu0 %1690
  %1692 = vrot.lane.b32.xlu0 %v972, 20
  %v1693 = vpop.permute.xlu0 %1692
  %1694 = vrot.lane.b32.xlu0 %v975, 20
  %v1695 = vpop.permute.xlu0 %1694
  %1696 = vrot.lane.b32.xlu0 %v977, 20
  %v1697 = vpop.permute.xlu0 %1696
  %1698 = vrot.lane.b32.xlu0 %v980, 20
  %v1699 = vpop.permute.xlu0 %1698
  %1700 = vrot.lane.b32.xlu0 %v982, 20
  %v1701 = vpop.permute.xlu0 %1700
  %1702 = vrot.lane.b32.xlu0 %v985, 20
  %v1703 = vpop.permute.xlu0 %1702
  %1704 = vrot.lane.b32.xlu0 %v987, 20
  %v1705 = vpop.permute.xlu0 %1704
  %1706 = vrot.lane.b32.xlu0 %v1579, 20
  %v1707 = vpop.permute.xlu0 %1706
  %1708 = vrot.lane.b32.xlu0 %v1581, 20
  %v1709 = vpop.permute.xlu0 %1708
  %1774 = vrot.lane.b32.xlu0 %v364, 24
  %v1775 = vpop.permute.xlu0 %1774
  %1776 = vrot.lane.b32.xlu0 %v175, 24
  %v1777 = vpop.permute.xlu0 %1776
  %1778 = vrot.lane.b32.xlu0 %v365, 24
  %v1779 = vpop.permute.xlu0 %1778
  %1780 = vrot.lane.b32.xlu0 %v178, 24
  %v1781 = vpop.permute.xlu0 %1780
  %1782 = vrot.lane.b32.xlu0 %v366, 24
  %v1783 = vpop.permute.xlu0 %1782
  %1784 = vrot.lane.b32.xlu0 %v181, 24
  %v1785 = vpop.permute.xlu0 %1784
  %1786 = vrot.lane.b32.xlu0 %v367, 24
  %v1787 = vpop.permute.xlu0 %1786
  %1788 = vrot.lane.b32.xlu0 %v184, 24
  %v1789 = vpop.permute.xlu0 %1788
  %1790 = vrot.lane.b32.xlu0 %v368, 24
  %v1791 = vpop.permute.xlu0 %1790
  %1792 = vrot.lane.b32.xlu0 %v187, 24
  %v1793 = vpop.permute.xlu0 %1792
  %1794 = vrot.lane.b32.xlu0 %v369, 24
  %v1795 = vpop.permute.xlu0 %1794
  %1796 = vrot.lane.b32.xlu0 %v190, 24
  %v1797 = vpop.permute.xlu0 %1796
  %1798 = vrot.lane.b32.xlu0 %v370, 24
  %v1799 = vpop.permute.xlu0 %1798
  %1800 = vrot.lane.b32.xlu0 %v193, 24
  %v1801 = vpop.permute.xlu0 %1800
  %1802 = vrot.lane.b32.xlu0 %v371, 24
  %v1803 = vpop.permute.xlu0 %1802
  %1804 = vrot.lane.b32.xlu0 %v196, 24
  %v1805 = vpop.permute.xlu0 %1804
  %1806 = vrot.lane.b32.xlu0 %v372, 24
  %v1807 = vpop.permute.xlu0 %1806
  %1808 = vrot.lane.b32.xlu0 %v199, 24
  %v1809 = vpop.permute.xlu0 %1808
  %1810 = vrot.lane.b32.xlu0 %v373, 24
  %v1811 = vpop.permute.xlu0 %1810
  %1812 = vrot.lane.b32.xlu0 %v202, 24
  %v1813 = vpop.permute.xlu0 %1812
  %1814 = vrot.lane.b32.xlu0 %v374, 24
  %v1815 = vpop.permute.xlu0 %1814
  %1816 = vrot.lane.b32.xlu0 %v205, 24
  %v1817 = vpop.permute.xlu0 %1816
  %1818 = vrot.lane.b32.xlu0 %v375, 24
  %v1819 = vpop.permute.xlu0 %1818
  %1820 = vrot.lane.b32.xlu0 %v208, 24
  %v1821 = vpop.permute.xlu0 %1820
  %1822 = vrot.lane.b32.xlu0 %v376, 24
  %v1823 = vpop.permute.xlu0 %1822
  %1824 = vrot.lane.b32.xlu0 %v211, 24
  %v1825 = vpop.permute.xlu0 %1824
  %1826 = vrot.lane.b32.xlu0 %v377, 24
  %v1827 = vpop.permute.xlu0 %1826
  %1828 = vrot.lane.b32.xlu0 %v214, 24
  %v1829 = vpop.permute.xlu0 %1828
  %1830 = vrot.lane.b32.xlu0 %v378, 24
  %v1831 = vpop.permute.xlu0 %1830
  %1832 = vrot.lane.b32.xlu0 %v217, 24
  %v1833 = vpop.permute.xlu0 %1832
  %1834 = vrot.lane.b32.xlu0 %v362, 24
  %v1835 = vpop.permute.xlu0 %1834
  %1836 = vrot.lane.b32.xlu0 %v169, 24
  %v1837 = vpop.permute.xlu0 %1836
  %1838 = vrot.lane.b32.xlu0 %v380, 24
  %v1839 = vpop.permute.xlu0 %1838
  %1840 = vrot.lane.b32.xlu0 %v223, 24
  %v1841 = vpop.permute.xlu0 %1840
  %1842 = vrot.lane.b32.xlu0 %v381, 24
  %v1843 = vpop.permute.xlu0 %1842
  %1844 = vrot.lane.b32.xlu0 %v226, 24
  %v1845 = vpop.permute.xlu0 %1844
  %1846 = vrot.lane.b32.xlu0 %v382, 24
  %v1847 = vpop.permute.xlu0 %1846
  %1848 = vrot.lane.b32.xlu0 %v229, 24
  %v1849 = vpop.permute.xlu0 %1848
  %1850 = vrot.lane.b32.xlu0 %v383, 24
  %v1851 = vpop.permute.xlu0 %1850
  %1852 = vrot.lane.b32.xlu0 %v232, 24
  %v1853 = vpop.permute.xlu0 %1852
  %1854 = vrot.lane.b32.xlu0 %v384, 24
  %v1855 = vpop.permute.xlu0 %1854
  %1856 = vrot.lane.b32.xlu0 %v235, 24
  %v1857 = vpop.permute.xlu0 %1856
  %1858 = vrot.lane.b32.xlu0 %v385, 24
  %v1859 = vpop.permute.xlu0 %1858
  %1860 = vrot.lane.b32.xlu0 %v238, 24
  %v1861 = vpop.permute.xlu0 %1860
  %1862 = vrot.lane.b32.xlu0 %v386, 24
  %v1863 = vpop.permute.xlu0 %1862
  %1864 = vrot.lane.b32.xlu0 %v241, 24
  %v1865 = vpop.permute.xlu0 %1864
  %1866 = vrot.lane.b32.xlu0 %v387, 24
  %v1867 = vpop.permute.xlu0 %1866
  %1868 = vrot.lane.b32.xlu0 %v244, 24
  %v1869 = vpop.permute.xlu0 %1868
  %1870 = vrot.lane.b32.xlu0 %v388, 24
  %v1871 = vpop.permute.xlu0 %1870
  %1872 = vrot.lane.b32.xlu0 %v247, 24
  %v1873 = vpop.permute.xlu0 %1872
  %1874 = vrot.lane.b32.xlu0 %v389, 24
  %v1875 = vpop.permute.xlu0 %1874
  %1876 = vrot.lane.b32.xlu0 %v250, 24
  %v1877 = vpop.permute.xlu0 %1876
  %1878 = vrot.lane.b32.xlu0 %v390, 24
  %v1879 = vpop.permute.xlu0 %1878
  %1880 = vrot.lane.b32.xlu0 %v253, 24
  %v1881 = vpop.permute.xlu0 %1880
  %1882 = vrot.lane.b32.xlu0 %v391, 24
  %v1883 = vpop.permute.xlu0 %1882
  %1884 = vrot.lane.b32.xlu0 %v256, 24
  %v1885 = vpop.permute.xlu0 %1884
  %1886 = vrot.lane.b32.xlu0 %v392, 24
  %v1887 = vpop.permute.xlu0 %1886
  %1888 = vrot.lane.b32.xlu0 %v259, 24
  %v1889 = vpop.permute.xlu0 %1888
  %1890 = vrot.lane.b32.xlu0 %v393, 24
  %v1891 = vpop.permute.xlu0 %1890
  %1892 = vrot.lane.b32.xlu0 %v262, 24
  %v1893 = vpop.permute.xlu0 %1892
  %1894 = vrot.lane.b32.xlu0 %v394, 24
  %v1895 = vpop.permute.xlu0 %1894
  %1896 = vrot.lane.b32.xlu0 %v265, 24
  %v1897 = vpop.permute.xlu0 %1896
  %1960 = vrot.lane.b32.xlu0 %v503, 28
  %v1961 = vpop.permute.xlu0 %1960
  %1962 = vrot.lane.b32.xlu0 %v505, 28
  %v1963 = vpop.permute.xlu0 %1962
  %1964 = vrot.lane.b32.xlu0 %v508, 28
  %v1965 = vpop.permute.xlu0 %1964
  %1966 = vrot.lane.b32.xlu0 %v510, 28
  %v1967 = vpop.permute.xlu0 %1966
  %1968 = vrot.lane.b32.xlu0 %v513, 28
  %v1969 = vpop.permute.xlu0 %1968
  %1970 = vrot.lane.b32.xlu0 %v515, 28
  %v1971 = vpop.permute.xlu0 %1970
  %1972 = vrot.lane.b32.xlu0 %v518, 28
  %v1973 = vpop.permute.xlu0 %1972
  %1974 = vrot.lane.b32.xlu0 %v520, 28
  %v1975 = vpop.permute.xlu0 %1974
  %1976 = vrot.lane.b32.xlu0 %v523, 28
  %v1977 = vpop.permute.xlu0 %1976
  %1978 = vrot.lane.b32.xlu0 %v525, 28
  %v1979 = vpop.permute.xlu0 %1978
  %1980 = vrot.lane.b32.xlu0 %v528, 28
  %v1981 = vpop.permute.xlu0 %1980
  %1982 = vrot.lane.b32.xlu0 %v530, 28
  %v1983 = vpop.permute.xlu0 %1982
  %1984 = vrot.lane.b32.xlu0 %v533, 28
  %v1985 = vpop.permute.xlu0 %1984
  %1986 = vrot.lane.b32.xlu0 %v535, 28
  %v1987 = vpop.permute.xlu0 %1986
  %1988 = vrot.lane.b32.xlu0 %v538, 28
  %v1989 = vpop.permute.xlu0 %1988
  %1990 = vrot.lane.b32.xlu0 %v540, 28
  %v1991 = vpop.permute.xlu0 %1990
  %1992 = vrot.lane.b32.xlu0 %v543, 28
  %v1993 = vpop.permute.xlu0 %1992
  %1994 = vrot.lane.b32.xlu0 %v545, 28
  %v1995 = vpop.permute.xlu0 %1994
  %1996 = vrot.lane.b32.xlu0 %v548, 28
  %v1997 = vpop.permute.xlu0 %1996
  %1998 = vrot.lane.b32.xlu0 %v550, 28
  %v1999 = vpop.permute.xlu0 %1998
  %2000 = vrot.lane.b32.xlu0 %v553, 28
  %v2001 = vpop.permute.xlu0 %2000
  %2002 = vrot.lane.b32.xlu0 %v555, 28
  %v2003 = vpop.permute.xlu0 %2002
  %2004 = vrot.lane.b32.xlu0 %v558, 28
  %v2005 = vpop.permute.xlu0 %2004
  %2006 = vrot.lane.b32.xlu0 %v560, 28
  %v2007 = vpop.permute.xlu0 %2006
  %2008 = vrot.lane.b32.xlu0 %v563, 28
  %v2009 = vpop.permute.xlu0 %2008
  %2010 = vrot.lane.b32.xlu0 %v565, 28
  %v2011 = vpop.permute.xlu0 %2010
  %2012 = vrot.lane.b32.xlu0 %v568, 28
  %v2013 = vpop.permute.xlu0 %2012
  %2014 = vrot.lane.b32.xlu0 %v570, 28
  %v2015 = vpop.permute.xlu0 %2014
  %2016 = vrot.lane.b32.xlu0 %v1372, 28
  %v2017 = vpop.permute.xlu0 %2016
  %2018 = vrot.lane.b32.xlu0 %v1374, 28
  %v2019 = vpop.permute.xlu0 %2018
  %2020 = vrot.lane.b32.xlu0 %v493, 28
  %v2021 = vpop.permute.xlu0 %2020
  %2022 = vrot.lane.b32.xlu0 %v495, 28
  %v2023 = vpop.permute.xlu0 %2022
  %2024 = vrot.lane.b32.xlu0 %v578, 28
  %v2025 = vpop.permute.xlu0 %2024
  %2026 = vrot.lane.b32.xlu0 %v580, 28
  %v2027 = vpop.permute.xlu0 %2026
  %2028 = vrot.lane.b32.xlu0 %v583, 28
  %v2029 = vpop.permute.xlu0 %2028
  %2030 = vrot.lane.b32.xlu0 %v585, 28
  %v2031 = vpop.permute.xlu0 %2030
  %2032 = vrot.lane.b32.xlu0 %v588, 28
  %v2033 = vpop.permute.xlu0 %2032
  %2034 = vrot.lane.b32.xlu0 %v590, 28
  %v2035 = vpop.permute.xlu0 %2034
  %2036 = vrot.lane.b32.xlu0 %v593, 28
  %v2037 = vpop.permute.xlu0 %2036
  %2038 = vrot.lane.b32.xlu0 %v595, 28
  %v2039 = vpop.permute.xlu0 %2038
  %2040 = vrot.lane.b32.xlu0 %v598, 28
  %v2041 = vpop.permute.xlu0 %2040
  %2042 = vrot.lane.b32.xlu0 %v600, 28
  %v2043 = vpop.permute.xlu0 %2042
  %2044 = vrot.lane.b32.xlu0 %v603, 28
  %v2045 = vpop.permute.xlu0 %2044
  %2046 = vrot.lane.b32.xlu0 %v605, 28
  %v2047 = vpop.permute.xlu0 %2046
  %2048 = vrot.lane.b32.xlu0 %v608, 28
  %v2049 = vpop.permute.xlu0 %2048
  %2050 = vrot.lane.b32.xlu0 %v610, 28
  %v2051 = vpop.permute.xlu0 %2050
  %2052 = vrot.lane.b32.xlu0 %v613, 28
  %v2053 = vpop.permute.xlu0 %2052
  %2054 = vrot.lane.b32.xlu0 %v615, 28
  %v2055 = vpop.permute.xlu0 %2054
  %2056 = vrot.lane.b32.xlu0 %v618, 28
  %v2057 = vpop.permute.xlu0 %2056
  %2058 = vrot.lane.b32.xlu0 %v620, 28
  %v2059 = vpop.permute.xlu0 %2058
  %2060 = vrot.lane.b32.xlu0 %v623, 28
  %v2061 = vpop.permute.xlu0 %2060
  %2062 = vrot.lane.b32.xlu0 %v625, 28
  %v2063 = vpop.permute.xlu0 %2062
  %2064 = vrot.lane.b32.xlu0 %v628, 28
  %v2065 = vpop.permute.xlu0 %2064
  %2066 = vrot.lane.b32.xlu0 %v630, 28
  %v2067 = vpop.permute.xlu0 %2066
  %2068 = vrot.lane.b32.xlu0 %v633, 28
  %v2069 = vpop.permute.xlu0 %2068
  %2070 = vrot.lane.b32.xlu0 %v635, 28
  %v2071 = vpop.permute.xlu0 %2070
  %2072 = vrot.lane.b32.xlu0 %v638, 28
  %v2073 = vpop.permute.xlu0 %2072
  %2074 = vrot.lane.b32.xlu0 %v640, 28
  %v2075 = vpop.permute.xlu0 %2074
  %2076 = vrot.lane.b32.xlu0 %v643, 28
  %v2077 = vpop.permute.xlu0 %2076
  %2078 = vrot.lane.b32.xlu0 %v645, 28
  %v2079 = vpop.permute.xlu0 %2078
  %2080 = vrot.lane.b32.xlu0 %v1377, 28
  %v2081 = vpop.permute.xlu0 %2080
  %2082 = vrot.lane.b32.xlu0 %v1379, 28
  %v2083 = vpop.permute.xlu0 %2082
  %2146 = vrot.lane.b32.xlu0 %v845, 32
  %v2147 = vpop.permute.xlu0 %2146
  %2148 = vrot.lane.b32.xlu0 %v847, 32
  %v2149 = vpop.permute.xlu0 %2148
  %2150 = vrot.lane.b32.xlu0 %v850, 32
  %v2151 = vpop.permute.xlu0 %2150
  %2152 = vrot.lane.b32.xlu0 %v852, 32
  %v2153 = vpop.permute.xlu0 %2152
  %2154 = vrot.lane.b32.xlu0 %v855, 32
  %v2155 = vpop.permute.xlu0 %2154
  %2156 = vrot.lane.b32.xlu0 %v857, 32
  %v2157 = vpop.permute.xlu0 %2156
  %2158 = vrot.lane.b32.xlu0 %v860, 32
  %v2159 = vpop.permute.xlu0 %2158
  %2160 = vrot.lane.b32.xlu0 %v862, 32
  %v2161 = vpop.permute.xlu0 %2160
  %2162 = vrot.lane.b32.xlu0 %v865, 32
  %v2163 = vpop.permute.xlu0 %2162
  %2164 = vrot.lane.b32.xlu0 %v867, 32
  %v2165 = vpop.permute.xlu0 %2164
  %2166 = vrot.lane.b32.xlu0 %v870, 32
  %v2167 = vpop.permute.xlu0 %2166
  %2168 = vrot.lane.b32.xlu0 %v872, 32
  %v2169 = vpop.permute.xlu0 %2168
  %2170 = vrot.lane.b32.xlu0 %v875, 32
  %v2171 = vpop.permute.xlu0 %2170
  %2172 = vrot.lane.b32.xlu0 %v877, 32
  %v2173 = vpop.permute.xlu0 %2172
  %2174 = vrot.lane.b32.xlu0 %v880, 32
  %v2175 = vpop.permute.xlu0 %2174
  %2176 = vrot.lane.b32.xlu0 %v882, 32
  %v2177 = vpop.permute.xlu0 %2176
  %2178 = vrot.lane.b32.xlu0 %v885, 32
  %v2179 = vpop.permute.xlu0 %2178
  %2180 = vrot.lane.b32.xlu0 %v887, 32
  %v2181 = vpop.permute.xlu0 %2180
  %2182 = vrot.lane.b32.xlu0 %v890, 32
  %v2183 = vpop.permute.xlu0 %2182
  %2184 = vrot.lane.b32.xlu0 %v892, 32
  %v2185 = vpop.permute.xlu0 %2184
  %2186 = vrot.lane.b32.xlu0 %v895, 32
  %v2187 = vpop.permute.xlu0 %2186
  %2188 = vrot.lane.b32.xlu0 %v897, 32
  %v2189 = vpop.permute.xlu0 %2188
  %2190 = vrot.lane.b32.xlu0 %v900, 32
  %v2191 = vpop.permute.xlu0 %2190
  %2192 = vrot.lane.b32.xlu0 %v902, 32
  %v2193 = vpop.permute.xlu0 %2192
  %2194 = vrot.lane.b32.xlu0 %v905, 32
  %v2195 = vpop.permute.xlu0 %2194
  %2196 = vrot.lane.b32.xlu0 %v907, 32
  %v2197 = vpop.permute.xlu0 %2196
  %2198 = vrot.lane.b32.xlu0 %v910, 32
  %v2199 = vpop.permute.xlu0 %2198
  %2200 = vrot.lane.b32.xlu0 %v912, 32
  %v2201 = vpop.permute.xlu0 %2200
  %2202 = vrot.lane.b32.xlu0 %v1574, 32
  %v2203 = vpop.permute.xlu0 %2202
  %2204 = vrot.lane.b32.xlu0 %v1576, 32
  %v2205 = vpop.permute.xlu0 %2204
  %2206 = vrot.lane.b32.xlu0 %v835, 32
  %v2207 = vpop.permute.xlu0 %2206
  %2208 = vrot.lane.b32.xlu0 %v837, 32
  %v2209 = vpop.permute.xlu0 %2208
  %2210 = vrot.lane.b32.xlu0 %v920, 32
  %v2211 = vpop.permute.xlu0 %2210
  %2212 = vrot.lane.b32.xlu0 %v922, 32
  %v2213 = vpop.permute.xlu0 %2212
  %2214 = vrot.lane.b32.xlu0 %v925, 32
  %v2215 = vpop.permute.xlu0 %2214
  %2216 = vrot.lane.b32.xlu0 %v927, 32
  %v2217 = vpop.permute.xlu0 %2216
  %2218 = vrot.lane.b32.xlu0 %v930, 32
  %v2219 = vpop.permute.xlu0 %2218
  %2220 = vrot.lane.b32.xlu0 %v932, 32
  %v2221 = vpop.permute.xlu0 %2220
  %2222 = vrot.lane.b32.xlu0 %v935, 32
  %v2223 = vpop.permute.xlu0 %2222
  %2224 = vrot.lane.b32.xlu0 %v937, 32
  %v2225 = vpop.permute.xlu0 %2224
  %2226 = vrot.lane.b32.xlu0 %v940, 32
  %v2227 = vpop.permute.xlu0 %2226
  %2228 = vrot.lane.b32.xlu0 %v942, 32
  %v2229 = vpop.permute.xlu0 %2228
  %2230 = vrot.lane.b32.xlu0 %v945, 32
  %v2231 = vpop.permute.xlu0 %2230
  %2232 = vrot.lane.b32.xlu0 %v947, 32
  %v2233 = vpop.permute.xlu0 %2232
  %2234 = vrot.lane.b32.xlu0 %v950, 32
  %v2235 = vpop.permute.xlu0 %2234
  %2236 = vrot.lane.b32.xlu0 %v952, 32
  %v2237 = vpop.permute.xlu0 %2236
  %2238 = vrot.lane.b32.xlu0 %v955, 32
  %v2239 = vpop.permute.xlu0 %2238
  %2240 = vrot.lane.b32.xlu0 %v957, 32
  %v2241 = vpop.permute.xlu0 %2240
  %2242 = vrot.lane.b32.xlu0 %v960, 32
  %v2243 = vpop.permute.xlu0 %2242
  %2244 = vrot.lane.b32.xlu0 %v962, 32
  %v2245 = vpop.permute.xlu0 %2244
  %2246 = vrot.lane.b32.xlu0 %v965, 32
  %v2247 = vpop.permute.xlu0 %2246
  %2248 = vrot.lane.b32.xlu0 %v967, 32
  %v2249 = vpop.permute.xlu0 %2248
  %2250 = vrot.lane.b32.xlu0 %v970, 32
  %v2251 = vpop.permute.xlu0 %2250
  %2252 = vrot.lane.b32.xlu0 %v972, 32
  %v2253 = vpop.permute.xlu0 %2252
  %2254 = vrot.lane.b32.xlu0 %v975, 32
  %v2255 = vpop.permute.xlu0 %2254
  %2256 = vrot.lane.b32.xlu0 %v977, 32
  %v2257 = vpop.permute.xlu0 %2256
  %2258 = vrot.lane.b32.xlu0 %v980, 32
  %v2259 = vpop.permute.xlu0 %2258
  %2260 = vrot.lane.b32.xlu0 %v982, 32
  %v2261 = vpop.permute.xlu0 %2260
  %2262 = vrot.lane.b32.xlu0 %v985, 32
  %v2263 = vpop.permute.xlu0 %2262
  %2264 = vrot.lane.b32.xlu0 %v987, 32
  %v2265 = vpop.permute.xlu0 %2264
  %2266 = vrot.lane.b32.xlu0 %v1579, 32
  %v2267 = vpop.permute.xlu0 %2266
  %2268 = vrot.lane.b32.xlu0 %v1581, 32
  %v2269 = vpop.permute.xlu0 %2268
  %vm2332 = vcmask 31744
  %v2333 = vsel %vm2332, %v362, %v647
  %v2334 = vsel %vm2332, %v169, %v649
  %v2335 = vsel %vm2332, %v363, %v651
  %v2336 = vsel %vm2332, %v172, %v653
  %v2337 = vsel %vm2332, %v364, %v655
  %v2338 = vsel %vm2332, %v175, %v657
  %v2339 = vsel %vm2332, %v365, %v659
  %v2340 = vsel %vm2332, %v178, %v661
  %v2341 = vsel %vm2332, %v366, %v663
  %v2342 = vsel %vm2332, %v181, %v665
  %v2343 = vsel %vm2332, %v367, %v667
  %v2344 = vsel %vm2332, %v184, %v669
  %v2345 = vsel %vm2332, %v368, %v671
  %v2346 = vsel %vm2332, %v187, %v673
  %v2347 = vsel %vm2332, %v369, %v675
  %v2348 = vsel %vm2332, %v190, %v677
  %v2349 = vsel %vm2332, %v370, %v679
  %v2350 = vsel %vm2332, %v193, %v681
  %v2351 = vsel %vm2332, %v371, %v683
  %v2352 = vsel %vm2332, %v196, %v685
  %v2353 = vsel %vm2332, %v372, %v687
  %v2354 = vsel %vm2332, %v199, %v689
  %v2355 = vsel %vm2332, %v373, %v691
  %v2356 = vsel %vm2332, %v202, %v693
  %v2357 = vsel %vm2332, %v374, %v695
  %v2358 = vsel %vm2332, %v205, %v697
  %v2359 = vsel %vm2332, %v375, %v699
  %v2360 = vsel %vm2332, %v208, %v701
  %v2361 = vsel %vm2332, %v376, %v703
  %v2362 = vsel %vm2332, %v211, %v705
  %v2363 = vsel %vm2332, %v377, %v707
  %v2364 = vsel %vm2332, %v214, %v709
  %v2365 = vsel %vm2332, %v379, %v711
  %v2366 = vsel %vm2332, %v220, %v713
  %v2367 = vsel %vm2332, %v380, %v715
  %v2368 = vsel %vm2332, %v223, %v717
  %v2369 = vsel %vm2332, %v381, %v719
  %v2370 = vsel %vm2332, %v226, %v721
  %v2371 = vsel %vm2332, %v382, %v723
  %v2372 = vsel %vm2332, %v229, %v725
  %v2373 = vsel %vm2332, %v383, %v727
  %v2374 = vsel %vm2332, %v232, %v729
  %v2375 = vsel %vm2332, %v384, %v731
  %v2376 = vsel %vm2332, %v235, %v733
  %v2377 = vsel %vm2332, %v385, %v735
  %v2378 = vsel %vm2332, %v238, %v737
  %v2379 = vsel %vm2332, %v386, %v739
  %v2380 = vsel %vm2332, %v241, %v741
  %v2381 = vsel %vm2332, %v387, %v743
  %v2382 = vsel %vm2332, %v244, %v745
  %v2383 = vsel %vm2332, %v388, %v747
  %v2384 = vsel %vm2332, %v247, %v749
  %v2385 = vsel %vm2332, %v389, %v751
  %v2386 = vsel %vm2332, %v250, %v753
  %v2387 = vsel %vm2332, %v390, %v755
  %v2388 = vsel %vm2332, %v253, %v757
  %v2389 = vsel %vm2332, %v391, %v759
  %v2390 = vsel %vm2332, %v256, %v761
  %v2391 = vsel %vm2332, %v392, %v763
  %v2392 = vsel %vm2332, %v259, %v765
  %v2393 = vsel %vm2332, %v393, %v767
  %v2394 = vsel %vm2332, %v262, %v769
  %vm2395 = vcmask 64512
  %v2396 = vsel %vm2395, %v2333, %v989
  %v2397 = vsel %vm2395, %v2334, %v991
  %v2398 = vsel %vm2395, %v2335, %v993
  %v2399 = vsel %vm2395, %v2336, %v995
  %v2400 = vsel %vm2395, %v2337, %v997
  %v2401 = vsel %vm2395, %v2338, %v999
  %v2402 = vsel %vm2395, %v2339, %v1001
  %v2403 = vsel %vm2395, %v2340, %v1003
  %v2404 = vsel %vm2395, %v2341, %v1005
  %v2405 = vsel %vm2395, %v2342, %v1007
  %v2406 = vsel %vm2395, %v2343, %v1009
  %v2407 = vsel %vm2395, %v2344, %v1011
  %v2408 = vsel %vm2395, %v2345, %v1013
  %v2409 = vsel %vm2395, %v2346, %v1015
  %v2410 = vsel %vm2395, %v2347, %v1017
  %v2411 = vsel %vm2395, %v2348, %v1019
  %v2412 = vsel %vm2395, %v2349, %v1021
  %v2413 = vsel %vm2395, %v2350, %v1023
  %v2414 = vsel %vm2395, %v2351, %v1025
  %v2415 = vsel %vm2395, %v2352, %v1027
  %v2416 = vsel %vm2395, %v2353, %v1029
  %v2417 = vsel %vm2395, %v2354, %v1031
  %v2418 = vsel %vm2395, %v2355, %v1033
  %v2419 = vsel %vm2395, %v2356, %v1035
  %v2420 = vsel %vm2395, %v2357, %v1037
  %v2421 = vsel %vm2395, %v2358, %v1039
  %v2422 = vsel %vm2395, %v2359, %v1041
  %v2423 = vsel %vm2395, %v2360, %v1043
  %v2424 = vsel %vm2395, %v2361, %v1045
  %v2425 = vsel %vm2395, %v2362, %v1047
  %v2426 = vsel %vm2395, %v2363, %v1049
  %v2427 = vsel %vm2395, %v2364, %v1051
  %v2428 = vsel %vm2395, %v2365, %v1053
  %v2429 = vsel %vm2395, %v2366, %v1055
  %v2430 = vsel %vm2395, %v2367, %v1057
  %v2431 = vsel %vm2395, %v2368, %v1059
  %v2432 = vsel %vm2395, %v2369, %v1061
  %v2433 = vsel %vm2395, %v2370, %v1063
  %v2434 = vsel %vm2395, %v2371, %v1065
  %v2435 = vsel %vm2395, %v2372, %v1067
  %v2436 = vsel %vm2395, %v2373, %v1069
  %v2437 = vsel %vm2395, %v2374, %v1071
  %v2438 = vsel %vm2395, %v2375, %v1073
  %v2439 = vsel %vm2395, %v2376, %v1075
  %v2440 = vsel %vm2395, %v2377, %v1077
  %v2441 = vsel %vm2395, %v2378, %v1079
  %v2442 = vsel %vm2395, %v2379, %v1081
  %v2443 = vsel %vm2395, %v2380, %v1083
  %v2444 = vsel %vm2395, %v2381, %v1085
  %v2445 = vsel %vm2395, %v2382, %v1087
  %v2446 = vsel %vm2395, %v2383, %v1089
  %v2447 = vsel %vm2395, %v2384, %v1091
  %v2448 = vsel %vm2395, %v2385, %v1093
  %v2449 = vsel %vm2395, %v2386, %v1095
  %v2450 = vsel %vm2395, %v2387, %v1097
  %v2451 = vsel %vm2395, %v2388, %v1099
  %v2452 = vsel %vm2395, %v2389, %v1101
  %v2453 = vsel %vm2395, %v2390, %v1103
  %v2454 = vsel %vm2395, %v2391, %v1105
  %v2455 = vsel %vm2395, %v2392, %v1107
  %v2456 = vsel %vm2395, %v2393, %v1109
  %v2457 = vsel %vm2395, %v2394, %v1111
  %vm2458 = vcmask 97280
  %v2459 = vsel %vm2458, %v2396, %v1177
  %v2460 = vsel %vm2458, %v2397, %v1179
  %v2461 = vsel %vm2458, %v2398, %v1181
  %v2462 = vsel %vm2458, %v2399, %v1183
  %v2463 = vsel %vm2458, %v2400, %v1185
  %v2464 = vsel %vm2458, %v2401, %v1187
  %v2465 = vsel %vm2458, %v2402, %v1189
  %v2466 = vsel %vm2458, %v2403, %v1191
  %v2467 = vsel %vm2458, %v2404, %v1193
  %v2468 = vsel %vm2458, %v2405, %v1195
  %v2469 = vsel %vm2458, %v2406, %v1197
  %v2470 = vsel %vm2458, %v2407, %v1199
  %v2471 = vsel %vm2458, %v2408, %v1201
  %v2472 = vsel %vm2458, %v2409, %v1203
  %v2473 = vsel %vm2458, %v2410, %v1205
  %v2474 = vsel %vm2458, %v2411, %v1207
  %v2475 = vsel %vm2458, %v2412, %v1209
  %v2476 = vsel %vm2458, %v2413, %v1211
  %v2477 = vsel %vm2458, %v2414, %v1213
  %v2478 = vsel %vm2458, %v2415, %v1215
  %v2479 = vsel %vm2458, %v2416, %v1217
  %v2480 = vsel %vm2458, %v2417, %v1219
  %v2481 = vsel %vm2458, %v2418, %v1221
  %v2482 = vsel %vm2458, %v2419, %v1223
  %v2483 = vsel %vm2458, %v2420, %v1225
  %v2484 = vsel %vm2458, %v2421, %v1227
  %v2485 = vsel %vm2458, %v2422, %v1229
  %v2486 = vsel %vm2458, %v2423, %v1231
  %v2487 = vsel %vm2458, %v2424, %v1233
  %v2488 = vsel %vm2458, %v2425, %v1235
  %v2489 = vsel %vm2458, %v2426, %v1237
  %v2490 = vsel %vm2458, %v2427, %v1239
  %v2491 = vsel %vm2458, %v2396, %v1241
  %v2492 = vsel %vm2458, %v2397, %v1243
  %v2493 = vsel %vm2458, %v2428, %v1245
  %v2494 = vsel %vm2458, %v2429, %v1247
  %v2495 = vsel %vm2458, %v2430, %v1249
  %v2496 = vsel %vm2458, %v2431, %v1251
  %v2497 = vsel %vm2458, %v2432, %v1253
  %v2498 = vsel %vm2458, %v2433, %v1255
  %v2499 = vsel %vm2458, %v2434, %v1257
  %v2500 = vsel %vm2458, %v2435, %v1259
  %v2501 = vsel %vm2458, %v2436, %v1261
  %v2502 = vsel %vm2458, %v2437, %v1263
  %v2503 = vsel %vm2458, %v2438, %v1265
  %v2504 = vsel %vm2458, %v2439, %v1267
  %v2505 = vsel %vm2458, %v2440, %v1269
  %v2506 = vsel %vm2458, %v2441, %v1271
  %v2507 = vsel %vm2458, %v2442, %v1273
  %v2508 = vsel %vm2458, %v2443, %v1275
  %v2509 = vsel %vm2458, %v2444, %v1277
  %v2510 = vsel %vm2458, %v2445, %v1279
  %v2511 = vsel %vm2458, %v2446, %v1281
  %v2512 = vsel %vm2458, %v2447, %v1283
  %v2513 = vsel %vm2458, %v2448, %v1285
  %v2514 = vsel %vm2458, %v2449, %v1287
  %v2515 = vsel %vm2458, %v2450, %v1289
  %v2516 = vsel %vm2458, %v2451, %v1291
  %v2517 = vsel %vm2458, %v2452, %v1293
  %v2518 = vsel %vm2458, %v2453, %v1295
  %v2519 = vsel %vm2458, %v2454, %v1297
  %v2520 = vsel %vm2458, %v2455, %v1299
  %v2521 = vsel %vm2458, %v2456, %v1301
  %v2522 = vsel %vm2458, %v2457, %v1303
  %vm2523 = vcmask 130048
  %v2524 = vsel %vm2523, %v2459, %v1381
  %v2525 = vsel %vm2523, %v2460, %v1383
  %v2526 = vsel %vm2523, %v2461, %v1385
  %v2527 = vsel %vm2523, %v2462, %v1387
  %v2528 = vsel %vm2523, %v2463, %v1389
  %v2529 = vsel %vm2523, %v2464, %v1391
  %v2530 = vsel %vm2523, %v2465, %v1393
  %v2531 = vsel %vm2523, %v2466, %v1395
  %v2532 = vsel %vm2523, %v2467, %v1397
  %v2533 = vsel %vm2523, %v2468, %v1399
  %v2534 = vsel %vm2523, %v2469, %v1401
  %v2535 = vsel %vm2523, %v2470, %v1403
  %v2536 = vsel %vm2523, %v2471, %v1405
  %v2537 = vsel %vm2523, %v2472, %v1407
  %v2538 = vsel %vm2523, %v2473, %v1409
  %v2539 = vsel %vm2523, %v2474, %v1411
  %v2540 = vsel %vm2523, %v2475, %v1413
  %v2541 = vsel %vm2523, %v2476, %v1415
  %v2542 = vsel %vm2523, %v2477, %v1417
  %v2543 = vsel %vm2523, %v2478, %v1419
  %v2544 = vsel %vm2523, %v2479, %v1421
  %v2545 = vsel %vm2523, %v2480, %v1423
  %v2546 = vsel %vm2523, %v2481, %v1425
  %v2547 = vsel %vm2523, %v2482, %v1427
  %v2548 = vsel %vm2523, %v2483, %v1429
  %v2549 = vsel %vm2523, %v2484, %v1431
  %v2550 = vsel %vm2523, %v2485, %v1433
  %v2551 = vsel %vm2523, %v2486, %v1435
  %v2552 = vsel %vm2523, %v2487, %v1437
  %v2553 = vsel %vm2523, %v2488, %v1439
  %v2554 = vsel %vm2523, %v2489, %v1441
  %v2555 = vsel %vm2523, %v2490, %v1443
  %v2556 = vsel %vm2523, %v2491, %v1445
  %v2557 = vsel %vm2523, %v2492, %v1447
  %v2558 = vsel %vm2523, %v2493, %v1449
  %v2559 = vsel %vm2523, %v2494, %v1451
  %v2560 = vsel %vm2523, %v2495, %v1453
  %v2561 = vsel %vm2523, %v2496, %v1455
  %v2562 = vsel %vm2523, %v2497, %v1457
  %v2563 = vsel %vm2523, %v2498, %v1459
  %v2564 = vsel %vm2523, %v2499, %v1461
  %v2565 = vsel %vm2523, %v2500, %v1463
  %v2566 = vsel %vm2523, %v2501, %v1465
  %v2567 = vsel %vm2523, %v2502, %v1467
  %v2568 = vsel %vm2523, %v2503, %v1469
  %v2569 = vsel %vm2523, %v2504, %v1471
  %v2570 = vsel %vm2523, %v2505, %v1473
  %v2571 = vsel %vm2523, %v2506, %v1475
  %v2572 = vsel %vm2523, %v2507, %v1477
  %v2573 = vsel %vm2523, %v2508, %v1479
  %v2574 = vsel %vm2523, %v2509, %v1481
  %v2575 = vsel %vm2523, %v2510, %v1483
  %v2576 = vsel %vm2523, %v2511, %v1485
  %v2577 = vsel %vm2523, %v2512, %v1487
  %v2578 = vsel %vm2523, %v2513, %v1489
  %v2579 = vsel %vm2523, %v2514, %v1491
  %v2580 = vsel %vm2523, %v2515, %v1493
  %v2581 = vsel %vm2523, %v2516, %v1495
  %v2582 = vsel %vm2523, %v2517, %v1497
  %v2583 = vsel %vm2523, %v2518, %v1499
  %v2584 = vsel %vm2523, %v2519, %v1501
  %v2585 = vsel %vm2523, %v2520, %v1503
  %v2586 = vsel %vm2523, %v2521, %v1505
  %v2587 = vsel %vm2523, %v2522, %v1507
  %vm2588 = vcmask 162816
  %v2589 = vsel %vm2588, %v2524, %v1583
  %v2590 = vsel %vm2588, %v2525, %v1585
  %v2591 = vsel %vm2588, %v2526, %v1587
  %v2592 = vsel %vm2588, %v2527, %v1589
  %v2593 = vsel %vm2588, %v2528, %v1591
  %v2594 = vsel %vm2588, %v2529, %v1593
  %v2595 = vsel %vm2588, %v2530, %v1595
  %v2596 = vsel %vm2588, %v2531, %v1597
  %v2597 = vsel %vm2588, %v2532, %v1599
  %v2598 = vsel %vm2588, %v2533, %v1601
  %v2599 = vsel %vm2588, %v2534, %v1603
  %v2600 = vsel %vm2588, %v2535, %v1605
  %v2601 = vsel %vm2588, %v2536, %v1607
  %v2602 = vsel %vm2588, %v2537, %v1609
  %v2603 = vsel %vm2588, %v2538, %v1611
  %v2604 = vsel %vm2588, %v2539, %v1613
  %v2605 = vsel %vm2588, %v2540, %v1615
  %v2606 = vsel %vm2588, %v2541, %v1617
  %v2607 = vsel %vm2588, %v2542, %v1619
  %v2608 = vsel %vm2588, %v2543, %v1621
  %v2609 = vsel %vm2588, %v2544, %v1623
  %v2610 = vsel %vm2588, %v2545, %v1625
  %v2611 = vsel %vm2588, %v2546, %v1627
  %v2612 = vsel %vm2588, %v2547, %v1629
  %v2613 = vsel %vm2588, %v2548, %v1631
  %v2614 = vsel %vm2588, %v2549, %v1633
  %v2615 = vsel %vm2588, %v2550, %v1635
  %v2616 = vsel %vm2588, %v2551, %v1637
  %v2617 = vsel %vm2588, %v2552, %v1639
  %v2618 = vsel %vm2588, %v2553, %v1641
  %v2619 = vsel %vm2588, %v2554, %v1643
  %v2620 = vsel %vm2588, %v2555, %v1645
  %v2621 = vsel %vm2588, %v2556, %v1647
  %v2622 = vsel %vm2588, %v2557, %v1649
  %v2623 = vsel %vm2588, %v2558, %v1651
  %v2624 = vsel %vm2588, %v2559, %v1653
  %v2625 = vsel %vm2588, %v2560, %v1655
  %v2626 = vsel %vm2588, %v2561, %v1657
  %v2627 = vsel %vm2588, %v2562, %v1659
  %v2628 = vsel %vm2588, %v2563, %v1661
  %v2629 = vsel %vm2588, %v2564, %v1663
  %v2630 = vsel %vm2588, %v2565, %v1665
  %v2631 = vsel %vm2588, %v2566, %v1667
  %v2632 = vsel %vm2588, %v2567, %v1669
  %v2633 = vsel %vm2588, %v2568, %v1671
  %v2634 = vsel %vm2588, %v2569, %v1673
  %v2635 = vsel %vm2588, %v2570, %v1675
  %v2636 = vsel %vm2588, %v2571, %v1677
  %v2637 = vsel %vm2588, %v2572, %v1679
  %v2638 = vsel %vm2588, %v2573, %v1681
  %v2639 = vsel %vm2588, %v2574, %v1683
  %v2640 = vsel %vm2588, %v2575, %v1685
  %v2641 = vsel %vm2588, %v2576, %v1687
  %v2642 = vsel %vm2588, %v2577, %v1689
  %v2643 = vsel %vm2588, %v2578, %v1691
  %v2644 = vsel %vm2588, %v2579, %v1693
  %v2645 = vsel %vm2588, %v2580, %v1695
  %v2646 = vsel %vm2588, %v2581, %v1697
  %v2647 = vsel %vm2588, %v2582, %v1699
  %v2648 = vsel %vm2588, %v2583, %v1701
  %v2649 = vsel %vm2588, %v2584, %v1703
  %v2650 = vsel %vm2588, %v2585, %v1705
  %v2651 = vsel %vm2588, %v2586, %v1707
  %v2652 = vsel %vm2588, %v2587, %v1709
  %vm2653 = vcmask 195584
  %v2654 = vsel %vm2653, %v2589, %v1775
  %v2655 = vsel %vm2653, %v2590, %v1777
  %v2656 = vsel %vm2653, %v2591, %v1779
  %v2657 = vsel %vm2653, %v2592, %v1781
  %v2658 = vsel %vm2653, %v2593, %v1783
  %v2659 = vsel %vm2653, %v2594, %v1785
  %v2660 = vsel %vm2653, %v2595, %v1787
  %v2661 = vsel %vm2653, %v2596, %v1789
  %v2662 = vsel %vm2653, %v2597, %v1791
  %v2663 = vsel %vm2653, %v2598, %v1793
  %v2664 = vsel %vm2653, %v2599, %v1795
  %v2665 = vsel %vm2653, %v2600, %v1797
  %v2666 = vsel %vm2653, %v2601, %v1799
  %v2667 = vsel %vm2653, %v2602, %v1801
  %v2668 = vsel %vm2653, %v2603, %v1803
  %v2669 = vsel %vm2653, %v2604, %v1805
  %v2670 = vsel %vm2653, %v2605, %v1807
  %v2671 = vsel %vm2653, %v2606, %v1809
  %v2672 = vsel %vm2653, %v2607, %v1811
  %v2673 = vsel %vm2653, %v2608, %v1813
  %v2674 = vsel %vm2653, %v2609, %v1815
  %v2675 = vsel %vm2653, %v2610, %v1817
  %v2676 = vsel %vm2653, %v2611, %v1819
  %v2677 = vsel %vm2653, %v2612, %v1821
  %v2678 = vsel %vm2653, %v2613, %v1823
  %v2679 = vsel %vm2653, %v2614, %v1825
  %v2680 = vsel %vm2653, %v2615, %v1827
  %v2681 = vsel %vm2653, %v2616, %v1829
  %v2682 = vsel %vm2653, %v2617, %v1831
  %v2683 = vsel %vm2653, %v2618, %v1833
  %v2684 = vsel %vm2653, %v2619, %v1835
  %v2685 = vsel %vm2653, %v2620, %v1837
  %v2686 = vsel %vm2653, %v2621, %v1839
  %v2687 = vsel %vm2653, %v2622, %v1841
  %v2688 = vsel %vm2653, %v2623, %v1843
  %v2689 = vsel %vm2653, %v2624, %v1845
  %v2690 = vsel %vm2653, %v2625, %v1847
  %v2691 = vsel %vm2653, %v2626, %v1849
  %v2692 = vsel %vm2653, %v2627, %v1851
  %v2693 = vsel %vm2653, %v2628, %v1853
  %v2694 = vsel %vm2653, %v2629, %v1855
  %v2695 = vsel %vm2653, %v2630, %v1857
  %v2696 = vsel %vm2653, %v2631, %v1859
  %v2697 = vsel %vm2653, %v2632, %v1861
  %v2698 = vsel %vm2653, %v2633, %v1863
  %v2699 = vsel %vm2653, %v2634, %v1865
  %v2700 = vsel %vm2653, %v2635, %v1867
  %v2701 = vsel %vm2653, %v2636, %v1869
  %v2702 = vsel %vm2653, %v2637, %v1871
  %v2703 = vsel %vm2653, %v2638, %v1873
  %v2704 = vsel %vm2653, %v2639, %v1875
  %v2705 = vsel %vm2653, %v2640, %v1877
  %v2706 = vsel %vm2653, %v2641, %v1879
  %v2707 = vsel %vm2653, %v2642, %v1881
  %v2708 = vsel %vm2653, %v2643, %v1883
  %v2709 = vsel %vm2653, %v2644, %v1885
  %v2710 = vsel %vm2653, %v2645, %v1887
  %v2711 = vsel %vm2653, %v2646, %v1889
  %v2712 = vsel %vm2653, %v2647, %v1891
  %v2713 = vsel %vm2653, %v2648, %v1893
  %v2714 = vsel %vm2653, %v2649, %v1895
  %v2715 = vsel %vm2653, %v2650, %v1897
  %v2716 = vsel %vm2653, %v2651, %v1835
  %v2717 = vsel %vm2653, %v2652, %v1837
  %vm2718 = vcmask 228352
  %v2719 = vsel %vm2718, %v2654, %v1961
  %v2720 = vsel %vm2718, %v2655, %v1963
  %v2721 = vsel %vm2718, %v2656, %v1965
  %v2722 = vsel %vm2718, %v2657, %v1967
  %v2723 = vsel %vm2718, %v2658, %v1969
  %v2724 = vsel %vm2718, %v2659, %v1971
  %v2725 = vsel %vm2718, %v2660, %v1973
  %v2726 = vsel %vm2718, %v2661, %v1975
  %v2727 = vsel %vm2718, %v2662, %v1977
  %v2728 = vsel %vm2718, %v2663, %v1979
  %v2729 = vsel %vm2718, %v2664, %v1981
  %v2730 = vsel %vm2718, %v2665, %v1983
  %v2731 = vsel %vm2718, %v2666, %v1985
  %v2732 = vsel %vm2718, %v2667, %v1987
  %v2733 = vsel %vm2718, %v2668, %v1989
  %v2734 = vsel %vm2718, %v2669, %v1991
  %v2735 = vsel %vm2718, %v2670, %v1993
  %v2736 = vsel %vm2718, %v2671, %v1995
  %v2737 = vsel %vm2718, %v2672, %v1997
  %v2738 = vsel %vm2718, %v2673, %v1999
  %v2739 = vsel %vm2718, %v2674, %v2001
  %v2740 = vsel %vm2718, %v2675, %v2003
  %v2741 = vsel %vm2718, %v2676, %v2005
  %v2742 = vsel %vm2718, %v2677, %v2007
  %v2743 = vsel %vm2718, %v2678, %v2009
  %v2744 = vsel %vm2718, %v2679, %v2011
  %v2745 = vsel %vm2718, %v2680, %v2013
  %v2746 = vsel %vm2718, %v2681, %v2015
  %v2747 = vsel %vm2718, %v2682, %v2017
  %v2748 = vsel %vm2718, %v2683, %v2019
  %v2749 = vsel %vm2718, %v2684, %v2021
  %v2750 = vsel %vm2718, %v2685, %v2023
  %v2751 = vsel %vm2718, %v2686, %v2025
  %v2752 = vsel %vm2718, %v2687, %v2027
  %v2753 = vsel %vm2718, %v2688, %v2029
  %v2754 = vsel %vm2718, %v2689, %v2031
  %v2755 = vsel %vm2718, %v2690, %v2033
  %v2756 = vsel %vm2718, %v2691, %v2035
  %v2757 = vsel %vm2718, %v2692, %v2037
  %v2758 = vsel %vm2718, %v2693, %v2039
  %v2759 = vsel %vm2718, %v2694, %v2041
  %v2760 = vsel %vm2718, %v2695, %v2043
  %v2761 = vsel %vm2718, %v2696, %v2045
  %v2762 = vsel %vm2718, %v2697, %v2047
  %v2763 = vsel %vm2718, %v2698, %v2049
  %v2764 = vsel %vm2718, %v2699, %v2051
  %v2765 = vsel %vm2718, %v2700, %v2053
  %v2766 = vsel %vm2718, %v2701, %v2055
  %v2767 = vsel %vm2718, %v2702, %v2057
  %v2768 = vsel %vm2718, %v2703, %v2059
  %v2769 = vsel %vm2718, %v2704, %v2061
  %v2770 = vsel %vm2718, %v2705, %v2063
  %v2771 = vsel %vm2718, %v2706, %v2065
  %v2772 = vsel %vm2718, %v2707, %v2067
  %v2773 = vsel %vm2718, %v2708, %v2069
  %v2774 = vsel %vm2718, %v2709, %v2071
  %v2775 = vsel %vm2718, %v2710, %v2073
  %v2776 = vsel %vm2718, %v2711, %v2075
  %v2777 = vsel %vm2718, %v2712, %v2077
  %v2778 = vsel %vm2718, %v2713, %v2079
  %v2779 = vsel %vm2718, %v2714, %v2081
  %v2780 = vsel %vm2718, %v2715, %v2083
  %v2781 = vsel %vm2718, %v2716, %v2021
  %v2782 = vsel %vm2718, %v2717, %v2023
  %vm2783 = vcmask 261120
  %v2784 = vsel %vm2783, %v2719, %v2147
  %v2785 = vsel %vm2783, %v2720, %v2149
  %v2786 = vsel %vm2783, %v2721, %v2151
  %v2787 = vsel %vm2783, %v2722, %v2153
  %v2788 = vsel %vm2783, %v2723, %v2155
  %v2789 = vsel %vm2783, %v2724, %v2157
  %v2790 = vsel %vm2783, %v2725, %v2159
  %v2791 = vsel %vm2783, %v2726, %v2161
  %v2792 = vsel %vm2783, %v2727, %v2163
  %v2793 = vsel %vm2783, %v2728, %v2165
  %v2794 = vsel %vm2783, %v2729, %v2167
  %v2795 = vsel %vm2783, %v2730, %v2169
  %v2796 = vsel %vm2783, %v2731, %v2171
  %v2797 = vsel %vm2783, %v2732, %v2173
  %v2798 = vsel %vm2783, %v2733, %v2175
  %v2799 = vsel %vm2783, %v2734, %v2177
  %v2800 = vsel %vm2783, %v2735, %v2179
  %v2801 = vsel %vm2783, %v2736, %v2181
  %v2802 = vsel %vm2783, %v2737, %v2183
  %v2803 = vsel %vm2783, %v2738, %v2185
  %v2804 = vsel %vm2783, %v2739, %v2187
  %v2805 = vsel %vm2783, %v2740, %v2189
  %v2806 = vsel %vm2783, %v2741, %v2191
  %v2807 = vsel %vm2783, %v2742, %v2193
  %v2808 = vsel %vm2783, %v2743, %v2195
  %v2809 = vsel %vm2783, %v2744, %v2197
  %v2810 = vsel %vm2783, %v2745, %v2199
  %v2811 = vsel %vm2783, %v2746, %v2201
  %v2812 = vsel %vm2783, %v2747, %v2203
  %v2813 = vsel %vm2783, %v2748, %v2205
  %v2814 = vsel %vm2783, %v2749, %v2207
  %v2815 = vsel %vm2783, %v2750, %v2209
  %v2816 = vsel %vm2783, %v2751, %v2211
  %v2817 = vsel %vm2783, %v2752, %v2213
  %v2818 = vsel %vm2783, %v2753, %v2215
  %v2819 = vsel %vm2783, %v2754, %v2217
  %v2820 = vsel %vm2783, %v2755, %v2219
  %v2821 = vsel %vm2783, %v2756, %v2221
  %v2822 = vsel %vm2783, %v2757, %v2223
  %v2823 = vsel %vm2783, %v2758, %v2225
  %v2824 = vsel %vm2783, %v2759, %v2227
  %v2825 = vsel %vm2783, %v2760, %v2229
  %v2826 = vsel %vm2783, %v2761, %v2231
  %v2827 = vsel %vm2783, %v2762, %v2233
  %v2828 = vsel %vm2783, %v2763, %v2235
  %v2829 = vsel %vm2783, %v2764, %v2237
  %v2830 = vsel %vm2783, %v2765, %v2239
  %v2831 = vsel %vm2783, %v2766, %v2241
  %v2832 = vsel %vm2783, %v2767, %v2243
  %v2833 = vsel %vm2783, %v2768, %v2245
  %v2834 = vsel %vm2783, %v2769, %v2247
  %v2835 = vsel %vm2783, %v2770, %v2249
  %v2836 = vsel %vm2783, %v2771, %v2251
  %v2837 = vsel %vm2783, %v2772, %v2253
  %v2838 = vsel %vm2783, %v2773, %v2255
  %v2839 = vsel %vm2783, %v2774, %v2257
  %v2840 = vsel %vm2783, %v2775, %v2259
  %v2841 = vsel %vm2783, %v2776, %v2261
  %v2842 = vsel %vm2783, %v2777, %v2263
  %v2843 = vsel %vm2783, %v2778, %v2265
  %v2844 = vsel %vm2783, %v2779, %v2267
  %v2845 = vsel %vm2783, %v2780, %v2269
  %v2846 = vsel %vm2783, %v2781, %v2207
  %v2847 = vsel %vm2783, %v2782, %v2209
  %v2848 = vld [vmem:[%s1] sm:$0xff]
  %v2849 = vld [vmem:[%s1 + $0x8] sm:$0xff]
  %v2850 = vld [vmem:[%s1 + $0x10] sm:$0xff]
  %v2851 = vld [vmem:[%s1 + $0x18] sm:$0xff]
  %v2852 = vld [vmem:[%s1 + $0x20] sm:$0xf]
  %v2853 = vld [vmem:[%s2] sm:$0x1]
  %v2855 = vlaneseq
  %v2856 = vshrl.u32 %v2855, 7
  %v2857 = vsub.s32 0, %v2856
  %v2858 = vrot.slane %v2853, %v2857
  %vm2860 = vcmask 293888
  %v2862 = vsel %vm2860, %v2784, 0
  %v2865 = vsel %vm2860, %v2785, 0
  %v2868 = vsel %vm2860, %v2786, 0
  %v2871 = vsel %vm2860, %v2787, 0
  %v2874 = vsel %vm2860, %v2788, 0
  %v2877 = vsel %vm2860, %v2789, 0
  %v2880 = vsel %vm2860, %v2790, 0
  %v2883 = vsel %vm2860, %v2791, 0
  %v2886 = vsel %vm2860, %v2792, 0
  %v2889 = vsel %vm2860, %v2793, 0
  %v2892 = vsel %vm2860, %v2794, 0
  %v2895 = vsel %vm2860, %v2795, 0
  %v2898 = vsel %vm2860, %v2796, 0
  %v2901 = vsel %vm2860, %v2797, 0
  %v2904 = vsel %vm2860, %v2798, 0
  %v2907 = vsel %vm2860, %v2799, 0
  %v2910 = vsel %vm2860, %v2800, 0
  %v2913 = vsel %vm2860, %v2801, 0
  %v2916 = vsel %vm2860, %v2802, 0
  %v2919 = vsel %vm2860, %v2803, 0
  %v2922 = vsel %vm2860, %v2804, 0
  %v2925 = vsel %vm2860, %v2805, 0
  %v2928 = vsel %vm2860, %v2806, 0
  %v2931 = vsel %vm2860, %v2807, 0
  %v2934 = vsel %vm2860, %v2808, 0
  %v2937 = vsel %vm2860, %v2809, 0
  %v2940 = vsel %vm2860, %v2810, 0
  %v2943 = vsel %vm2860, %v2811, 0
  %v2946 = vsel %vm2860, %v2812, 0
  %v2949 = vsel %vm2860, %v2813, 0
  %v2952 = vsel %vm2860, %v2814, 0
  %v2955 = vsel %vm2860, %v2815, 0
  %v2958 = vsel %vm2860, %v2816, 0
  %v2961 = vsel %vm2860, %v2817, 0
  %v2964 = vsel %vm2860, %v2818, 0
  %v2967 = vsel %vm2860, %v2819, 0
  %v2970 = vsel %vm2860, %v2820, 0
  %v2973 = vsel %vm2860, %v2821, 0
  %v2976 = vsel %vm2860, %v2822, 0
  %v2979 = vsel %vm2860, %v2823, 0
  %v2982 = vsel %vm2860, %v2824, 0
  %v2985 = vsel %vm2860, %v2825, 0
  %v2988 = vsel %vm2860, %v2826, 0
  %v2991 = vsel %vm2860, %v2827, 0
  %v2994 = vsel %vm2860, %v2828, 0
  %v2997 = vsel %vm2860, %v2829, 0
  %v3000 = vsel %vm2860, %v2830, 0
  %v3003 = vsel %vm2860, %v2831, 0
  %v3006 = vsel %vm2860, %v2832, 0
  %v3009 = vsel %vm2860, %v2833, 0
  %v3012 = vsel %vm2860, %v2834, 0
  %v3015 = vsel %vm2860, %v2835, 0
  %v3018 = vsel %vm2860, %v2836, 0
  %v3021 = vsel %vm2860, %v2837, 0
  %v3024 = vsel %vm2860, %v2838, 0
  %v3027 = vsel %vm2860, %v2839, 0
  %v3030 = vsel %vm2860, %v2840, 0
  %v3033 = vsel %vm2860, %v2841, 0
  %v3036 = vsel %vm2860, %v2842, 0
  %v3039 = vsel %vm2860, %v2843, 0
  %v3042 = vsel %vm2860, %v2844, 0
  %v3045 = vsel %vm2860, %v2845, 0
  %v3048 = vsel %vm2860, %v2846, 0
  %v3051 = vsel %vm2860, %v2847, 0
  %vm3053 = vcmask 1043456
  %v3055 = vsel %vm3053, %v2852, 0
  %3057 = vmatprep.subr.mxu0 0.0
  %3058 = vmatpush1.msra.mxu0 %v2848
  %3059 = vmatprep.subr.mxu0 0.0
  %3060 = vmatpush1.msra.mxu0 %v2849
  %3061 = vmatprep.subr.mxu0 0.0
  %3062 = vmatpush1.msra.mxu0 %v2850
  %3063 = vmatprep.subr.mxu0 0.0
  %3064 = vmatpush1.msra.mxu0 %v2851
  %3065 = vmatprep.subr.mxu0 0.0
  %3066 = vmatpush1.msra.mxu0 %v3055
  %3067 = vmatprep.subr.mxu0 0.0
  %3068 = vmatpush1.msra.mxu0 0.0
  %3069 = vmatprep.subr.mxu0 0.0
  %3070 = vmatpush1.msra.mxu0 0.0
  %3071 = vmatprep.subr.mxu0 0.0
  %3072 = vmatpush1.msra.mxu0 0.0
  %3073 = vmatprep.subr.mxu0 0.0
  %3074 = vmatpush1.msra.mxu0 0.0
  %3075 = vmatprep.subr.mxu0 0.0
  %3076 = vmatpush1.msra.mxu0 0.0
  %3077 = vmatprep.subr.mxu0 0.0
  %3078 = vmatpush1.msra.mxu0 0.0
  %3079 = vmatprep.subr.mxu0 0.0
  %3080 = vmatpush1.msra.mxu0 0.0
  %3081 = vmatprep.subr.mxu0 0.0
  %3082 = vmatpush1.msra.mxu0 0.0
  %3083 = vmatprep.subr.mxu0 0.0
  %3084 = vmatpush1.msra.mxu0 0.0
  %3085 = vmatprep.subr.mxu0 0.0
  %3086 = vmatpush1.msra.mxu0 0.0
  %3087 = vmatprep.subr.mxu0 0.0
  %3088 = vmatpush1.msra.mxu0 0.0
  %3089 = vmatprep.subr.mxu0 0.0
  %3090 = vmatpush1.msra.mxu0 0.0
  %3091 = vmatprep.subr.mxu0 0.0
  %3092 = vmatpush1.msra.mxu0 0.0
  %3093 = vmatprep.subr.mxu0 0.0
  %3094 = vmatpush1.msra.mxu0 0.0
  %3095 = vmatprep.subr.mxu0 0.0
  %3096 = vmatpush1.msra.mxu0 0.0
  %3097 = vmatprep.subr.mxu0 0.0
  %3098 = vmatpush1.msra.mxu0 0.0
  %3099 = vmatprep.subr.mxu0 0.0
  %3100 = vmatpush1.msra.mxu0 0.0
  %3101 = vmatprep.subr.mxu0 0.0
  %3102 = vmatpush1.msra.mxu0 0.0
  %3103 = vmatprep.subr.mxu0 0.0
  %3104 = vmatpush1.msra.mxu0 0.0
  %3105 = vmatprep.subr.mxu0 0.0
  %3106 = vmatpush1.msra.mxu0 0.0
  %3107 = vmatprep.subr.mxu0 0.0
  %3108 = vmatpush1.msra.mxu0 0.0
  %3109 = vmatprep.subr.mxu0 0.0
  %3110 = vmatpush1.msra.mxu0 0.0
  %3111 = vmatprep.subr.mxu0 0.0
  %3112 = vmatpush1.msra.mxu0 0.0
  %3113 = vmatprep.subr.mxu0 0.0
  %3114 = vmatpush1.msra.mxu0 0.0
  %3115 = vmatprep.subr.mxu0 0.0
  %3116 = vmatpush1.msra.mxu0 0.0
  %3117 = vmatprep.subr.mxu0 0.0
  %3118 = vmatpush1.msra.mxu0 0.0
  %3119 = vmatprep.subr.mxu0 0.0
  %3120 = vmatpush1.msra.mxu0 0.0
  %3121 = vmatprep.mubr.f32.mxu0 0.0
  %3122 = vmatmul.mubr.f32.gmra.mrb[0].mxu0 %v2862
  %v3123 = vpop.f32.mrb[0].mxu0
  %v3124 = vadd.f32 %v2858, %v3123
  %v3125 = vpop.f32.mrb[0].mxu0
  %3126 = vmatprep.mubr.f32.mxu0 0.0
  %3127 = vmatmul.mubr.f32.gmra.mrb[0].mxu0 %v2865
  %v3128 = vpop.f32.mrb[0].mxu0
  %v3129 = vadd.f32 %v2858, %v3128
  %v3130 = vpop.f32.mrb[0].mxu0
  %3131 = vmatprep.mubr.f32.mxu0 0.0
  %3132 = vmatmul.mubr.f32.gmra.mrb[0].mxu0 %v2868
  %v3133 = vpop.f32.mrb[0].mxu0
  %v3134 = vadd.f32 %v2858, %v3133
  %v3135 = vpop.f32.mrb[0].mxu0
  %3136 = vmatprep.mubr.f32.mxu0 0.0
  %3137 = vmatmul.mubr.f32.gmra.mrb[0].mxu0 %v2871
  %v3138 = vpop.f32.mrb[0].mxu0
  %v3139 = vadd.f32 %v2858, %v3138
  %v3140 = vpop.f32.mrb[0].mxu0
  %3141 = vmatprep.mubr.f32.mxu0 0.0
  %3142 = vmatmul.mubr.f32.gmra.mrb[0].mxu0 %v2874
  %v3143 = vpop.f32.mrb[0].mxu0
  %v3144 = vadd.f32 %v2858, %v3143
  %v3145 = vpop.f32.mrb[0].mxu0
  %3146 = vmatprep.mubr.f32.mxu0 0.0
  %3147 = vmatmul.mubr.f32.gmra.mrb[0].mxu0 %v2877
  %v3148 = vpop.f32.mrb[0].mxu0
  %v3149 = vadd.f32 %v2858, %v3148
  %v3150 = vpop.f32.mrb[0].mxu0
  %3151 = vmatprep.mubr.f32.mxu0 0.0
  %3152 = vmatmul.mubr.f32.gmra.mrb[0].mxu0 %v2880
  %v3153 = vpop.f32.mrb[0].mxu0
  %v3154 = vadd.f32 %v2858, %v3153
  %v3155 = vpop.f32.mrb[0].mxu0
  %3156 = vmatprep.mubr.f32.mxu0 0.0
  %3157 = vmatmul.mubr.f32.gmra.mrb[0].mxu0 %v2883
  %v3158 = vpop.f32.mrb[0].mxu0
  %v3159 = vadd.f32 %v2858, %v3158
  %v3160 = vpop.f32.mrb[0].mxu0
  %3161 = vmatprep.mubr.f32.mxu0 0.0
  %3162 = vmatmul.mubr.f32.gmra.mrb[0].mxu0 %v2886
  %v3163 = vpop.f32.mrb[0].mxu0
  %v3164 = vadd.f32 %v2858, %v3163
  %v3165 = vpop.f32.mrb[0].mxu0
  %3166 = vmatprep.mubr.f32.mxu0 0.0
  %3167 = vmatmul.mubr.f32.gmra.mrb[0].mxu0 %v2889
  %v3168 = vpop.f32.mrb[0].mxu0
  %v3169 = vadd.f32 %v2858, %v3168
  %v3170 = vpop.f32.mrb[0].mxu0
  %3171 = vmatprep.mubr.f32.mxu0 0.0
  %3172 = vmatmul.mubr.f32.gmra.mrb[0].mxu0 %v2892
  %v3173 = vpop.f32.mrb[0].mxu0
  %v3174 = vadd.f32 %v2858, %v3173
  %v3175 = vpop.f32.mrb[0].mxu0
  %3176 = vmatprep.mubr.f32.mxu0 0.0
  %3177 = vmatmul.mubr.f32.gmra.mrb[0].mxu0 %v2895
  %v3178 = vpop.f32.mrb[0].mxu0
  %v3179 = vadd.f32 %v2858, %v3178
  %v3180 = vpop.f32.mrb[0].mxu0
  %3181 = vmatprep.mubr.f32.mxu0 0.0
  %3182 = vmatmul.mubr.f32.gmra.mrb[0].mxu0 %v2898
  %v3183 = vpop.f32.mrb[0].mxu0
  %v3184 = vadd.f32 %v2858, %v3183
  %v3185 = vpop.f32.mrb[0].mxu0
  %3186 = vmatprep.mubr.f32.mxu0 0.0
  %3187 = vmatmul.mubr.f32.gmra.mrb[0].mxu0 %v2901
  %v3188 = vpop.f32.mrb[0].mxu0
  %v3189 = vadd.f32 %v2858, %v3188
  %v3190 = vpop.f32.mrb[0].mxu0
  %3191 = vmatprep.mubr.f32.mxu0 0.0
  %3192 = vmatmul.mubr.f32.gmra.mrb[0].mxu0 %v2904
  %v3193 = vpop.f32.mrb[0].mxu0
  %v3194 = vadd.f32 %v2858, %v3193
  %v3195 = vpop.f32.mrb[0].mxu0
  %3196 = vmatprep.mubr.f32.mxu0 0.0
  %3197 = vmatmul.mubr.f32.gmra.mrb[0].mxu0 %v2907
  %v3198 = vpop.f32.mrb[0].mxu0
  %v3199 = vadd.f32 %v2858, %v3198
  %v3200 = vpop.f32.mrb[0].mxu0
  %3201 = vmatprep.mubr.f32.mxu0 0.0
  %3202 = vmatmul.mubr.f32.gmra.mrb[0].mxu0 %v2910
  %v3203 = vpop.f32.mrb[0].mxu0
  %v3204 = vadd.f32 %v2858, %v3203
  %v3205 = vpop.f32.mrb[0].mxu0
  %3206 = vmatprep.mubr.f32.mxu0 0.0
  %3207 = vmatmul.mubr.f32.gmra.mrb[0].mxu0 %v2913
  %v3208 = vpop.f32.mrb[0].mxu0
  %v3209 = vadd.f32 %v2858, %v3208
  %v3210 = vpop.f32.mrb[0].mxu0
  %3211 = vmatprep.mubr.f32.mxu0 0.0
  %3212 = vmatmul.mubr.f32.gmra.mrb[0].mxu0 %v2916
  %v3213 = vpop.f32.mrb[0].mxu0
  %v3214 = vadd.f32 %v2858, %v3213
  %v3215 = vpop.f32.mrb[0].mxu0
  %3216 = vmatprep.mubr.f32.mxu0 0.0
  %3217 = vmatmul.mubr.f32.gmra.mrb[0].mxu0 %v2919
  %v3218 = vpop.f32.mrb[0].mxu0
  %v3219 = vadd.f32 %v2858, %v3218
  %v3220 = vpop.f32.mrb[0].mxu0
  %3221 = vmatprep.mubr.f32.mxu0 0.0
  %3222 = vmatmul.mubr.f32.gmra.mrb[0].mxu0 %v2922
  %v3223 = vpop.f32.mrb[0].mxu0
  %v3224 = vadd.f32 %v2858, %v3223
  %v3225 = vpop.f32.mrb[0].mxu0
  %3226 = vmatprep.mubr.f32.mxu0 0.0
  %3227 = vmatmul.mubr.f32.gmra.mrb[0].mxu0 %v2925
  %v3228 = vpop.f32.mrb[0].mxu0
  %v3229 = vadd.f32 %v2858, %v3228
  %v3230 = vpop.f32.mrb[0].mxu0
  %3231 = vmatprep.mubr.f32.mxu0 0.0
  %3232 = vmatmul.mubr.f32.gmra.mrb[0].mxu0 %v2928
  %v3233 = vpop.f32.mrb[0].mxu0
  %v3234 = vadd.f32 %v2858, %v3233
  %v3235 = vpop.f32.mrb[0].mxu0
  %3236 = vmatprep.mubr.f32.mxu0 0.0
  %3237 = vmatmul.mubr.f32.gmra.mrb[0].mxu0 %v2931
  %v3238 = vpop.f32.mrb[0].mxu0
  %v3239 = vadd.f32 %v2858, %v3238
  %v3240 = vpop.f32.mrb[0].mxu0
  %3241 = vmatprep.mubr.f32.mxu0 0.0
  %3242 = vmatmul.mubr.f32.gmra.mrb[0].mxu0 %v2934
  %v3243 = vpop.f32.mrb[0].mxu0
  %v3244 = vadd.f32 %v2858, %v3243
  %v3245 = vpop.f32.mrb[0].mxu0
  %3246 = vmatprep.mubr.f32.mxu0 0.0
  %3247 = vmatmul.mubr.f32.gmra.mrb[0].mxu0 %v2937
  %v3248 = vpop.f32.mrb[0].mxu0
  %v3249 = vadd.f32 %v2858, %v3248
  %v3250 = vpop.f32.mrb[0].mxu0
  %3251 = vmatprep.mubr.f32.mxu0 0.0
  %3252 = vmatmul.mubr.f32.gmra.mrb[0].mxu0 %v2940
  %v3253 = vpop.f32.mrb[0].mxu0
  %v3254 = vadd.f32 %v2858, %v3253
  %v3255 = vpop.f32.mrb[0].mxu0
  %3256 = vmatprep.mubr.f32.mxu0 0.0
  %3257 = vmatmul.mubr.f32.gmra.mrb[0].mxu0 %v2943
  %v3258 = vpop.f32.mrb[0].mxu0
  %v3259 = vadd.f32 %v2858, %v3258
  %v3260 = vpop.f32.mrb[0].mxu0
  %3261 = vmatprep.mubr.f32.mxu0 0.0
  %3262 = vmatmul.mubr.f32.gmra.mrb[0].mxu0 %v2946
  %v3263 = vpop.f32.mrb[0].mxu0
  %v3264 = vadd.f32 %v2858, %v3263
  %v3265 = vpop.f32.mrb[0].mxu0
  %3266 = vmatprep.mubr.f32.mxu0 0.0
  %3267 = vmatmul.mubr.f32.gmra.mrb[0].mxu0 %v2949
  %v3268 = vpop.f32.mrb[0].mxu0
  %v3269 = vadd.f32 %v2858, %v3268
  %v3270 = vpop.f32.mrb[0].mxu0
  %3271 = vmatprep.mubr.f32.mxu0 0.0
  %3272 = vmatmul.mubr.f32.gmra.mrb[0].mxu0 %v2952
  %v3273 = vpop.f32.mrb[0].mxu0
  %v3274 = vadd.f32 %v2858, %v3273
  %v3275 = vpop.f32.mrb[0].mxu0
  %3276 = vmatprep.mubr.f32.mxu0 0.0
  %3277 = vmatmul.mubr.f32.gmra.mrb[0].mxu0 %v2955
  %v3278 = vpop.f32.mrb[0].mxu0
  %v3279 = vadd.f32 %v2858, %v3278
  %v3280 = vpop.f32.mrb[0].mxu0
  %3281 = vmatprep.mubr.f32.mxu0 0.0
  %3282 = vmatmul.mubr.f32.gmra.mrb[0].mxu0 %v2958
  %v3283 = vpop.f32.mrb[0].mxu0
  %v3284 = vadd.f32 %v2858, %v3283
  %v3285 = vpop.f32.mrb[0].mxu0
  %3286 = vmatprep.mubr.f32.mxu0 0.0
  %3287 = vmatmul.mubr.f32.gmra.mrb[0].mxu0 %v2961
  %v3288 = vpop.f32.mrb[0].mxu0
  %v3289 = vadd.f32 %v2858, %v3288
  %v3290 = vpop.f32.mrb[0].mxu0
  %3291 = vmatprep.mubr.f32.mxu0 0.0
  %3292 = vmatmul.mubr.f32.gmra.mrb[0].mxu0 %v2964
  %v3293 = vpop.f32.mrb[0].mxu0
  %v3294 = vadd.f32 %v2858, %v3293
  %v3295 = vpop.f32.mrb[0].mxu0
  %3296 = vmatprep.mubr.f32.mxu0 0.0
  %3297 = vmatmul.mubr.f32.gmra.mrb[0].mxu0 %v2967
  %v3298 = vpop.f32.mrb[0].mxu0
  %v3299 = vadd.f32 %v2858, %v3298
  %v3300 = vpop.f32.mrb[0].mxu0
  %3301 = vmatprep.mubr.f32.mxu0 0.0
  %3302 = vmatmul.mubr.f32.gmra.mrb[0].mxu0 %v2970
  %v3303 = vpop.f32.mrb[0].mxu0
  %v3304 = vadd.f32 %v2858, %v3303
  %v3305 = vpop.f32.mrb[0].mxu0
  %3306 = vmatprep.mubr.f32.mxu0 0.0
  %3307 = vmatmul.mubr.f32.gmra.mrb[0].mxu0 %v2973
  %v3308 = vpop.f32.mrb[0].mxu0
  %v3309 = vadd.f32 %v2858, %v3308
  %v3310 = vpop.f32.mrb[0].mxu0
  %3311 = vmatprep.mubr.f32.mxu0 0.0
  %3312 = vmatmul.mubr.f32.gmra.mrb[0].mxu0 %v2976
  %v3313 = vpop.f32.mrb[0].mxu0
  %v3314 = vadd.f32 %v2858, %v3313
  %v3315 = vpop.f32.mrb[0].mxu0
  %3316 = vmatprep.mubr.f32.mxu0 0.0
  %3317 = vmatmul.mubr.f32.gmra.mrb[0].mxu0 %v2979
  %v3318 = vpop.f32.mrb[0].mxu0
  %v3319 = vadd.f32 %v2858, %v3318
  %v3320 = vpop.f32.mrb[0].mxu0
  %3321 = vmatprep.mubr.f32.mxu0 0.0
  %3322 = vmatmul.mubr.f32.gmra.mrb[0].mxu0 %v2982
  %v3323 = vpop.f32.mrb[0].mxu0
  %v3324 = vadd.f32 %v2858, %v3323
  %v3325 = vpop.f32.mrb[0].mxu0
  %3326 = vmatprep.mubr.f32.mxu0 0.0
  %3327 = vmatmul.mubr.f32.gmra.mrb[0].mxu0 %v2985
  %v3328 = vpop.f32.mrb[0].mxu0
  %v3329 = vadd.f32 %v2858, %v3328
  %v3330 = vpop.f32.mrb[0].mxu0
  %3331 = vmatprep.mubr.f32.mxu0 0.0
  %3332 = vmatmul.mubr.f32.gmra.mrb[0].mxu0 %v2988
  %v3333 = vpop.f32.mrb[0].mxu0
  %v3334 = vadd.f32 %v2858, %v3333
  %v3335 = vpop.f32.mrb[0].mxu0
  %3336 = vmatprep.mubr.f32.mxu0 0.0
  %3337 = vmatmul.mubr.f32.gmra.mrb[0].mxu0 %v2991
  %v3338 = vpop.f32.mrb[0].mxu0
  %v3339 = vadd.f32 %v2858, %v3338
  %v3340 = vpop.f32.mrb[0].mxu0
  %3341 = vmatprep.mubr.f32.mxu0 0.0
  %3342 = vmatmul.mubr.f32.gmra.mrb[0].mxu0 %v2994
  %v3343 = vpop.f32.mrb[0].mxu0
  %v3344 = vadd.f32 %v2858, %v3343
  %v3345 = vpop.f32.mrb[0].mxu0
  %3346 = vmatprep.mubr.f32.mxu0 0.0
  %3347 = vmatmul.mubr.f32.gmra.mrb[0].mxu0 %v2997
  %v3348 = vpop.f32.mrb[0].mxu0
  %v3349 = vadd.f32 %v2858, %v3348
  %v3350 = vpop.f32.mrb[0].mxu0
  %3351 = vmatprep.mubr.f32.mxu0 0.0
  %3352 = vmatmul.mubr.f32.gmra.mrb[0].mxu0 %v3000
  %v3353 = vpop.f32.mrb[0].mxu0
  %v3354 = vadd.f32 %v2858, %v3353
  %v3355 = vpop.f32.mrb[0].mxu0
  %3356 = vmatprep.mubr.f32.mxu0 0.0
  %3357 = vmatmul.mubr.f32.gmra.mrb[0].mxu0 %v3003
  %v3358 = vpop.f32.mrb[0].mxu0
  %v3359 = vadd.f32 %v2858, %v3358
  %v3360 = vpop.f32.mrb[0].mxu0
  %3361 = vmatprep.mubr.f32.mxu0 0.0
  %3362 = vmatmul.mubr.f32.gmra.mrb[0].mxu0 %v3006
  %v3363 = vpop.f32.mrb[0].mxu0
  %v3364 = vadd.f32 %v2858, %v3363
  %v3365 = vpop.f32.mrb[0].mxu0
  %3366 = vmatprep.mubr.f32.mxu0 0.0
  %3367 = vmatmul.mubr.f32.gmra.mrb[0].mxu0 %v3009
  %v3368 = vpop.f32.mrb[0].mxu0
  %v3369 = vadd.f32 %v2858, %v3368
  %v3370 = vpop.f32.mrb[0].mxu0
  %3371 = vmatprep.mubr.f32.mxu0 0.0
  %3372 = vmatmul.mubr.f32.gmra.mrb[0].mxu0 %v3012
  %v3373 = vpop.f32.mrb[0].mxu0
  %v3374 = vadd.f32 %v2858, %v3373
  %v3375 = vpop.f32.mrb[0].mxu0
  %3376 = vmatprep.mubr.f32.mxu0 0.0
  %3377 = vmatmul.mubr.f32.gmra.mrb[0].mxu0 %v3015
  %v3378 = vpop.f32.mrb[0].mxu0
  %v3379 = vadd.f32 %v2858, %v3378
  %v3380 = vpop.f32.mrb[0].mxu0
  %3381 = vmatprep.mubr.f32.mxu0 0.0
  %3382 = vmatmul.mubr.f32.gmra.mrb[0].mxu0 %v3018
  %v3383 = vpop.f32.mrb[0].mxu0
  %v3384 = vadd.f32 %v2858, %v3383
  %v3385 = vpop.f32.mrb[0].mxu0
  %3386 = vmatprep.mubr.f32.mxu0 0.0
  %3387 = vmatmul.mubr.f32.gmra.mrb[0].mxu0 %v3021
  %v3388 = vpop.f32.mrb[0].mxu0
  %v3389 = vadd.f32 %v2858, %v3388
  %v3390 = vpop.f32.mrb[0].mxu0
  %3391 = vmatprep.mubr.f32.mxu0 0.0
  %3392 = vmatmul.mubr.f32.gmra.mrb[0].mxu0 %v3024
  %v3393 = vpop.f32.mrb[0].mxu0
  %v3394 = vadd.f32 %v2858, %v3393
  %v3395 = vpop.f32.mrb[0].mxu0
  %3396 = vmatprep.mubr.f32.mxu0 0.0
  %3397 = vmatmul.mubr.f32.gmra.mrb[0].mxu0 %v3027
  %v3398 = vpop.f32.mrb[0].mxu0
  %v3399 = vadd.f32 %v2858, %v3398
  %v3400 = vpop.f32.mrb[0].mxu0
  %3401 = vmatprep.mubr.f32.mxu0 0.0
  %3402 = vmatmul.mubr.f32.gmra.mrb[0].mxu0 %v3030
  %v3403 = vpop.f32.mrb[0].mxu0
  %v3404 = vadd.f32 %v2858, %v3403
  %v3405 = vpop.f32.mrb[0].mxu0
  %3406 = vmatprep.mubr.f32.mxu0 0.0
  %3407 = vmatmul.mubr.f32.gmra.mrb[0].mxu0 %v3033
  %v3408 = vpop.f32.mrb[0].mxu0
  %v3409 = vadd.f32 %v2858, %v3408
  %v3410 = vpop.f32.mrb[0].mxu0
  %3411 = vmatprep.mubr.f32.mxu0 0.0
  %3412 = vmatmul.mubr.f32.gmra.mrb[0].mxu0 %v3036
  %v3413 = vpop.f32.mrb[0].mxu0
  %v3414 = vadd.f32 %v2858, %v3413
  %v3415 = vpop.f32.mrb[0].mxu0
  %3416 = vmatprep.mubr.f32.mxu0 0.0
  %3417 = vmatmul.mubr.f32.gmra.mrb[0].mxu0 %v3039
  %v3418 = vpop.f32.mrb[0].mxu0
  %v3419 = vadd.f32 %v2858, %v3418
  %v3420 = vpop.f32.mrb[0].mxu0
  %3421 = vmatprep.mubr.f32.mxu0 0.0
  %3422 = vmatmul.mubr.f32.gmra.mrb[0].mxu0 %v3042
  %v3423 = vpop.f32.mrb[0].mxu0
  %v3424 = vadd.f32 %v2858, %v3423
  %v3425 = vpop.f32.mrb[0].mxu0
  %3426 = vmatprep.mubr.f32.mxu0 0.0
  %3427 = vmatmul.mubr.f32.gmra.mrb[0].mxu0 %v3045
  %v3428 = vpop.f32.mrb[0].mxu0
  %v3429 = vadd.f32 %v2858, %v3428
  %v3430 = vpop.f32.mrb[0].mxu0
  %3431 = vmatprep.mubr.f32.mxu0 0.0
  %3432 = vmatmul.mubr.f32.gmra.mrb[0].mxu0 %v3048
  %v3433 = vpop.f32.mrb[0].mxu0
  %v3434 = vadd.f32 %v2858, %v3433
  %v3435 = vpop.f32.mrb[0].mxu0
  %3436 = vmatprep.mubr.f32.mxu0 0.0
  %3437 = vmatmul.mubr.f32.gmra.mrb[0].mxu0 %v3051
  %v3438 = vpop.f32.mrb[0].mxu0
  %v3439 = vadd.f32 %v2858, %v3438
  %v3440 = vpop.f32.mrb[0].mxu0
  %3441 = vdwg.mxu0
  %v3442 = vmax.f32 %v3124, 0.0
  %v3443 = vmax.f32 %v3129, 0.0
  %v3444 = vmax.f32 %v3134, 0.0
  %v3445 = vmax.f32 %v3139, 0.0
  %v3446 = vmax.f32 %v3144, 0.0
  %v3447 = vmax.f32 %v3149, 0.0
  %v3448 = vmax.f32 %v3154, 0.0
  %v3449 = vmax.f32 %v3159, 0.0
  %v3450 = vmax.f32 %v3164, 0.0
  %v3451 = vmax.f32 %v3169, 0.0
  %v3452 = vmax.f32 %v3174, 0.0
  %v3453 = vmax.f32 %v3179, 0.0
  %v3454 = vmax.f32 %v3184, 0.0
  %v3455 = vmax.f32 %v3189, 0.0
  %v3456 = vmax.f32 %v3194, 0.0
  %v3457 = vmax.f32 %v3199, 0.0
  %v3458 = vmax.f32 %v3204, 0.0
  %v3459 = vmax.f32 %v3209, 0.0
  %v3460 = vmax.f32 %v3214, 0.0
  %v3461 = vmax.f32 %v3219, 0.0
  %v3462 = vmax.f32 %v3224, 0.0
  %v3463 = vmax.f32 %v3229, 0.0
  %v3464 = vmax.f32 %v3234, 0.0
  %v3465 = vmax.f32 %v3239, 0.0
  %v3466 = vmax.f32 %v3244, 0.0
  %v3467 = vmax.f32 %v3249, 0.0
  %v3468 = vmax.f32 %v3254, 0.0
  %v3469 = vmax.f32 %v3259, 0.0
  %v3470 = vmax.f32 %v3264, 0.0
  %v3471 = vmax.f32 %v3269, 0.0
  %v3472 = vmax.f32 %v3274, 0.0
  %v3473 = vmax.f32 %v3279, 0.0
  %v3474 = vmax.f32 %v3284, 0.0
  %v3475 = vmax.f32 %v3289, 0.0
  %v3476 = vmax.f32 %v3294, 0.0
  %v3477 = vmax.f32 %v3299, 0.0
  %v3478 = vmax.f32 %v3304, 0.0
  %v3479 = vmax.f32 %v3309, 0.0
  %v3480 = vmax.f32 %v3314, 0.0
  %v3481 = vmax.f32 %v3319, 0.0
  %v3482 = vmax.f32 %v3324, 0.0
  %v3483 = vmax.f32 %v3329, 0.0
  %v3484 = vmax.f32 %v3334, 0.0
  %v3485 = vmax.f32 %v3339, 0.0
  %v3486 = vmax.f32 %v3344, 0.0
  %v3487 = vmax.f32 %v3349, 0.0
  %v3488 = vmax.f32 %v3354, 0.0
  %v3489 = vmax.f32 %v3359, 0.0
  %v3490 = vmax.f32 %v3364, 0.0
  %v3491 = vmax.f32 %v3369, 0.0
  %v3492 = vmax.f32 %v3374, 0.0
  %v3493 = vmax.f32 %v3379, 0.0
  %v3494 = vmax.f32 %v3384, 0.0
  %v3495 = vmax.f32 %v3389, 0.0
  %v3496 = vmax.f32 %v3394, 0.0
  %v3497 = vmax.f32 %v3399, 0.0
  %v3498 = vmax.f32 %v3404, 0.0
  %v3499 = vmax.f32 %v3409, 0.0
  %v3500 = vmax.f32 %v3414, 0.0
  %v3501 = vmax.f32 %v3419, 0.0
  %v3502 = vmax.f32 %v3424, 0.0
  %v3503 = vmax.f32 %v3429, 0.0
  %v3504 = vmax.f32 %v3434, 0.0
  %v3505 = vmax.f32 %v3439, 0.0
  %v3570 = vrot.slane %v3442, 7
  %v3571 = vrot.slane %v3443, 7
  %v3572 = vsel %vm167, %v3570, %v3571
  %v3573 = vrot.slane %v3444, 7
  %v3574 = vrot.slane %v3445, 7
  %v3575 = vsel %vm167, %v3573, %v3574
  %v3576 = vrot.slane %v3446, 7
  %v3577 = vrot.slane %v3447, 7
  %v3578 = vsel %vm167, %v3576, %v3577
  %v3579 = vrot.slane %v3448, 7
  %v3580 = vrot.slane %v3449, 7
  %v3581 = vsel %vm167, %v3579, %v3580
  %v3582 = vrot.slane %v3450, 7
  %v3583 = vrot.slane %v3451, 7
  %v3584 = vsel %vm167, %v3582, %v3583
  %v3585 = vrot.slane %v3452, 7
  %v3586 = vrot.slane %v3453, 7
  %v3587 = vsel %vm167, %v3585, %v3586
  %v3588 = vrot.slane %v3454, 7
  %v3589 = vrot.slane %v3455, 7
  %v3590 = vsel %vm167, %v3588, %v3589
  %v3591 = vrot.slane %v3456, 7
  %v3592 = vrot.slane %v3457, 7
  %v3593 = vsel %vm167, %v3591, %v3592
  %v3594 = vrot.slane %v3458, 7
  %v3595 = vrot.slane %v3459, 7
  %v3596 = vsel %vm167, %v3594, %v3595
  %v3597 = vrot.slane %v3460, 7
  %v3598 = vrot.slane %v3461, 7
  %v3599 = vsel %vm167, %v3597, %v3598
  %v3600 = vrot.slane %v3462, 7
  %v3601 = vrot.slane %v3463, 7
  %v3602 = vsel %vm167, %v3600, %v3601
  %v3603 = vrot.slane %v3464, 7
  %v3604 = vrot.slane %v3465, 7
  %v3605 = vsel %vm167, %v3603, %v3604
  %v3606 = vrot.slane %v3466, 7
  %v3607 = vrot.slane %v3467, 7
  %v3608 = vsel %vm167, %v3606, %v3607
  %v3609 = vrot.slane %v3468, 7
  %v3610 = vrot.slane %v3469, 7
  %v3611 = vsel %vm167, %v3609, %v3610
  %v3612 = vrot.slane %v3470, 7
  %v3613 = vrot.slane %v3471, 7
  %v3614 = vsel %vm167, %v3612, %v3613
  %v3615 = vrot.slane %v3472, 7
  %v3616 = vrot.slane %v3473, 7
  %v3617 = vsel %vm167, %v3615, %v3616
  %v3618 = vrot.slane %v3474, 7
  %v3619 = vrot.slane %v3475, 7
  %v3620 = vsel %vm167, %v3618, %v3619
  %v3621 = vrot.slane %v3476, 7
  %v3622 = vrot.slane %v3477, 7
  %v3623 = vsel %vm167, %v3621, %v3622
  %v3624 = vrot.slane %v3478, 7
  %v3625 = vrot.slane %v3479, 7
  %v3626 = vsel %vm167, %v3624, %v3625
  %v3627 = vrot.slane %v3480, 7
  %v3628 = vrot.slane %v3481, 7
  %v3629 = vsel %vm167, %v3627, %v3628
  %v3630 = vrot.slane %v3482, 7
  %v3631 = vrot.slane %v3483, 7
  %v3632 = vsel %vm167, %v3630, %v3631
  %v3633 = vrot.slane %v3484, 7
  %v3634 = vrot.slane %v3485, 7
  %v3635 = vsel %vm167, %v3633, %v3634
  %v3636 = vrot.slane %v3486, 7
  %v3637 = vrot.slane %v3487, 7
  %v3638 = vsel %vm167, %v3636, %v3637
  %v3639 = vrot.slane %v3488, 7
  %v3640 = vrot.slane %v3489, 7
  %v3641 = vsel %vm167, %v3639, %v3640
  %v3642 = vrot.slane %v3490, 7
  %v3643 = vrot.slane %v3491, 7
  %v3644 = vsel %vm167, %v3642, %v3643
  %v3645 = vrot.slane %v3492, 7
  %v3646 = vrot.slane %v3493, 7
  %v3647 = vsel %vm167, %v3645, %v3646
  %v3648 = vrot.slane %v3494, 7
  %v3649 = vrot.slane %v3495, 7
  %v3650 = vsel %vm167, %v3648, %v3649
  %v3651 = vrot.slane %v3496, 7
  %v3652 = vrot.slane %v3497, 7
  %v3653 = vsel %vm167, %v3651, %v3652
  %v3654 = vrot.slane %v3498, 7
  %v3655 = vrot.slane %v3499, 7
  %v3656 = vsel %vm167, %v3654, %v3655
  %v3657 = vrot.slane %v3500, 7
  %v3658 = vrot.slane %v3501, 7
  %v3659 = vsel %vm167, %v3657, %v3658
  %v3660 = vrot.slane %v3502, 7
  %v3661 = vrot.slane %v3503, 7
  %v3662 = vsel %vm167, %v3660, %v3661
  %v3663 = vrot.slane %v3504, 7
  %v3664 = vrot.slane %v3505, 7
  %v3665 = vsel %vm167, %v3663, %v3664
  %v3760 = vsel %vm167, 0.0, %v3570
  %v3761 = vsel %vm167, 0.0, %v3573
  %v3762 = vsel %vm167, 0.0, %v3576
  %v3763 = vsel %vm167, 0.0, %v3579
  %v3764 = vsel %vm167, 0.0, %v3582
  %v3765 = vsel %vm167, 0.0, %v3585
  %v3766 = vsel %vm167, 0.0, %v3588
  %v3767 = vsel %vm167, 0.0, %v3591
  %v3768 = vsel %vm167, 0.0, %v3594
  %v3769 = vsel %vm167, 0.0, %v3597
  %v3770 = vsel %vm167, 0.0, %v3600
  %v3771 = vsel %vm167, 0.0, %v3603
  %v3772 = vsel %vm167, 0.0, %v3606
  %v3773 = vsel %vm167, 0.0, %v3609
  %v3774 = vsel %vm167, 0.0, %v3612
  %v3775 = vsel %vm167, 0.0, %v3615
  %v3776 = vsel %vm167, 0.0, %v3618
  %v3777 = vsel %vm167, 0.0, %v3621
  %v3778 = vsel %vm167, 0.0, %v3624
  %v3779 = vsel %vm167, 0.0, %v3627
  %v3780 = vsel %vm167, 0.0, %v3630
  %v3781 = vsel %vm167, 0.0, %v3633
  %v3782 = vsel %vm167, 0.0, %v3636
  %v3783 = vsel %vm167, 0.0, %v3639
  %v3784 = vsel %vm167, 0.0, %v3642
  %v3785 = vsel %vm167, 0.0, %v3645
  %v3786 = vsel %vm167, 0.0, %v3648
  %v3787 = vsel %vm167, 0.0, %v3651
  %v3788 = vsel %vm167, 0.0, %v3654
  %v3789 = vsel %vm167, 0.0, %v3657
  %v3790 = vsel %vm167, 0.0, %v3660
  %v3791 = vsel %vm167, 0.0, %v3663
  %v3792 = vsel %vm167, %v3571, 0.0
  %v3793 = vsel %vm167, %v3574, 0.0
  %v3794 = vsel %vm167, %v3577, 0.0
  %v3795 = vsel %vm167, %v3580, 0.0
  %v3796 = vsel %vm167, %v3583, 0.0
  %v3797 = vsel %vm167, %v3586, 0.0
  %v3798 = vsel %vm167, %v3589, 0.0
  %v3799 = vsel %vm167, %v3592, 0.0
  %v3800 = vsel %vm167, %v3595, 0.0
  %v3801 = vsel %vm167, %v3598, 0.0
  %v3802 = vsel %vm167, %v3601, 0.0
  %v3803 = vsel %vm167, %v3604, 0.0
  %v3804 = vsel %vm167, %v3607, 0.0
  %v3805 = vsel %vm167, %v3610, 0.0
  %v3806 = vsel %vm167, %v3613, 0.0
  %v3807 = vsel %vm167, %v3616, 0.0
  %v3808 = vsel %vm167, %v3619, 0.0
  %v3809 = vsel %vm167, %v3622, 0.0
  %v3810 = vsel %vm167, %v3625, 0.0
  %v3811 = vsel %vm167, %v3628, 0.0
  %v3812 = vsel %vm167, %v3631, 0.0
  %v3813 = vsel %vm167, %v3634, 0.0
  %v3814 = vsel %vm167, %v3637, 0.0
  %v3815 = vsel %vm167, %v3640, 0.0
  %v3816 = vsel %vm167, %v3643, 0.0
  %v3817 = vsel %vm167, %v3646, 0.0
  %v3818 = vsel %vm167, %v3649, 0.0
  %v3819 = vsel %vm167, %v3652, 0.0
  %v3820 = vsel %vm167, %v3655, 0.0
  %v3821 = vsel %vm167, %v3658, 0.0
  %v3822 = vsel %vm167, %v3661, 0.0
  %v3823 = vsel %vm167, %v3664, 0.0
  %v3884 = vrot.slane %v3760, 1
  %v3885 = vrot.slane %v3572, 1
  %v3886 = vsel %vm490, %v3884, %v3885
  %v3887 = vrot.slane %v3792, 1
  %v3888 = vsel %vm490, %v3885, %v3887
  %v3889 = vrot.slane %v3761, 1
  %v3890 = vrot.slane %v3575, 1
  %v3891 = vsel %vm490, %v3889, %v3890
  %v3892 = vrot.slane %v3793, 1
  %v3893 = vsel %vm490, %v3890, %v3892
  %v3894 = vrot.slane %v3762, 1
  %v3895 = vrot.slane %v3578, 1
  %v3896 = vsel %vm490, %v3894, %v3895
  %v3897 = vrot.slane %v3794, 1
  %v3898 = vsel %vm490, %v3895, %v3897
  %v3899 = vrot.slane %v3763, 1
  %v3900 = vrot.slane %v3581, 1
  %v3901 = vsel %vm490, %v3899, %v3900
  %v3902 = vrot.slane %v3795, 1
  %v3903 = vsel %vm490, %v3900, %v3902
  %v3904 = vrot.slane %v3764, 1
  %v3905 = vrot.slane %v3584, 1
  %v3906 = vsel %vm490, %v3904, %v3905
  %v3907 = vrot.slane %v3796, 1
  %v3908 = vsel %vm490, %v3905, %v3907
  %v3909 = vrot.slane %v3765, 1
  %v3910 = vrot.slane %v3587, 1
  %v3911 = vsel %vm490, %v3909, %v3910
  %v3912 = vrot.slane %v3797, 1
  %v3913 = vsel %vm490, %v3910, %v3912
  %v3914 = vrot.slane %v3766, 1
  %v3915 = vrot.slane %v3590, 1
  %v3916 = vsel %vm490, %v3914, %v3915
  %v3917 = vrot.slane %v3798, 1
  %v3918 = vsel %vm490, %v3915, %v3917
  %v3919 = vrot.slane %v3767, 1
  %v3920 = vrot.slane %v3593, 1
  %v3921 = vsel %vm490, %v3919, %v3920
  %v3922 = vrot.slane %v3799, 1
  %v3923 = vsel %vm490, %v3920, %v3922
  %v3924 = vrot.slane %v3768, 1
  %v3925 = vrot.slane %v3596, 1
  %v3926 = vsel %vm490, %v3924, %v3925
  %v3927 = vrot.slane %v3800, 1
  %v3928 = vsel %vm490, %v3925, %v3927
  %v3929 = vrot.slane %v3769, 1
  %v3930 = vrot.slane %v3599, 1
  %v3931 = vsel %vm490, %v3929, %v3930
  %v3932 = vrot.slane %v3801, 1
  %v3933 = vsel %vm490, %v3930, %v3932
  %v3934 = vrot.slane %v3770, 1
  %v3935 = vrot.slane %v3602, 1
  %v3936 = vsel %vm490, %v3934, %v3935
  %v3937 = vrot.slane %v3802, 1
  %v3938 = vsel %vm490, %v3935, %v3937
  %v3939 = vrot.slane %v3771, 1
  %v3940 = vrot.slane %v3605, 1
  %v3941 = vsel %vm490, %v3939, %v3940
  %v3942 = vrot.slane %v3803, 1
  %v3943 = vsel %vm490, %v3940, %v3942
  %v3944 = vrot.slane %v3772, 1
  %v3945 = vrot.slane %v3608, 1
  %v3946 = vsel %vm490, %v3944, %v3945
  %v3947 = vrot.slane %v3804, 1
  %v3948 = vsel %vm490, %v3945, %v3947
  %v3949 = vrot.slane %v3773, 1
  %v3950 = vrot.slane %v3611, 1
  %v3951 = vsel %vm490, %v3949, %v3950
  %v3952 = vrot.slane %v3805, 1
  %v3953 = vsel %vm490, %v3950, %v3952
  %v3954 = vrot.slane %v3774, 1
  %v3955 = vrot.slane %v3614, 1
  %v3956 = vsel %vm490, %v3954, %v3955
  %v3957 = vrot.slane %v3806, 1
  %v3958 = vsel %vm490, %v3955, %v3957
  %v3959 = vrot.slane %v3776, 1
  %v3960 = vrot.slane %v3620, 1
  %v3961 = vsel %vm490, %v3959, %v3960
  %v3962 = vrot.slane %v3808, 1
  %v3963 = vsel %vm490, %v3960, %v3962
  %v3964 = vrot.slane %v3777, 1
  %v3965 = vrot.slane %v3623, 1
  %v3966 = vsel %vm490, %v3964, %v3965
  %v3967 = vrot.slane %v3809, 1
  %v3968 = vsel %vm490, %v3965, %v3967
  %v3969 = vrot.slane %v3778, 1
  %v3970 = vrot.slane %v3626, 1
  %v3971 = vsel %vm490, %v3969, %v3970
  %v3972 = vrot.slane %v3810, 1
  %v3973 = vsel %vm490, %v3970, %v3972
  %v3974 = vrot.slane %v3779, 1
  %v3975 = vrot.slane %v3629, 1
  %v3976 = vsel %vm490, %v3974, %v3975
  %v3977 = vrot.slane %v3811, 1
  %v3978 = vsel %vm490, %v3975, %v3977
  %v3979 = vrot.slane %v3780, 1
  %v3980 = vrot.slane %v3632, 1
  %v3981 = vsel %vm490, %v3979, %v3980
  %v3982 = vrot.slane %v3812, 1
  %v3983 = vsel %vm490, %v3980, %v3982
  %v3984 = vrot.slane %v3781, 1
  %v3985 = vrot.slane %v3635, 1
  %v3986 = vsel %vm490, %v3984, %v3985
  %v3987 = vrot.slane %v3813, 1
  %v3988 = vsel %vm490, %v3985, %v3987
  %v3989 = vrot.slane %v3782, 1
  %v3990 = vrot.slane %v3638, 1
  %v3991 = vsel %vm490, %v3989, %v3990
  %v3992 = vrot.slane %v3814, 1
  %v3993 = vsel %vm490, %v3990, %v3992
  %v3994 = vrot.slane %v3783, 1
  %v3995 = vrot.slane %v3641, 1
  %v3996 = vsel %vm490, %v3994, %v3995
  %v3997 = vrot.slane %v3815, 1
  %v3998 = vsel %vm490, %v3995, %v3997
  %v3999 = vrot.slane %v3784, 1
  %v4000 = vrot.slane %v3644, 1
  %v4001 = vsel %vm490, %v3999, %v4000
  %v4002 = vrot.slane %v3816, 1
  %v4003 = vsel %vm490, %v4000, %v4002
  %v4004 = vrot.slane %v3785, 1
  %v4005 = vrot.slane %v3647, 1
  %v4006 = vsel %vm490, %v4004, %v4005
  %v4007 = vrot.slane %v3817, 1
  %v4008 = vsel %vm490, %v4005, %v4007
  %v4009 = vrot.slane %v3786, 1
  %v4010 = vrot.slane %v3650, 1
  %v4011 = vsel %vm490, %v4009, %v4010
  %v4012 = vrot.slane %v3818, 1
  %v4013 = vsel %vm490, %v4010, %v4012
  %v4014 = vrot.slane %v3787, 1
  %v4015 = vrot.slane %v3653, 1
  %v4016 = vsel %vm490, %v4014, %v4015
  %v4017 = vrot.slane %v3819, 1
  %v4018 = vsel %vm490, %v4015, %v4017
  %v4019 = vrot.slane %v3788, 1
  %v4020 = vrot.slane %v3656, 1
  %v4021 = vsel %vm490, %v4019, %v4020
  %v4022 = vrot.slane %v3820, 1
  %v4023 = vsel %vm490, %v4020, %v4022
  %v4024 = vrot.slane %v3789, 1
  %v4025 = vrot.slane %v3659, 1
  %v4026 = vsel %vm490, %v4024, %v4025
  %v4027 = vrot.slane %v3821, 1
  %v4028 = vsel %vm490, %v4025, %v4027
  %v4029 = vrot.slane %v3790, 1
  %v4030 = vrot.slane %v3662, 1
  %v4031 = vsel %vm490, %v4029, %v4030
  %v4032 = vrot.slane %v3822, 1
  %v4033 = vsel %vm490, %v4030, %v4032
  %4034 = vrot.lane.b32.xlu0 %v493, 8
  %v4035 = vpop.permute.xlu0 %4034
  %4036 = vrot.lane.b32.xlu0 %v495, 8
  %v4037 = vpop.permute.xlu0 %4036
  %4038 = vrot.lane.b32.xlu0 %v3886, 8
  %v4039 = vpop.permute.xlu0 %4038
  %4040 = vrot.lane.b32.xlu0 %v3888, 8
  %v4041 = vpop.permute.xlu0 %4040
  %4042 = vrot.lane.b32.xlu0 %v3891, 8
  %v4043 = vpop.permute.xlu0 %4042
  %4044 = vrot.lane.b32.xlu0 %v3893, 8
  %v4045 = vpop.permute.xlu0 %4044
  %4046 = vrot.lane.b32.xlu0 %v3896, 8
  %v4047 = vpop.permute.xlu0 %4046
  %4048 = vrot.lane.b32.xlu0 %v3898, 8
  %v4049 = vpop.permute.xlu0 %4048
  %4050 = vrot.lane.b32.xlu0 %v3901, 8
  %v4051 = vpop.permute.xlu0 %4050
  %4052 = vrot.lane.b32.xlu0 %v3903, 8
  %v4053 = vpop.permute.xlu0 %4052
  %4054 = vrot.lane.b32.xlu0 %v3906, 8
  %v4055 = vpop.permute.xlu0 %4054
  %4056 = vrot.lane.b32.xlu0 %v3908, 8
  %v4057 = vpop.permute.xlu0 %4056
  %4058 = vrot.lane.b32.xlu0 %v3911, 8
  %v4059 = vpop.permute.xlu0 %4058
  %4060 = vrot.lane.b32.xlu0 %v3913, 8
  %v4061 = vpop.permute.xlu0 %4060
  %4062 = vrot.lane.b32.xlu0 %v3916, 8
  %v4063 = vpop.permute.xlu0 %4062
  %4064 = vrot.lane.b32.xlu0 %v3918, 8
  %v4065 = vpop.permute.xlu0 %4064
  %4066 = vrot.lane.b32.xlu0 %v3921, 8
  %v4067 = vpop.permute.xlu0 %4066
  %4068 = vrot.lane.b32.xlu0 %v3923, 8
  %v4069 = vpop.permute.xlu0 %4068
  %4070 = vrot.lane.b32.xlu0 %v3926, 8
  %v4071 = vpop.permute.xlu0 %4070
  %4072 = vrot.lane.b32.xlu0 %v3928, 8
  %v4073 = vpop.permute.xlu0 %4072
  %4074 = vrot.lane.b32.xlu0 %v3931, 8
  %v4075 = vpop.permute.xlu0 %4074
  %4076 = vrot.lane.b32.xlu0 %v3933, 8
  %v4077 = vpop.permute.xlu0 %4076
  %4078 = vrot.lane.b32.xlu0 %v3936, 8
  %v4079 = vpop.permute.xlu0 %4078
  %4080 = vrot.lane.b32.xlu0 %v3938, 8
  %v4081 = vpop.permute.xlu0 %4080
  %4082 = vrot.lane.b32.xlu0 %v3941, 8
  %v4083 = vpop.permute.xlu0 %4082
  %4084 = vrot.lane.b32.xlu0 %v3943, 8
  %v4085 = vpop.permute.xlu0 %4084
  %4086 = vrot.lane.b32.xlu0 %v3946, 8
  %v4087 = vpop.permute.xlu0 %4086
  %4088 = vrot.lane.b32.xlu0 %v3948, 8
  %v4089 = vpop.permute.xlu0 %4088
  %4090 = vrot.lane.b32.xlu0 %v3951, 8
  %v4091 = vpop.permute.xlu0 %4090
  %4092 = vrot.lane.b32.xlu0 %v3953, 8
  %v4093 = vpop.permute.xlu0 %4092
  %4094 = vrot.lane.b32.xlu0 %v3956, 8
  %v4095 = vpop.permute.xlu0 %4094
  %4096 = vrot.lane.b32.xlu0 %v3958, 8
  %v4097 = vpop.permute.xlu0 %4096
  %4098 = vrot.lane.b32.xlu0 %v3961, 8
  %v4099 = vpop.permute.xlu0 %4098
  %4100 = vrot.lane.b32.xlu0 %v3963, 8
  %v4101 = vpop.permute.xlu0 %4100
  %4102 = vrot.lane.b32.xlu0 %v3966, 8
  %v4103 = vpop.permute.xlu0 %4102
  %4104 = vrot.lane.b32.xlu0 %v3968, 8
  %v4105 = vpop.permute.xlu0 %4104
  %4106 = vrot.lane.b32.xlu0 %v3971, 8
  %v4107 = vpop.permute.xlu0 %4106
  %4108 = vrot.lane.b32.xlu0 %v3973, 8
  %v4109 = vpop.permute.xlu0 %4108
  %4110 = vrot.lane.b32.xlu0 %v3976, 8
  %v4111 = vpop.permute.xlu0 %4110
  %4112 = vrot.lane.b32.xlu0 %v3978, 8
  %v4113 = vpop.permute.xlu0 %4112
  %4114 = vrot.lane.b32.xlu0 %v3981, 8
  %v4115 = vpop.permute.xlu0 %4114
  %4116 = vrot.lane.b32.xlu0 %v3983, 8
  %v4117 = vpop.permute.xlu0 %4116
  %4118 = vrot.lane.b32.xlu0 %v3986, 8
  %v4119 = vpop.permute.xlu0 %4118
  %4120 = vrot.lane.b32.xlu0 %v3988, 8
  %v4121 = vpop.permute.xlu0 %4120
  %4122 = vrot.lane.b32.xlu0 %v3991, 8
  %v4123 = vpop.permute.xlu0 %4122
  %4124 = vrot.lane.b32.xlu0 %v3993, 8
  %v4125 = vpop.permute.xlu0 %4124
  %4126 = vrot.lane.b32.xlu0 %v3996, 8
  %v4127 = vpop.permute.xlu0 %4126
  %4128 = vrot.lane.b32.xlu0 %v3998, 8
  %v4129 = vpop.permute.xlu0 %4128
  %4130 = vrot.lane.b32.xlu0 %v4001, 8
  %v4131 = vpop.permute.xlu0 %4130
  %4132 = vrot.lane.b32.xlu0 %v4003, 8
  %v4133 = vpop.permute.xlu0 %4132
  %4134 = vrot.lane.b32.xlu0 %v4006, 8
  %v4135 = vpop.permute.xlu0 %4134
  %4136 = vrot.lane.b32.xlu0 %v4008, 8
  %v4137 = vpop.permute.xlu0 %4136
  %4138 = vrot.lane.b32.xlu0 %v4011, 8
  %v4139 = vpop.permute.xlu0 %4138
  %4140 = vrot.lane.b32.xlu0 %v4013, 8
  %v4141 = vpop.permute.xlu0 %4140
  %4142 = vrot.lane.b32.xlu0 %v4016, 8
  %v4143 = vpop.permute.xlu0 %4142
  %4144 = vrot.lane.b32.xlu0 %v4018, 8
  %v4145 = vpop.permute.xlu0 %4144
  %4146 = vrot.lane.b32.xlu0 %v4021, 8
  %v4147 = vpop.permute.xlu0 %4146
  %4148 = vrot.lane.b32.xlu0 %v4023, 8
  %v4149 = vpop.permute.xlu0 %4148
  %4150 = vrot.lane.b32.xlu0 %v4026, 8
  %v4151 = vpop.permute.xlu0 %4150
  %4152 = vrot.lane.b32.xlu0 %v4028, 8
  %v4153 = vpop.permute.xlu0 %4152
  %4154 = vrot.lane.b32.xlu0 %v4031, 8
  %v4155 = vpop.permute.xlu0 %4154
  %4156 = vrot.lane.b32.xlu0 %v4033, 8
  %v4157 = vpop.permute.xlu0 %4156
  %v4220 = vrot.slane %v3760, 2
  %v4221 = vrot.slane %v3572, 2
  %v4222 = vsel %vm832, %v4220, %v4221
  %v4223 = vrot.slane %v3792, 2
  %v4224 = vsel %vm832, %v4221, %v4223
  %v4225 = vrot.slane %v3761, 2
  %v4226 = vrot.slane %v3575, 2
  %v4227 = vsel %vm832, %v4225, %v4226
  %v4228 = vrot.slane %v3793, 2
  %v4229 = vsel %vm832, %v4226, %v4228
  %v4230 = vrot.slane %v3762, 2
  %v4231 = vrot.slane %v3578, 2
  %v4232 = vsel %vm832, %v4230, %v4231
  %v4233 = vrot.slane %v3794, 2
  %v4234 = vsel %vm832, %v4231, %v4233
  %v4235 = vrot.slane %v3763, 2
  %v4236 = vrot.slane %v3581, 2
  %v4237 = vsel %vm832, %v4235, %v4236
  %v4238 = vrot.slane %v3795, 2
  %v4239 = vsel %vm832, %v4236, %v4238
  %v4240 = vrot.slane %v3764, 2
  %v4241 = vrot.slane %v3584, 2
  %v4242 = vsel %vm832, %v4240, %v4241
  %v4243 = vrot.slane %v3796, 2
  %v4244 = vsel %vm832, %v4241, %v4243
  %v4245 = vrot.slane %v3765, 2
  %v4246 = vrot.slane %v3587, 2
  %v4247 = vsel %vm832, %v4245, %v4246
  %v4248 = vrot.slane %v3797, 2
  %v4249 = vsel %vm832, %v4246, %v4248
  %v4250 = vrot.slane %v3766, 2
  %v4251 = vrot.slane %v3590, 2
  %v4252 = vsel %vm832, %v4250, %v4251
  %v4253 = vrot.slane %v3798, 2
  %v4254 = vsel %vm832, %v4251, %v4253
  %v4255 = vrot.slane %v3767, 2
  %v4256 = vrot.slane %v3593, 2
  %v4257 = vsel %vm832, %v4255, %v4256
  %v4258 = vrot.slane %v3799, 2
  %v4259 = vsel %vm832, %v4256, %v4258
  %v4260 = vrot.slane %v3768, 2
  %v4261 = vrot.slane %v3596, 2
  %v4262 = vsel %vm832, %v4260, %v4261
  %v4263 = vrot.slane %v3800, 2
  %v4264 = vsel %vm832, %v4261, %v4263
  %v4265 = vrot.slane %v3769, 2
  %v4266 = vrot.slane %v3599, 2
  %v4267 = vsel %vm832, %v4265, %v4266
  %v4268 = vrot.slane %v3801, 2
  %v4269 = vsel %vm832, %v4266, %v4268
  %v4270 = vrot.slane %v3770, 2
  %v4271 = vrot.slane %v3602, 2
  %v4272 = vsel %vm832, %v4270, %v4271
  %v4273 = vrot.slane %v3802, 2
  %v4274 = vsel %vm832, %v4271, %v4273
  %v4275 = vrot.slane %v3771, 2
  %v4276 = vrot.slane %v3605, 2
  %v4277 = vsel %vm832, %v4275, %v4276
  %v4278 = vrot.slane %v3803, 2
  %v4279 = vsel %vm832, %v4276, %v4278
  %v4280 = vrot.slane %v3772, 2
  %v4281 = vrot.slane %v3608, 2
  %v4282 = vsel %vm832, %v4280, %v4281
  %v4283 = vrot.slane %v3804, 2
  %v4284 = vsel %vm832, %v4281, %v4283
  %v4285 = vrot.slane %v3773, 2
  %v4286 = vrot.slane %v3611, 2
  %v4287 = vsel %vm832, %v4285, %v4286
  %v4288 = vrot.slane %v3805, 2
  %v4289 = vsel %vm832, %v4286, %v4288
  %v4290 = vrot.slane %v3774, 2
  %v4291 = vrot.slane %v3614, 2
  %v4292 = vsel %vm832, %v4290, %v4291
  %v4293 = vrot.slane %v3806, 2
  %v4294 = vsel %vm832, %v4291, %v4293
  %v4295 = vrot.slane %v3776, 2
  %v4296 = vrot.slane %v3620, 2
  %v4297 = vsel %vm832, %v4295, %v4296
  %v4298 = vrot.slane %v3808, 2
  %v4299 = vsel %vm832, %v4296, %v4298
  %v4300 = vrot.slane %v3777, 2
  %v4301 = vrot.slane %v3623, 2
  %v4302 = vsel %vm832, %v4300, %v4301
  %v4303 = vrot.slane %v3809, 2
  %v4304 = vsel %vm832, %v4301, %v4303
  %v4305 = vrot.slane %v3778, 2
  %v4306 = vrot.slane %v3626, 2
  %v4307 = vsel %vm832, %v4305, %v4306
  %v4308 = vrot.slane %v3810, 2
  %v4309 = vsel %vm832, %v4306, %v4308
  %v4310 = vrot.slane %v3779, 2
  %v4311 = vrot.slane %v3629, 2
  %v4312 = vsel %vm832, %v4310, %v4311
  %v4313 = vrot.slane %v3811, 2
  %v4314 = vsel %vm832, %v4311, %v4313
  %v4315 = vrot.slane %v3780, 2
  %v4316 = vrot.slane %v3632, 2
  %v4317 = vsel %vm832, %v4315, %v4316
  %v4318 = vrot.slane %v3812, 2
  %v4319 = vsel %vm832, %v4316, %v4318
  %v4320 = vrot.slane %v3781, 2
  %v4321 = vrot.slane %v3635, 2
  %v4322 = vsel %vm832, %v4320, %v4321
  %v4323 = vrot.slane %v3813, 2
  %v4324 = vsel %vm832, %v4321, %v4323
  %v4325 = vrot.slane %v3782, 2
  %v4326 = vrot.slane %v3638, 2
  %v4327 = vsel %vm832, %v4325, %v4326
  %v4328 = vrot.slane %v3814, 2
  %v4329 = vsel %vm832, %v4326, %v4328
  %v4330 = vrot.slane %v3783, 2
  %v4331 = vrot.slane %v3641, 2
  %v4332 = vsel %vm832, %v4330, %v4331
  %v4333 = vrot.slane %v3815, 2
  %v4334 = vsel %vm832, %v4331, %v4333
  %v4335 = vrot.slane %v3784, 2
  %v4336 = vrot.slane %v3644, 2
  %v4337 = vsel %vm832, %v4335, %v4336
  %v4338 = vrot.slane %v3816, 2
  %v4339 = vsel %vm832, %v4336, %v4338
  %v4340 = vrot.slane %v3785, 2
  %v4341 = vrot.slane %v3647, 2
  %v4342 = vsel %vm832, %v4340, %v4341
  %v4343 = vrot.slane %v3817, 2
  %v4344 = vsel %vm832, %v4341, %v4343
  %v4345 = vrot.slane %v3786, 2
  %v4346 = vrot.slane %v3650, 2
  %v4347 = vsel %vm832, %v4345, %v4346
  %v4348 = vrot.slane %v3818, 2
  %v4349 = vsel %vm832, %v4346, %v4348
  %v4350 = vrot.slane %v3787, 2
  %v4351 = vrot.slane %v3653, 2
  %v4352 = vsel %vm832, %v4350, %v4351
  %v4353 = vrot.slane %v3819, 2
  %v4354 = vsel %vm832, %v4351, %v4353
  %v4355 = vrot.slane %v3788, 2
  %v4356 = vrot.slane %v3656, 2
  %v4357 = vsel %vm832, %v4355, %v4356
  %v4358 = vrot.slane %v3820, 2
  %v4359 = vsel %vm832, %v4356, %v4358
  %v4360 = vrot.slane %v3789, 2
  %v4361 = vrot.slane %v3659, 2
  %v4362 = vsel %vm832, %v4360, %v4361
  %v4363 = vrot.slane %v3821, 2
  %v4364 = vsel %vm832, %v4361, %v4363
  %v4365 = vrot.slane %v3790, 2
  %v4366 = vrot.slane %v3662, 2
  %v4367 = vsel %vm832, %v4365, %v4366
  %v4368 = vrot.slane %v3822, 2
  %v4369 = vsel %vm832, %v4366, %v4368
  %4370 = vrot.lane.b32.xlu0 %v835, 16
  %v4371 = vpop.permute.xlu0 %4370
  %4372 = vrot.lane.b32.xlu0 %v837, 16
  %v4373 = vpop.permute.xlu0 %4372
  %4374 = vrot.lane.b32.xlu0 %v4222, 16
  %v4375 = vpop.permute.xlu0 %4374
  %4376 = vrot.lane.b32.xlu0 %v4224, 16
  %v4377 = vpop.permute.xlu0 %4376
  %4378 = vrot.lane.b32.xlu0 %v4227, 16
  %v4379 = vpop.permute.xlu0 %4378
  %4380 = vrot.lane.b32.xlu0 %v4229, 16
  %v4381 = vpop.permute.xlu0 %4380
  %4382 = vrot.lane.b32.xlu0 %v4232, 16
  %v4383 = vpop.permute.xlu0 %4382
  %4384 = vrot.lane.b32.xlu0 %v4234, 16
  %v4385 = vpop.permute.xlu0 %4384
  %4386 = vrot.lane.b32.xlu0 %v4237, 16
  %v4387 = vpop.permute.xlu0 %4386
  %4388 = vrot.lane.b32.xlu0 %v4239, 16
  %v4389 = vpop.permute.xlu0 %4388
  %4390 = vrot.lane.b32.xlu0 %v4242, 16
  %v4391 = vpop.permute.xlu0 %4390
  %4392 = vrot.lane.b32.xlu0 %v4244, 16
  %v4393 = vpop.permute.xlu0 %4392
  %4394 = vrot.lane.b32.xlu0 %v4247, 16
  %v4395 = vpop.permute.xlu0 %4394
  %4396 = vrot.lane.b32.xlu0 %v4249, 16
  %v4397 = vpop.permute.xlu0 %4396
  %4398 = vrot.lane.b32.xlu0 %v4252, 16
  %v4399 = vpop.permute.xlu0 %4398
  %4400 = vrot.lane.b32.xlu0 %v4254, 16
  %v4401 = vpop.permute.xlu0 %4400
  %4402 = vrot.lane.b32.xlu0 %v4257, 16
  %v4403 = vpop.permute.xlu0 %4402
  %4404 = vrot.lane.b32.xlu0 %v4259, 16
  %v4405 = vpop.permute.xlu0 %4404
  %4406 = vrot.lane.b32.xlu0 %v4262, 16
  %v4407 = vpop.permute.xlu0 %4406
  %4408 = vrot.lane.b32.xlu0 %v4264, 16
  %v4409 = vpop.permute.xlu0 %4408
  %4410 = vrot.lane.b32.xlu0 %v4267, 16
  %v4411 = vpop.permute.xlu0 %4410
  %4412 = vrot.lane.b32.xlu0 %v4269, 16
  %v4413 = vpop.permute.xlu0 %4412
  %4414 = vrot.lane.b32.xlu0 %v4272, 16
  %v4415 = vpop.permute.xlu0 %4414
  %4416 = vrot.lane.b32.xlu0 %v4274, 16
  %v4417 = vpop.permute.xlu0 %4416
  %4418 = vrot.lane.b32.xlu0 %v4277, 16
  %v4419 = vpop.permute.xlu0 %4418
  %4420 = vrot.lane.b32.xlu0 %v4279, 16
  %v4421 = vpop.permute.xlu0 %4420
  %4422 = vrot.lane.b32.xlu0 %v4282, 16
  %v4423 = vpop.permute.xlu0 %4422
  %4424 = vrot.lane.b32.xlu0 %v4284, 16
  %v4425 = vpop.permute.xlu0 %4424
  %4426 = vrot.lane.b32.xlu0 %v4287, 16
  %v4427 = vpop.permute.xlu0 %4426
  %4428 = vrot.lane.b32.xlu0 %v4289, 16
  %v4429 = vpop.permute.xlu0 %4428
  %4430 = vrot.lane.b32.xlu0 %v4292, 16
  %v4431 = vpop.permute.xlu0 %4430
  %4432 = vrot.lane.b32.xlu0 %v4294, 16
  %v4433 = vpop.permute.xlu0 %4432
  %4434 = vrot.lane.b32.xlu0 %v4297, 16
  %v4435 = vpop.permute.xlu0 %4434
  %4436 = vrot.lane.b32.xlu0 %v4299, 16
  %v4437 = vpop.permute.xlu0 %4436
  %4438 = vrot.lane.b32.xlu0 %v4302, 16
  %v4439 = vpop.permute.xlu0 %4438
  %4440 = vrot.lane.b32.xlu0 %v4304, 16
  %v4441 = vpop.permute.xlu0 %4440
  %4442 = vrot.lane.b32.xlu0 %v4307, 16
  %v4443 = vpop.permute.xlu0 %4442
  %4444 = vrot.lane.b32.xlu0 %v4309, 16
  %v4445 = vpop.permute.xlu0 %4444
  %4446 = vrot.lane.b32.xlu0 %v4312, 16
  %v4447 = vpop.permute.xlu0 %4446
  %4448 = vrot.lane.b32.xlu0 %v4314, 16
  %v4449 = vpop.permute.xlu0 %4448
  %4450 = vrot.lane.b32.xlu0 %v4317, 16
  %v4451 = vpop.permute.xlu0 %4450
  %4452 = vrot.lane.b32.xlu0 %v4319, 16
  %v4453 = vpop.permute.xlu0 %4452
  %4454 = vrot.lane.b32.xlu0 %v4322, 16
  %v4455 = vpop.permute.xlu0 %4454
  %4456 = vrot.lane.b32.xlu0 %v4324, 16
  %v4457 = vpop.permute.xlu0 %4456
  %4458 = vrot.lane.b32.xlu0 %v4327, 16
  %v4459 = vpop.permute.xlu0 %4458
  %4460 = vrot.lane.b32.xlu0 %v4329, 16
  %v4461 = vpop.permute.xlu0 %4460
  %4462 = vrot.lane.b32.xlu0 %v4332, 16
  %v4463 = vpop.permute.xlu0 %4462
  %4464 = vrot.lane.b32.xlu0 %v4334, 16
  %v4465 = vpop.permute.xlu0 %4464
  %4466 = vrot.lane.b32.xlu0 %v4337, 16
  %v4467 = vpop.permute.xlu0 %4466
  %4468 = vrot.lane.b32.xlu0 %v4339, 16
  %v4469 = vpop.permute.xlu0 %4468
  %4470 = vrot.lane.b32.xlu0 %v4342, 16
  %v4471 = vpop.permute.xlu0 %4470
  %4472 = vrot.lane.b32.xlu0 %v4344, 16
  %v4473 = vpop.permute.xlu0 %4472
  %4474 = vrot.lane.b32.xlu0 %v4347, 16
  %v4475 = vpop.permute.xlu0 %4474
  %4476 = vrot.lane.b32.xlu0 %v4349, 16
  %v4477 = vpop.permute.xlu0 %4476
  %4478 = vrot.lane.b32.xlu0 %v4352, 16
  %v4479 = vpop.permute.xlu0 %4478
  %4480 = vrot.lane.b32.xlu0 %v4354, 16
  %v4481 = vpop.permute.xlu0 %4480
  %4482 = vrot.lane.b32.xlu0 %v4357, 16
  %v4483 = vpop.permute.xlu0 %4482
  %4484 = vrot.lane.b32.xlu0 %v4359, 16
  %v4485 = vpop.permute.xlu0 %4484
  %4486 = vrot.lane.b32.xlu0 %v4362, 16
  %v4487 = vpop.permute.xlu0 %4486
  %4488 = vrot.lane.b32.xlu0 %v4364, 16
  %v4489 = vpop.permute.xlu0 %4488
  %4490 = vrot.lane.b32.xlu0 %v4367, 16
  %v4491 = vpop.permute.xlu0 %4490
  %4492 = vrot.lane.b32.xlu0 %v4369, 16
  %v4493 = vpop.permute.xlu0 %4492
  %4558 = vrot.lane.b32.xlu0 %v3760, 24
  %v4559 = vpop.permute.xlu0 %4558
  %4560 = vrot.lane.b32.xlu0 %v3572, 24
  %v4561 = vpop.permute.xlu0 %4560
  %4562 = vrot.lane.b32.xlu0 %v3761, 24
  %v4563 = vpop.permute.xlu0 %4562
  %4564 = vrot.lane.b32.xlu0 %v3575, 24
  %v4565 = vpop.permute.xlu0 %4564
  %4566 = vrot.lane.b32.xlu0 %v3762, 24
  %v4567 = vpop.permute.xlu0 %4566
  %4568 = vrot.lane.b32.xlu0 %v3578, 24
  %v4569 = vpop.permute.xlu0 %4568
  %4570 = vrot.lane.b32.xlu0 %v3763, 24
  %v4571 = vpop.permute.xlu0 %4570
  %4572 = vrot.lane.b32.xlu0 %v3581, 24
  %v4573 = vpop.permute.xlu0 %4572
  %4574 = vrot.lane.b32.xlu0 %v3764, 24
  %v4575 = vpop.permute.xlu0 %4574
  %4576 = vrot.lane.b32.xlu0 %v3584, 24
  %v4577 = vpop.permute.xlu0 %4576
  %4578 = vrot.lane.b32.xlu0 %v3765, 24
  %v4579 = vpop.permute.xlu0 %4578
  %4580 = vrot.lane.b32.xlu0 %v3587, 24
  %v4581 = vpop.permute.xlu0 %4580
  %4582 = vrot.lane.b32.xlu0 %v3766, 24
  %v4583 = vpop.permute.xlu0 %4582
  %4584 = vrot.lane.b32.xlu0 %v3590, 24
  %v4585 = vpop.permute.xlu0 %4584
  %4586 = vrot.lane.b32.xlu0 %v3767, 24
  %v4587 = vpop.permute.xlu0 %4586
  %4588 = vrot.lane.b32.xlu0 %v3593, 24
  %v4589 = vpop.permute.xlu0 %4588
  %4590 = vrot.lane.b32.xlu0 %v3768, 24
  %v4591 = vpop.permute.xlu0 %4590
  %4592 = vrot.lane.b32.xlu0 %v3596, 24
  %v4593 = vpop.permute.xlu0 %4592
  %4594 = vrot.lane.b32.xlu0 %v3769, 24
  %v4595 = vpop.permute.xlu0 %4594
  %4596 = vrot.lane.b32.xlu0 %v3599, 24
  %v4597 = vpop.permute.xlu0 %4596
  %4598 = vrot.lane.b32.xlu0 %v3770, 24
  %v4599 = vpop.permute.xlu0 %4598
  %4600 = vrot.lane.b32.xlu0 %v3602, 24
  %v4601 = vpop.permute.xlu0 %4600
  %4602 = vrot.lane.b32.xlu0 %v3771, 24
  %v4603 = vpop.permute.xlu0 %4602
  %4604 = vrot.lane.b32.xlu0 %v3605, 24
  %v4605 = vpop.permute.xlu0 %4604
  %4606 = vrot.lane.b32.xlu0 %v3772, 24
  %v4607 = vpop.permute.xlu0 %4606
  %4608 = vrot.lane.b32.xlu0 %v3608, 24
  %v4609 = vpop.permute.xlu0 %4608
  %4610 = vrot.lane.b32.xlu0 %v3773, 24
  %v4611 = vpop.permute.xlu0 %4610
  %4612 = vrot.lane.b32.xlu0 %v3611, 24
  %v4613 = vpop.permute.xlu0 %4612
  %4614 = vrot.lane.b32.xlu0 %v3774, 24
  %v4615 = vpop.permute.xlu0 %4614
  %4616 = vrot.lane.b32.xlu0 %v3614, 24
  %v4617 = vpop.permute.xlu0 %4616
  %4618 = vrot.lane.b32.xlu0 %v3775, 24
  %v4619 = vpop.permute.xlu0 %4618
  %4620 = vrot.lane.b32.xlu0 %v3617, 24
  %v4621 = vpop.permute.xlu0 %4620
  %4622 = vrot.lane.b32.xlu0 %v3776, 24
  %v4623 = vpop.permute.xlu0 %4622
  %4624 = vrot.lane.b32.xlu0 %v3620, 24
  %v4625 = vpop.permute.xlu0 %4624
  %4626 = vrot.lane.b32.xlu0 %v3777, 24
  %v4627 = vpop.permute.xlu0 %4626
  %4628 = vrot.lane.b32.xlu0 %v3623, 24
  %v4629 = vpop.permute.xlu0 %4628
  %4630 = vrot.lane.b32.xlu0 %v3778, 24
  %v4631 = vpop.permute.xlu0 %4630
  %4632 = vrot.lane.b32.xlu0 %v3626, 24
  %v4633 = vpop.permute.xlu0 %4632
  %4634 = vrot.lane.b32.xlu0 %v3779, 24
  %v4635 = vpop.permute.xlu0 %4634
  %4636 = vrot.lane.b32.xlu0 %v3629, 24
  %v4637 = vpop.permute.xlu0 %4636
  %4638 = vrot.lane.b32.xlu0 %v3780, 24
  %v4639 = vpop.permute.xlu0 %4638
  %4640 = vrot.lane.b32.xlu0 %v3632, 24
  %v4641 = vpop.permute.xlu0 %4640
  %4642 = vrot.lane.b32.xlu0 %v3781, 24
  %v4643 = vpop.permute.xlu0 %4642
  %4644 = vrot.lane.b32.xlu0 %v3635, 24
  %v4645 = vpop.permute.xlu0 %4644
  %4646 = vrot.lane.b32.xlu0 %v3782, 24
  %v4647 = vpop.permute.xlu0 %4646
  %4648 = vrot.lane.b32.xlu0 %v3638, 24
  %v4649 = vpop.permute.xlu0 %4648
  %4650 = vrot.lane.b32.xlu0 %v3783, 24
  %v4651 = vpop.permute.xlu0 %4650
  %4652 = vrot.lane.b32.xlu0 %v3641, 24
  %v4653 = vpop.permute.xlu0 %4652
  %4654 = vrot.lane.b32.xlu0 %v3784, 24
  %v4655 = vpop.permute.xlu0 %4654
  %4656 = vrot.lane.b32.xlu0 %v3644, 24
  %v4657 = vpop.permute.xlu0 %4656
  %4658 = vrot.lane.b32.xlu0 %v3785, 24
  %v4659 = vpop.permute.xlu0 %4658
  %4660 = vrot.lane.b32.xlu0 %v3647, 24
  %v4661 = vpop.permute.xlu0 %4660
  %4662 = vrot.lane.b32.xlu0 %v3786, 24
  %v4663 = vpop.permute.xlu0 %4662
  %4664 = vrot.lane.b32.xlu0 %v3650, 24
  %v4665 = vpop.permute.xlu0 %4664
  %4666 = vrot.lane.b32.xlu0 %v3787, 24
  %v4667 = vpop.permute.xlu0 %4666
  %4668 = vrot.lane.b32.xlu0 %v3653, 24
  %v4669 = vpop.permute.xlu0 %4668
  %4670 = vrot.lane.b32.xlu0 %v3788, 24
  %v4671 = vpop.permute.xlu0 %4670
  %4672 = vrot.lane.b32.xlu0 %v3656, 24
  %v4673 = vpop.permute.xlu0 %4672
  %4674 = vrot.lane.b32.xlu0 %v3789, 24
  %v4675 = vpop.permute.xlu0 %4674
  %4676 = vrot.lane.b32.xlu0 %v3659, 24
  %v4677 = vpop.permute.xlu0 %4676
  %4678 = vrot.lane.b32.xlu0 %v3790, 24
  %v4679 = vpop.permute.xlu0 %4678
  %4680 = vrot.lane.b32.xlu0 %v3662, 24
  %v4681 = vpop.permute.xlu0 %4680
  %4682 = vrot.lane.b32.xlu0 %v3791, 24
  %v4683 = vpop.permute.xlu0 %4682
  %4684 = vrot.lane.b32.xlu0 %v3665, 24
  %v4685 = vpop.permute.xlu0 %4684
  %v4752 = vrot.slane %v3775, 1
  %v4753 = vrot.slane %v3617, 1
  %v4754 = vsel %vm490, %v4752, %v4753
  %v4755 = vrot.slane %v3807, 1
  %v4756 = vsel %vm490, %v4753, %v4755
  %v4757 = vrot.slane %v3791, 1
  %v4758 = vrot.slane %v3665, 1
  %v4759 = vsel %vm490, %v4757, %v4758
  %v4760 = vrot.slane %v3823, 1
  %v4761 = vsel %vm490, %v4758, %v4760
  %4762 = vrot.lane.b32.xlu0 %v3886, 32
  %v4763 = vpop.permute.xlu0 %4762
  %4764 = vrot.lane.b32.xlu0 %v3888, 32
  %v4765 = vpop.permute.xlu0 %4764
  %4766 = vrot.lane.b32.xlu0 %v3891, 32
  %v4767 = vpop.permute.xlu0 %4766
  %4768 = vrot.lane.b32.xlu0 %v3893, 32
  %v4769 = vpop.permute.xlu0 %4768
  %4770 = vrot.lane.b32.xlu0 %v3896, 32
  %v4771 = vpop.permute.xlu0 %4770
  %4772 = vrot.lane.b32.xlu0 %v3898, 32
  %v4773 = vpop.permute.xlu0 %4772
  %4774 = vrot.lane.b32.xlu0 %v3901, 32
  %v4775 = vpop.permute.xlu0 %4774
  %4776 = vrot.lane.b32.xlu0 %v3903, 32
  %v4777 = vpop.permute.xlu0 %4776
  %4778 = vrot.lane.b32.xlu0 %v3906, 32
  %v4779 = vpop.permute.xlu0 %4778
  %4780 = vrot.lane.b32.xlu0 %v3908, 32
  %v4781 = vpop.permute.xlu0 %4780
  %4782 = vrot.lane.b32.xlu0 %v3911, 32
  %v4783 = vpop.permute.xlu0 %4782
  %4784 = vrot.lane.b32.xlu0 %v3913, 32
  %v4785 = vpop.permute.xlu0 %4784
  %4786 = vrot.lane.b32.xlu0 %v3916, 32
  %v4787 = vpop.permute.xlu0 %4786
  %4788 = vrot.lane.b32.xlu0 %v3918, 32
  %v4789 = vpop.permute.xlu0 %4788
  %4790 = vrot.lane.b32.xlu0 %v3921, 32
  %v4791 = vpop.permute.xlu0 %4790
  %4792 = vrot.lane.b32.xlu0 %v3923, 32
  %v4793 = vpop.permute.xlu0 %4792
  %4794 = vrot.lane.b32.xlu0 %v3926, 32
  %v4795 = vpop.permute.xlu0 %4794
  %4796 = vrot.lane.b32.xlu0 %v3928, 32
  %v4797 = vpop.permute.xlu0 %4796
  %4798 = vrot.lane.b32.xlu0 %v3931, 32
  %v4799 = vpop.permute.xlu0 %4798
  %4800 = vrot.lane.b32.xlu0 %v3933, 32
  %v4801 = vpop.permute.xlu0 %4800
  %4802 = vrot.lane.b32.xlu0 %v3936, 32
  %v4803 = vpop.permute.xlu0 %4802
  %4804 = vrot.lane.b32.xlu0 %v3938, 32
  %v4805 = vpop.permute.xlu0 %4804
  %4806 = vrot.lane.b32.xlu0 %v3941, 32
  %v4807 = vpop.permute.xlu0 %4806
  %4808 = vrot.lane.b32.xlu0 %v3943, 32
  %v4809 = vpop.permute.xlu0 %4808
  %4810 = vrot.lane.b32.xlu0 %v3946, 32
  %v4811 = vpop.permute.xlu0 %4810
  %4812 = vrot.lane.b32.xlu0 %v3948, 32
  %v4813 = vpop.permute.xlu0 %4812
  %4814 = vrot.lane.b32.xlu0 %v3951, 32
  %v4815 = vpop.permute.xlu0 %4814
  %4816 = vrot.lane.b32.xlu0 %v3953, 32
  %v4817 = vpop.permute.xlu0 %4816
  %4818 = vrot.lane.b32.xlu0 %v3956, 32
  %v4819 = vpop.permute.xlu0 %4818
  %4820 = vrot.lane.b32.xlu0 %v3958, 32
  %v4821 = vpop.permute.xlu0 %4820
  %4822 = vrot.lane.b32.xlu0 %v4754, 32
  %v4823 = vpop.permute.xlu0 %4822
  %4824 = vrot.lane.b32.xlu0 %v4756, 32
  %v4825 = vpop.permute.xlu0 %4824
  %4826 = vrot.lane.b32.xlu0 %v3961, 32
  %v4827 = vpop.permute.xlu0 %4826
  %4828 = vrot.lane.b32.xlu0 %v3963, 32
  %v4829 = vpop.permute.xlu0 %4828
  %4830 = vrot.lane.b32.xlu0 %v3966, 32
  %v4831 = vpop.permute.xlu0 %4830
  %4832 = vrot.lane.b32.xlu0 %v3968, 32
  %v4833 = vpop.permute.xlu0 %4832
  %4834 = vrot.lane.b32.xlu0 %v3971, 32
  %v4835 = vpop.permute.xlu0 %4834
  %4836 = vrot.lane.b32.xlu0 %v3973, 32
  %v4837 = vpop.permute.xlu0 %4836
  %4838 = vrot.lane.b32.xlu0 %v3976, 32
  %v4839 = vpop.permute.xlu0 %4838
  %4840 = vrot.lane.b32.xlu0 %v3978, 32
  %v4841 = vpop.permute.xlu0 %4840
  %4842 = vrot.lane.b32.xlu0 %v3981, 32
  %v4843 = vpop.permute.xlu0 %4842
  %4844 = vrot.lane.b32.xlu0 %v3983, 32
  %v4845 = vpop.permute.xlu0 %4844
  %4846 = vrot.lane.b32.xlu0 %v3986, 32
  %v4847 = vpop.permute.xlu0 %4846
  %4848 = vrot.lane.b32.xlu0 %v3988, 32
  %v4849 = vpop.permute.xlu0 %4848
  %4850 = vrot.lane.b32.xlu0 %v3991, 32
  %v4851 = vpop.permute.xlu0 %4850
  %4852 = vrot.lane.b32.xlu0 %v3993, 32
  %v4853 = vpop.permute.xlu0 %4852
  %4854 = vrot.lane.b32.xlu0 %v3996, 32
  %v4855 = vpop.permute.xlu0 %4854
  %4856 = vrot.lane.b32.xlu0 %v3998, 32
  %v4857 = vpop.permute.xlu0 %4856
  %4858 = vrot.lane.b32.xlu0 %v4001, 32
  %v4859 = vpop.permute.xlu0 %4858
  %4860 = vrot.lane.b32.xlu0 %v4003, 32
  %v4861 = vpop.permute.xlu0 %4860
  %4862 = vrot.lane.b32.xlu0 %v4006, 32
  %v4863 = vpop.permute.xlu0 %4862
  %4864 = vrot.lane.b32.xlu0 %v4008, 32
  %v4865 = vpop.permute.xlu0 %4864
  %4866 = vrot.lane.b32.xlu0 %v4011, 32
  %v4867 = vpop.permute.xlu0 %4866
  %4868 = vrot.lane.b32.xlu0 %v4013, 32
  %v4869 = vpop.permute.xlu0 %4868
  %4870 = vrot.lane.b32.xlu0 %v4016, 32
  %v4871 = vpop.permute.xlu0 %4870
  %4872 = vrot.lane.b32.xlu0 %v4018, 32
  %v4873 = vpop.permute.xlu0 %4872
  %4874 = vrot.lane.b32.xlu0 %v4021, 32
  %v4875 = vpop.permute.xlu0 %4874
  %4876 = vrot.lane.b32.xlu0 %v4023, 32
  %v4877 = vpop.permute.xlu0 %4876
  %4878 = vrot.lane.b32.xlu0 %v4026, 32
  %v4879 = vpop.permute.xlu0 %4878
  %4880 = vrot.lane.b32.xlu0 %v4028, 32
  %v4881 = vpop.permute.xlu0 %4880
  %4882 = vrot.lane.b32.xlu0 %v4031, 32
  %v4883 = vpop.permute.xlu0 %4882
  %4884 = vrot.lane.b32.xlu0 %v4033, 32
  %v4885 = vpop.permute.xlu0 %4884
  %4886 = vrot.lane.b32.xlu0 %v4759, 32
  %v4887 = vpop.permute.xlu0 %4886
  %4888 = vrot.lane.b32.xlu0 %v4761, 32
  %v4889 = vpop.permute.xlu0 %4888
  %v4954 = vrot.slane %v3775, 2
  %v4955 = vrot.slane %v3617, 2
  %v4956 = vsel %vm832, %v4954, %v4955
  %v4957 = vrot.slane %v3807, 2
  %v4958 = vsel %vm832, %v4955, %v4957
  %v4959 = vrot.slane %v3791, 2
  %v4960 = vrot.slane %v3665, 2
  %v4961 = vsel %vm832, %v4959, %v4960
  %v4962 = vrot.slane %v3823, 2
  %v4963 = vsel %vm832, %v4960, %v4962
  %4964 = vrot.lane.b32.xlu0 %v4222, 40
  %v4965 = vpop.permute.xlu0 %4964
  %4966 = vrot.lane.b32.xlu0 %v4224, 40
  %v4967 = vpop.permute.xlu0 %4966
  %4968 = vrot.lane.b32.xlu0 %v4227, 40
  %v4969 = vpop.permute.xlu0 %4968
  %4970 = vrot.lane.b32.xlu0 %v4229, 40
  %v4971 = vpop.permute.xlu0 %4970
  %4972 = vrot.lane.b32.xlu0 %v4232, 40
  %v4973 = vpop.permute.xlu0 %4972
  %4974 = vrot.lane.b32.xlu0 %v4234, 40
  %v4975 = vpop.permute.xlu0 %4974
  %4976 = vrot.lane.b32.xlu0 %v4237, 40
  %v4977 = vpop.permute.xlu0 %4976
  %4978 = vrot.lane.b32.xlu0 %v4239, 40
  %v4979 = vpop.permute.xlu0 %4978
  %4980 = vrot.lane.b32.xlu0 %v4242, 40
  %v4981 = vpop.permute.xlu0 %4980
  %4982 = vrot.lane.b32.xlu0 %v4244, 40
  %v4983 = vpop.permute.xlu0 %4982
  %4984 = vrot.lane.b32.xlu0 %v4247, 40
  %v4985 = vpop.permute.xlu0 %4984
  %4986 = vrot.lane.b32.xlu0 %v4249, 40
  %v4987 = vpop.permute.xlu0 %4986
  %4988 = vrot.lane.b32.xlu0 %v4252, 40
  %v4989 = vpop.permute.xlu0 %4988
  %4990 = vrot.lane.b32.xlu0 %v4254, 40
  %v4991 = vpop.permute.xlu0 %4990
  %4992 = vrot.lane.b32.xlu0 %v4257, 40
  %v4993 = vpop.permute.xlu0 %4992
  %4994 = vrot.lane.b32.xlu0 %v4259, 40
  %v4995 = vpop.permute.xlu0 %4994
  %4996 = vrot.lane.b32.xlu0 %v4262, 40
  %v4997 = vpop.permute.xlu0 %4996
  %4998 = vrot.lane.b32.xlu0 %v4264, 40
  %v4999 = vpop.permute.xlu0 %4998
  %5000 = vrot.lane.b32.xlu0 %v4267, 40
  %v5001 = vpop.permute.xlu0 %5000
  %5002 = vrot.lane.b32.xlu0 %v4269, 40
  %v5003 = vpop.permute.xlu0 %5002
  %5004 = vrot.lane.b32.xlu0 %v4272, 40
  %v5005 = vpop.permute.xlu0 %5004
  %5006 = vrot.lane.b32.xlu0 %v4274, 40
  %v5007 = vpop.permute.xlu0 %5006
  %5008 = vrot.lane.b32.xlu0 %v4277, 40
  %v5009 = vpop.permute.xlu0 %5008
  %5010 = vrot.lane.b32.xlu0 %v4279, 40
  %v5011 = vpop.permute.xlu0 %5010
  %5012 = vrot.lane.b32.xlu0 %v4282, 40
  %v5013 = vpop.permute.xlu0 %5012
  %5014 = vrot.lane.b32.xlu0 %v4284, 40
  %v5015 = vpop.permute.xlu0 %5014
  %5016 = vrot.lane.b32.xlu0 %v4287, 40
  %v5017 = vpop.permute.xlu0 %5016
  %5018 = vrot.lane.b32.xlu0 %v4289, 40
  %v5019 = vpop.permute.xlu0 %5018
  %5020 = vrot.lane.b32.xlu0 %v4292, 40
  %v5021 = vpop.permute.xlu0 %5020
  %5022 = vrot.lane.b32.xlu0 %v4294, 40
  %v5023 = vpop.permute.xlu0 %5022
  %5024 = vrot.lane.b32.xlu0 %v4956, 40
  %v5025 = vpop.permute.xlu0 %5024
  %5026 = vrot.lane.b32.xlu0 %v4958, 40
  %v5027 = vpop.permute.xlu0 %5026
  %5028 = vrot.lane.b32.xlu0 %v4297, 40
  %v5029 = vpop.permute.xlu0 %5028
  %5030 = vrot.lane.b32.xlu0 %v4299, 40
  %v5031 = vpop.permute.xlu0 %5030
  %5032 = vrot.lane.b32.xlu0 %v4302, 40
  %v5033 = vpop.permute.xlu0 %5032
  %5034 = vrot.lane.b32.xlu0 %v4304, 40
  %v5035 = vpop.permute.xlu0 %5034
  %5036 = vrot.lane.b32.xlu0 %v4307, 40
  %v5037 = vpop.permute.xlu0 %5036
  %5038 = vrot.lane.b32.xlu0 %v4309, 40
  %v5039 = vpop.permute.xlu0 %5038
  %5040 = vrot.lane.b32.xlu0 %v4312, 40
  %v5041 = vpop.permute.xlu0 %5040
  %5042 = vrot.lane.b32.xlu0 %v4314, 40
  %v5043 = vpop.permute.xlu0 %5042
  %5044 = vrot.lane.b32.xlu0 %v4317, 40
  %v5045 = vpop.permute.xlu0 %5044
  %5046 = vrot.lane.b32.xlu0 %v4319, 40
  %v5047 = vpop.permute.xlu0 %5046
  %5048 = vrot.lane.b32.xlu0 %v4322, 40
  %v5049 = vpop.permute.xlu0 %5048
  %5050 = vrot.lane.b32.xlu0 %v4324, 40
  %v5051 = vpop.permute.xlu0 %5050
  %5052 = vrot.lane.b32.xlu0 %v4327, 40
  %v5053 = vpop.permute.xlu0 %5052
  %5054 = vrot.lane.b32.xlu0 %v4329, 40
  %v5055 = vpop.permute.xlu0 %5054
  %5056 = vrot.lane.b32.xlu0 %v4332, 40
  %v5057 = vpop.permute.xlu0 %5056
  %5058 = vrot.lane.b32.xlu0 %v4334, 40
  %v5059 = vpop.permute.xlu0 %5058
  %5060 = vrot.lane.b32.xlu0 %v4337, 40
  %v5061 = vpop.permute.xlu0 %5060
  %5062 = vrot.lane.b32.xlu0 %v4339, 40
  %v5063 = vpop.permute.xlu0 %5062
  %5064 = vrot.lane.b32.xlu0 %v4342, 40
  %v5065 = vpop.permute.xlu0 %5064
  %5066 = vrot.lane.b32.xlu0 %v4344, 40
  %v5067 = vpop.permute.xlu0 %5066
  %5068 = vrot.lane.b32.xlu0 %v4347, 40
  %v5069 = vpop.permute.xlu0 %5068
  %5070 = vrot.lane.b32.xlu0 %v4349, 40
  %v5071 = vpop.permute.xlu0 %5070
  %5072 = vrot.lane.b32.xlu0 %v4352, 40
  %v5073 = vpop.permute.xlu0 %5072
  %5074 = vrot.lane.b32.xlu0 %v4354, 40
  %v5075 = vpop.permute.xlu0 %5074
  %5076 = vrot.lane.b32.xlu0 %v4357, 40
  %v5077 = vpop.permute.xlu0 %5076
  %5078 = vrot.lane.b32.xlu0 %v4359, 40
  %v5079 = vpop.permute.xlu0 %5078
  %5080 = vrot.lane.b32.xlu0 %v4362, 40
  %v5081 = vpop.permute.xlu0 %5080
  %5082 = vrot.lane.b32.xlu0 %v4364, 40
  %v5083 = vpop.permute.xlu0 %5082
  %5084 = vrot.lane.b32.xlu0 %v4367, 40
  %v5085 = vpop.permute.xlu0 %5084
  %5086 = vrot.lane.b32.xlu0 %v4369, 40
  %v5087 = vpop.permute.xlu0 %5086
  %5088 = vrot.lane.b32.xlu0 %v4961, 40
  %v5089 = vpop.permute.xlu0 %5088
  %5090 = vrot.lane.b32.xlu0 %v4963, 40
  %v5091 = vpop.permute.xlu0 %5090
  %5156 = vrot.lane.b32.xlu0 %v3761, 48
  %v5157 = vpop.permute.xlu0 %5156
  %5158 = vrot.lane.b32.xlu0 %v3575, 48
  %v5159 = vpop.permute.xlu0 %5158
  %5160 = vrot.lane.b32.xlu0 %v3762, 48
  %v5161 = vpop.permute.xlu0 %5160
  %5162 = vrot.lane.b32.xlu0 %v3578, 48
  %v5163 = vpop.permute.xlu0 %5162
  %5164 = vrot.lane.b32.xlu0 %v3763, 48
  %v5165 = vpop.permute.xlu0 %5164
  %5166 = vrot.lane.b32.xlu0 %v3581, 48
  %v5167 = vpop.permute.xlu0 %5166
  %5168 = vrot.lane.b32.xlu0 %v3764, 48
  %v5169 = vpop.permute.xlu0 %5168
  %5170 = vrot.lane.b32.xlu0 %v3584, 48
  %v5171 = vpop.permute.xlu0 %5170
  %5172 = vrot.lane.b32.xlu0 %v3765, 48
  %v5173 = vpop.permute.xlu0 %5172
  %5174 = vrot.lane.b32.xlu0 %v3587, 48
  %v5175 = vpop.permute.xlu0 %5174
  %5176 = vrot.lane.b32.xlu0 %v3766, 48
  %v5177 = vpop.permute.xlu0 %5176
  %5178 = vrot.lane.b32.xlu0 %v3590, 48
  %v5179 = vpop.permute.xlu0 %5178
  %5180 = vrot.lane.b32.xlu0 %v3767, 48
  %v5181 = vpop.permute.xlu0 %5180
  %5182 = vrot.lane.b32.xlu0 %v3593, 48
  %v5183 = vpop.permute.xlu0 %5182
  %5184 = vrot.lane.b32.xlu0 %v3768, 48
  %v5185 = vpop.permute.xlu0 %5184
  %5186 = vrot.lane.b32.xlu0 %v3596, 48
  %v5187 = vpop.permute.xlu0 %5186
  %5188 = vrot.lane.b32.xlu0 %v3769, 48
  %v5189 = vpop.permute.xlu0 %5188
  %5190 = vrot.lane.b32.xlu0 %v3599, 48
  %v5191 = vpop.permute.xlu0 %5190
  %5192 = vrot.lane.b32.xlu0 %v3770, 48
  %v5193 = vpop.permute.xlu0 %5192
  %5194 = vrot.lane.b32.xlu0 %v3602, 48
  %v5195 = vpop.permute.xlu0 %5194
  %5196 = vrot.lane.b32.xlu0 %v3771, 48
  %v5197 = vpop.permute.xlu0 %5196
  %5198 = vrot.lane.b32.xlu0 %v3605, 48
  %v5199 = vpop.permute.xlu0 %5198
  %5200 = vrot.lane.b32.xlu0 %v3772, 48
  %v5201 = vpop.permute.xlu0 %5200
  %5202 = vrot.lane.b32.xlu0 %v3608, 48
  %v5203 = vpop.permute.xlu0 %5202
  %5204 = vrot.lane.b32.xlu0 %v3773, 48
  %v5205 = vpop.permute.xlu0 %5204
  %5206 = vrot.lane.b32.xlu0 %v3611, 48
  %v5207 = vpop.permute.xlu0 %5206
  %5208 = vrot.lane.b32.xlu0 %v3774, 48
  %v5209 = vpop.permute.xlu0 %5208
  %5210 = vrot.lane.b32.xlu0 %v3614, 48
  %v5211 = vpop.permute.xlu0 %5210
  %5212 = vrot.lane.b32.xlu0 %v3775, 48
  %v5213 = vpop.permute.xlu0 %5212
  %5214 = vrot.lane.b32.xlu0 %v3617, 48
  %v5215 = vpop.permute.xlu0 %5214
  %5216 = vrot.lane.b32.xlu0 %v362, 48
  %v5217 = vpop.permute.xlu0 %5216
  %5218 = vrot.lane.b32.xlu0 %v169, 48
  %v5219 = vpop.permute.xlu0 %5218
  %5220 = vrot.lane.b32.xlu0 %v3777, 48
  %v5221 = vpop.permute.xlu0 %5220
  %5222 = vrot.lane.b32.xlu0 %v3623, 48
  %v5223 = vpop.permute.xlu0 %5222
  %5224 = vrot.lane.b32.xlu0 %v3778, 48
  %v5225 = vpop.permute.xlu0 %5224
  %5226 = vrot.lane.b32.xlu0 %v3626, 48
  %v5227 = vpop.permute.xlu0 %5226
  %5228 = vrot.lane.b32.xlu0 %v3779, 48
  %v5229 = vpop.permute.xlu0 %5228
  %5230 = vrot.lane.b32.xlu0 %v3629, 48
  %v5231 = vpop.permute.xlu0 %5230
  %5232 = vrot.lane.b32.xlu0 %v3780, 48
  %v5233 = vpop.permute.xlu0 %5232
  %5234 = vrot.lane.b32.xlu0 %v3632, 48
  %v5235 = vpop.permute.xlu0 %5234
  %5236 = vrot.lane.b32.xlu0 %v3781, 48
  %v5237 = vpop.permute.xlu0 %5236
  %5238 = vrot.lane.b32.xlu0 %v3635, 48
  %v5239 = vpop.permute.xlu0 %5238
  %5240 = vrot.lane.b32.xlu0 %v3782, 48
  %v5241 = vpop.permute.xlu0 %5240
  %5242 = vrot.lane.b32.xlu0 %v3638, 48
  %v5243 = vpop.permute.xlu0 %5242
  %5244 = vrot.lane.b32.xlu0 %v3783, 48
  %v5245 = vpop.permute.xlu0 %5244
  %5246 = vrot.lane.b32.xlu0 %v3641, 48
  %v5247 = vpop.permute.xlu0 %5246
  %5248 = vrot.lane.b32.xlu0 %v3784, 48
  %v5249 = vpop.permute.xlu0 %5248
  %5250 = vrot.lane.b32.xlu0 %v3644, 48
  %v5251 = vpop.permute.xlu0 %5250
  %5252 = vrot.lane.b32.xlu0 %v3785, 48
  %v5253 = vpop.permute.xlu0 %5252
  %5254 = vrot.lane.b32.xlu0 %v3647, 48
  %v5255 = vpop.permute.xlu0 %5254
  %5256 = vrot.lane.b32.xlu0 %v3786, 48
  %v5257 = vpop.permute.xlu0 %5256
  %5258 = vrot.lane.b32.xlu0 %v3650, 48
  %v5259 = vpop.permute.xlu0 %5258
  %5260 = vrot.lane.b32.xlu0 %v3787, 48
  %v5261 = vpop.permute.xlu0 %5260
  %5262 = vrot.lane.b32.xlu0 %v3653, 48
  %v5263 = vpop.permute.xlu0 %5262
  %5264 = vrot.lane.b32.xlu0 %v3788, 48
  %v5265 = vpop.permute.xlu0 %5264
  %5266 = vrot.lane.b32.xlu0 %v3656, 48
  %v5267 = vpop.permute.xlu0 %5266
  %5268 = vrot.lane.b32.xlu0 %v3789, 48
  %v5269 = vpop.permute.xlu0 %5268
  %5270 = vrot.lane.b32.xlu0 %v3659, 48
  %v5271 = vpop.permute.xlu0 %5270
  %5272 = vrot.lane.b32.xlu0 %v3790, 48
  %v5273 = vpop.permute.xlu0 %5272
  %5274 = vrot.lane.b32.xlu0 %v3662, 48
  %v5275 = vpop.permute.xlu0 %5274
  %5276 = vrot.lane.b32.xlu0 %v3791, 48
  %v5277 = vpop.permute.xlu0 %5276
  %5278 = vrot.lane.b32.xlu0 %v3665, 48
  %v5279 = vpop.permute.xlu0 %5278
  %5342 = vrot.lane.b32.xlu0 %v3891, 56
  %v5343 = vpop.permute.xlu0 %5342
  %5344 = vrot.lane.b32.xlu0 %v3893, 56
  %v5345 = vpop.permute.xlu0 %5344
  %5346 = vrot.lane.b32.xlu0 %v3896, 56
  %v5347 = vpop.permute.xlu0 %5346
  %5348 = vrot.lane.b32.xlu0 %v3898, 56
  %v5349 = vpop.permute.xlu0 %5348
  %5350 = vrot.lane.b32.xlu0 %v3901, 56
  %v5351 = vpop.permute.xlu0 %5350
  %5352 = vrot.lane.b32.xlu0 %v3903, 56
  %v5353 = vpop.permute.xlu0 %5352
  %5354 = vrot.lane.b32.xlu0 %v3906, 56
  %v5355 = vpop.permute.xlu0 %5354
  %5356 = vrot.lane.b32.xlu0 %v3908, 56
  %v5357 = vpop.permute.xlu0 %5356
  %5358 = vrot.lane.b32.xlu0 %v3911, 56
  %v5359 = vpop.permute.xlu0 %5358
  %5360 = vrot.lane.b32.xlu0 %v3913, 56
  %v5361 = vpop.permute.xlu0 %5360
  %5362 = vrot.lane.b32.xlu0 %v3916, 56
  %v5363 = vpop.permute.xlu0 %5362
  %5364 = vrot.lane.b32.xlu0 %v3918, 56
  %v5365 = vpop.permute.xlu0 %5364
  %5366 = vrot.lane.b32.xlu0 %v3921, 56
  %v5367 = vpop.permute.xlu0 %5366
  %5368 = vrot.lane.b32.xlu0 %v3923, 56
  %v5369 = vpop.permute.xlu0 %5368
  %5370 = vrot.lane.b32.xlu0 %v3926, 56
  %v5371 = vpop.permute.xlu0 %5370
  %5372 = vrot.lane.b32.xlu0 %v3928, 56
  %v5373 = vpop.permute.xlu0 %5372
  %5374 = vrot.lane.b32.xlu0 %v3931, 56
  %v5375 = vpop.permute.xlu0 %5374
  %5376 = vrot.lane.b32.xlu0 %v3933, 56
  %v5377 = vpop.permute.xlu0 %5376
  %5378 = vrot.lane.b32.xlu0 %v3936, 56
  %v5379 = vpop.permute.xlu0 %5378
  %5380 = vrot.lane.b32.xlu0 %v3938, 56
  %v5381 = vpop.permute.xlu0 %5380
  %5382 = vrot.lane.b32.xlu0 %v3941, 56
  %v5383 = vpop.permute.xlu0 %5382
  %5384 = vrot.lane.b32.xlu0 %v3943, 56
  %v5385 = vpop.permute.xlu0 %5384
  %5386 = vrot.lane.b32.xlu0 %v3946, 56
  %v5387 = vpop.permute.xlu0 %5386
  %5388 = vrot.lane.b32.xlu0 %v3948, 56
  %v5389 = vpop.permute.xlu0 %5388
  %5390 = vrot.lane.b32.xlu0 %v3951, 56
  %v5391 = vpop.permute.xlu0 %5390
  %5392 = vrot.lane.b32.xlu0 %v3953, 56
  %v5393 = vpop.permute.xlu0 %5392
  %5394 = vrot.lane.b32.xlu0 %v3956, 56
  %v5395 = vpop.permute.xlu0 %5394
  %5396 = vrot.lane.b32.xlu0 %v3958, 56
  %v5397 = vpop.permute.xlu0 %5396
  %5398 = vrot.lane.b32.xlu0 %v4754, 56
  %v5399 = vpop.permute.xlu0 %5398
  %5400 = vrot.lane.b32.xlu0 %v4756, 56
  %v5401 = vpop.permute.xlu0 %5400
  %5402 = vrot.lane.b32.xlu0 %v493, 56
  %v5403 = vpop.permute.xlu0 %5402
  %5404 = vrot.lane.b32.xlu0 %v495, 56
  %v5405 = vpop.permute.xlu0 %5404
  %5406 = vrot.lane.b32.xlu0 %v3966, 56
  %v5407 = vpop.permute.xlu0 %5406
  %5408 = vrot.lane.b32.xlu0 %v3968, 56
  %v5409 = vpop.permute.xlu0 %5408
  %5410 = vrot.lane.b32.xlu0 %v3971, 56
  %v5411 = vpop.permute.xlu0 %5410
  %5412 = vrot.lane.b32.xlu0 %v3973, 56
  %v5413 = vpop.permute.xlu0 %5412
  %5414 = vrot.lane.b32.xlu0 %v3976, 56
  %v5415 = vpop.permute.xlu0 %5414
  %5416 = vrot.lane.b32.xlu0 %v3978, 56
  %v5417 = vpop.permute.xlu0 %5416
  %5418 = vrot.lane.b32.xlu0 %v3981, 56
  %v5419 = vpop.permute.xlu0 %5418
  %5420 = vrot.lane.b32.xlu0 %v3983, 56
  %v5421 = vpop.permute.xlu0 %5420
  %5422 = vrot.lane.b32.xlu0 %v3986, 56
  %v5423 = vpop.permute.xlu0 %5422
  %5424 = vrot.lane.b32.xlu0 %v3988, 56
  %v5425 = vpop.permute.xlu0 %5424
  %5426 = vrot.lane.b32.xlu0 %v3991, 56
  %v5427 = vpop.permute.xlu0 %5426
  %5428 = vrot.lane.b32.xlu0 %v3993, 56
  %v5429 = vpop.permute.xlu0 %5428
  %5430 = vrot.lane.b32.xlu0 %v3996, 56
  %v5431 = vpop.permute.xlu0 %5430
  %5432 = vrot.lane.b32.xlu0 %v3998, 56
  %v5433 = vpop.permute.xlu0 %5432
  %5434 = vrot.lane.b32.xlu0 %v4001, 56
  %v5435 = vpop.permute.xlu0 %5434
  %5436 = vrot.lane.b32.xlu0 %v4003, 56
  %v5437 = vpop.permute.xlu0 %5436
  %5438 = vrot.lane.b32.xlu0 %v4006, 56
  %v5439 = vpop.permute.xlu0 %5438
  %5440 = vrot.lane.b32.xlu0 %v4008, 56
  %v5441 = vpop.permute.xlu0 %5440
  %5442 = vrot.lane.b32.xlu0 %v4011, 56
  %v5443 = vpop.permute.xlu0 %5442
  %5444 = vrot.lane.b32.xlu0 %v4013, 56
  %v5445 = vpop.permute.xlu0 %5444
  %5446 = vrot.lane.b32.xlu0 %v4016, 56
  %v5447 = vpop.permute.xlu0 %5446
  %5448 = vrot.lane.b32.xlu0 %v4018, 56
  %v5449 = vpop.permute.xlu0 %5448
  %5450 = vrot.lane.b32.xlu0 %v4021, 56
  %v5451 = vpop.permute.xlu0 %5450
  %5452 = vrot.lane.b32.xlu0 %v4023, 56
  %v5453 = vpop.permute.xlu0 %5452
  %5454 = vrot.lane.b32.xlu0 %v4026, 56
  %v5455 = vpop.permute.xlu0 %5454
  %5456 = vrot.lane.b32.xlu0 %v4028, 56
  %v5457 = vpop.permute.xlu0 %5456
  %5458 = vrot.lane.b32.xlu0 %v4031, 56
  %v5459 = vpop.permute.xlu0 %5458
  %5460 = vrot.lane.b32.xlu0 %v4033, 56
  %v5461 = vpop.permute.xlu0 %5460
  %5462 = vrot.lane.b32.xlu0 %v4759, 56
  %v5463 = vpop.permute.xlu0 %5462
  %5464 = vrot.lane.b32.xlu0 %v4761, 56
  %v5465 = vpop.permute.xlu0 %5464
  %5528 = vrot.lane.b32.xlu0 %v4227, 64
  %v5529 = vpop.permute.xlu0 %5528
  %5530 = vrot.lane.b32.xlu0 %v4229, 64
  %v5531 = vpop.permute.xlu0 %5530
  %5532 = vrot.lane.b32.xlu0 %v4232, 64
  %v5533 = vpop.permute.xlu0 %5532
  %5534 = vrot.lane.b32.xlu0 %v4234, 64
  %v5535 = vpop.permute.xlu0 %5534
  %5536 = vrot.lane.b32.xlu0 %v4237, 64
  %v5537 = vpop.permute.xlu0 %5536
  %5538 = vrot.lane.b32.xlu0 %v4239, 64
  %v5539 = vpop.permute.xlu0 %5538
  %5540 = vrot.lane.b32.xlu0 %v4242, 64
  %v5541 = vpop.permute.xlu0 %5540
  %5542 = vrot.lane.b32.xlu0 %v4244, 64
  %v5543 = vpop.permute.xlu0 %5542
  %5544 = vrot.lane.b32.xlu0 %v4247, 64
  %v5545 = vpop.permute.xlu0 %5544
  %5546 = vrot.lane.b32.xlu0 %v4249, 64
  %v5547 = vpop.permute.xlu0 %5546
  %5548 = vrot.lane.b32.xlu0 %v4252, 64
  %v5549 = vpop.permute.xlu0 %5548
  %5550 = vrot.lane.b32.xlu0 %v4254, 64
  %v5551 = vpop.permute.xlu0 %5550
  %5552 = vrot.lane.b32.xlu0 %v4257, 64
  %v5553 = vpop.permute.xlu0 %5552
  %5554 = vrot.lane.b32.xlu0 %v4259, 64
  %v5555 = vpop.permute.xlu0 %5554
  %5556 = vrot.lane.b32.xlu0 %v4262, 64
  %v5557 = vpop.permute.xlu0 %5556
  %5558 = vrot.lane.b32.xlu0 %v4264, 64
  %v5559 = vpop.permute.xlu0 %5558
  %5560 = vrot.lane.b32.xlu0 %v4267, 64
  %v5561 = vpop.permute.xlu0 %5560
  %5562 = vrot.lane.b32.xlu0 %v4269, 64
  %v5563 = vpop.permute.xlu0 %5562
  %5564 = vrot.lane.b32.xlu0 %v4272, 64
  %v5565 = vpop.permute.xlu0 %5564
  %5566 = vrot.lane.b32.xlu0 %v4274, 64
  %v5567 = vpop.permute.xlu0 %5566
  %5568 = vrot.lane.b32.xlu0 %v4277, 64
  %v5569 = vpop.permute.xlu0 %5568
  %5570 = vrot.lane.b32.xlu0 %v4279, 64
  %v5571 = vpop.permute.xlu0 %5570
  %5572 = vrot.lane.b32.xlu0 %v4282, 64
  %v5573 = vpop.permute.xlu0 %5572
  %5574 = vrot.lane.b32.xlu0 %v4284, 64
  %v5575 = vpop.permute.xlu0 %5574
  %5576 = vrot.lane.b32.xlu0 %v4287, 64
  %v5577 = vpop.permute.xlu0 %5576
  %5578 = vrot.lane.b32.xlu0 %v4289, 64
  %v5579 = vpop.permute.xlu0 %5578
  %5580 = vrot.lane.b32.xlu0 %v4292, 64
  %v5581 = vpop.permute.xlu0 %5580
  %5582 = vrot.lane.b32.xlu0 %v4294, 64
  %v5583 = vpop.permute.xlu0 %5582
  %5584 = vrot.lane.b32.xlu0 %v4956, 64
  %v5585 = vpop.permute.xlu0 %5584
  %5586 = vrot.lane.b32.xlu0 %v4958, 64
  %v5587 = vpop.permute.xlu0 %5586
  %5588 = vrot.lane.b32.xlu0 %v835, 64
  %v5589 = vpop.permute.xlu0 %5588
  %5590 = vrot.lane.b32.xlu0 %v837, 64
  %v5591 = vpop.permute.xlu0 %5590
  %5592 = vrot.lane.b32.xlu0 %v4302, 64
  %v5593 = vpop.permute.xlu0 %5592
  %5594 = vrot.lane.b32.xlu0 %v4304, 64
  %v5595 = vpop.permute.xlu0 %5594
  %5596 = vrot.lane.b32.xlu0 %v4307, 64
  %v5597 = vpop.permute.xlu0 %5596
  %5598 = vrot.lane.b32.xlu0 %v4309, 64
  %v5599 = vpop.permute.xlu0 %5598
  %5600 = vrot.lane.b32.xlu0 %v4312, 64
  %v5601 = vpop.permute.xlu0 %5600
  %5602 = vrot.lane.b32.xlu0 %v4314, 64
  %v5603 = vpop.permute.xlu0 %5602
  %5604 = vrot.lane.b32.xlu0 %v4317, 64
  %v5605 = vpop.permute.xlu0 %5604
  %5606 = vrot.lane.b32.xlu0 %v4319, 64
  %v5607 = vpop.permute.xlu0 %5606
  %5608 = vrot.lane.b32.xlu0 %v4322, 64
  %v5609 = vpop.permute.xlu0 %5608
  %5610 = vrot.lane.b32.xlu0 %v4324, 64
  %v5611 = vpop.permute.xlu0 %5610
  %5612 = vrot.lane.b32.xlu0 %v4327, 64
  %v5613 = vpop.permute.xlu0 %5612
  %5614 = vrot.lane.b32.xlu0 %v4329, 64
  %v5615 = vpop.permute.xlu0 %5614
  %5616 = vrot.lane.b32.xlu0 %v4332, 64
  %v5617 = vpop.permute.xlu0 %5616
  %5618 = vrot.lane.b32.xlu0 %v4334, 64
  %v5619 = vpop.permute.xlu0 %5618
  %5620 = vrot.lane.b32.xlu0 %v4337, 64
  %v5621 = vpop.permute.xlu0 %5620
  %5622 = vrot.lane.b32.xlu0 %v4339, 64
  %v5623 = vpop.permute.xlu0 %5622
  %5624 = vrot.lane.b32.xlu0 %v4342, 64
  %v5625 = vpop.permute.xlu0 %5624
  %5626 = vrot.lane.b32.xlu0 %v4344, 64
  %v5627 = vpop.permute.xlu0 %5626
  %5628 = vrot.lane.b32.xlu0 %v4347, 64
  %v5629 = vpop.permute.xlu0 %5628
  %5630 = vrot.lane.b32.xlu0 %v4349, 64
  %v5631 = vpop.permute.xlu0 %5630
  %5632 = vrot.lane.b32.xlu0 %v4352, 64
  %v5633 = vpop.permute.xlu0 %5632
  %5634 = vrot.lane.b32.xlu0 %v4354, 64
  %v5635 = vpop.permute.xlu0 %5634
  %5636 = vrot.lane.b32.xlu0 %v4357, 64
  %v5637 = vpop.permute.xlu0 %5636
  %5638 = vrot.lane.b32.xlu0 %v4359, 64
  %v5639 = vpop.permute.xlu0 %5638
  %5640 = vrot.lane.b32.xlu0 %v4362, 64
  %v5641 = vpop.permute.xlu0 %5640
  %5642 = vrot.lane.b32.xlu0 %v4364, 64
  %v5643 = vpop.permute.xlu0 %5642
  %5644 = vrot.lane.b32.xlu0 %v4367, 64
  %v5645 = vpop.permute.xlu0 %5644
  %5646 = vrot.lane.b32.xlu0 %v4369, 64
  %v5647 = vpop.permute.xlu0 %5646
  %5648 = vrot.lane.b32.xlu0 %v4961, 64
  %v5649 = vpop.permute.xlu0 %5648
  %5650 = vrot.lane.b32.xlu0 %v4963, 64
  %v5651 = vpop.permute.xlu0 %5650
  %v5714 = vsel %vm2395, %v362, %v4035
  %v5715 = vsel %vm2395, %v169, %v4037
  %v5716 = vsel %vm2395, %v3760, %v4039
  %v5717 = vsel %vm2395, %v3572, %v4041
  %v5718 = vsel %vm2395, %v3761, %v4043
  %v5719 = vsel %vm2395, %v3575, %v4045
  %v5720 = vsel %vm2395, %v3762, %v4047
  %v5721 = vsel %vm2395, %v3578, %v4049
  %v5722 = vsel %vm2395, %v3763, %v4051
  %v5723 = vsel %vm2395, %v3581, %v4053
  %v5724 = vsel %vm2395, %v3764, %v4055
  %v5725 = vsel %vm2395, %v3584, %v4057
  %v5726 = vsel %vm2395, %v3765, %v4059
  %v5727 = vsel %vm2395, %v3587, %v4061
  %v5728 = vsel %vm2395, %v3766, %v4063
  %v5729 = vsel %vm2395, %v3590, %v4065
  %v5730 = vsel %vm2395, %v3767, %v4067
  %v5731 = vsel %vm2395, %v3593, %v4069
  %v5732 = vsel %vm2395, %v3768, %v4071
  %v5733 = vsel %vm2395, %v3596, %v4073
  %v5734 = vsel %vm2395, %v3769, %v4075
  %v5735 = vsel %vm2395, %v3599, %v4077
  %v5736 = vsel %vm2395, %v3770, %v4079
  %v5737 = vsel %vm2395, %v3602, %v4081
  %v5738 = vsel %vm2395, %v3771, %v4083
  %v5739 = vsel %vm2395, %v3605, %v4085
  %v5740 = vsel %vm2395, %v3772, %v4087
  %v5741 = vsel %vm2395, %v3608, %v4089
  %v5742 = vsel %vm2395, %v3773, %v4091
  %v5743 = vsel %vm2395, %v3611, %v4093
  %v5744 = vsel %vm2395, %v3774, %v4095
  %v5745 = vsel %vm2395, %v3614, %v4097
  %v5746 = vsel %vm2395, %v3776, %v4099
  %v5747 = vsel %vm2395, %v3620, %v4101
  %v5748 = vsel %vm2395, %v3777, %v4103
  %v5749 = vsel %vm2395, %v3623, %v4105
  %v5750 = vsel %vm2395, %v3778, %v4107
  %v5751 = vsel %vm2395, %v3626, %v4109
  %v5752 = vsel %vm2395, %v3779, %v4111
  %v5753 = vsel %vm2395, %v3629, %v4113
  %v5754 = vsel %vm2395, %v3780, %v4115
  %v5755 = vsel %vm2395, %v3632, %v4117
  %v5756 = vsel %vm2395, %v3781, %v4119
  %v5757 = vsel %vm2395, %v3635, %v4121
  %v5758 = vsel %vm2395, %v3782, %v4123
  %v5759 = vsel %vm2395, %v3638, %v4125
  %v5760 = vsel %vm2395, %v3783, %v4127
  %v5761 = vsel %vm2395, %v3641, %v4129
  %v5762 = vsel %vm2395, %v3784, %v4131
  %v5763 = vsel %vm2395, %v3644, %v4133
  %v5764 = vsel %vm2395, %v3785, %v4135
  %v5765 = vsel %vm2395, %v3647, %v4137
  %v5766 = vsel %vm2395, %v3786, %v4139
  %v5767 = vsel %vm2395, %v3650, %v4141
  %v5768 = vsel %vm2395, %v3787, %v4143
  %v5769 = vsel %vm2395, %v3653, %v4145
  %v5770 = vsel %vm2395, %v3788, %v4147
  %v5771 = vsel %vm2395, %v3656, %v4149
  %v5772 = vsel %vm2395, %v3789, %v4151
  %v5773 = vsel %vm2395, %v3659, %v4153
  %v5774 = vsel %vm2395, %v3790, %v4155
  %v5775 = vsel %vm2395, %v3662, %v4157
  %v5776 = vsel %vm2523, %v5714, %v4371
  %v5777 = vsel %vm2523, %v5715, %v4373
  %v5778 = vsel %vm2523, %v5716, %v4375
  %v5779 = vsel %vm2523, %v5717, %v4377
  %v5780 = vsel %vm2523, %v5718, %v4379
  %v5781 = vsel %vm2523, %v5719, %v4381
  %v5782 = vsel %vm2523, %v5720, %v4383
  %v5783 = vsel %vm2523, %v5721, %v4385
  %v5784 = vsel %vm2523, %v5722, %v4387
  %v5785 = vsel %vm2523, %v5723, %v4389
  %v5786 = vsel %vm2523, %v5724, %v4391
  %v5787 = vsel %vm2523, %v5725, %v4393
  %v5788 = vsel %vm2523, %v5726, %v4395
  %v5789 = vsel %vm2523, %v5727, %v4397
  %v5790 = vsel %vm2523, %v5728, %v4399
  %v5791 = vsel %vm2523, %v5729, %v4401
  %v5792 = vsel %vm2523, %v5730, %v4403
  %v5793 = vsel %vm2523, %v5731, %v4405
  %v5794 = vsel %vm2523, %v5732, %v4407
  %v5795 = vsel %vm2523, %v5733, %v4409
  %v5796 = vsel %vm2523, %v5734, %v4411
  %v5797 = vsel %vm2523, %v5735, %v4413
  %v5798 = vsel %vm2523, %v5736, %v4415
  %v5799 = vsel %vm2523, %v5737, %v4417
  %v5800 = vsel %vm2523, %v5738, %v4419
  %v5801 = vsel %vm2523, %v5739, %v4421
  %v5802 = vsel %vm2523, %v5740, %v4423
  %v5803 = vsel %vm2523, %v5741, %v4425
  %v5804 = vsel %vm2523, %v5742, %v4427
  %v5805 = vsel %vm2523, %v5743, %v4429
  %v5806 = vsel %vm2523, %v5744, %v4431
  %v5807 = vsel %vm2523, %v5745, %v4433
  %v5808 = vsel %vm2523, %v5746, %v4435
  %v5809 = vsel %vm2523, %v5747, %v4437
  %v5810 = vsel %vm2523, %v5748, %v4439
  %v5811 = vsel %vm2523, %v5749, %v4441
  %v5812 = vsel %vm2523, %v5750, %v4443
  %v5813 = vsel %vm2523, %v5751, %v4445
  %v5814 = vsel %vm2523, %v5752, %v4447
  %v5815 = vsel %vm2523, %v5753, %v4449
  %v5816 = vsel %vm2523, %v5754, %v4451
  %v5817 = vsel %vm2523, %v5755, %v4453
  %v5818 = vsel %vm2523, %v5756, %v4455
  %v5819 = vsel %vm2523, %v5757, %v4457
  %v5820 = vsel %vm2523, %v5758, %v4459
  %v5821 = vsel %vm2523, %v5759, %v4461
  %v5822 = vsel %vm2523, %v5760, %v4463
  %v5823 = vsel %vm2523, %v5761, %v4465
  %v5824 = vsel %vm2523, %v5762, %v4467
  %v5825 = vsel %vm2523, %v5763, %v4469
  %v5826 = vsel %vm2523, %v5764, %v4471
  %v5827 = vsel %vm2523, %v5765, %v4473
  %v5828 = vsel %vm2523, %v5766, %v4475
  %v5829 = vsel %vm2523, %v5767, %v4477
  %v5830 = vsel %vm2523, %v5768, %v4479
  %v5831 = vsel %vm2523, %v5769, %v4481
  %v5832 = vsel %vm2523, %v5770, %v4483
  %v5833 = vsel %vm2523, %v5771, %v4485
  %v5834 = vsel %vm2523, %v5772, %v4487
  %v5835 = vsel %vm2523, %v5773, %v4489
  %v5836 = vsel %vm2523, %v5774, %v4491
  %v5837 = vsel %vm2523, %v5775, %v4493
  %v5838 = vsel %vm2653, %v5776, %v4559
  %v5839 = vsel %vm2653, %v5777, %v4561
  %v5840 = vsel %vm2653, %v5778, %v4563
  %v5841 = vsel %vm2653, %v5779, %v4565
  %v5842 = vsel %vm2653, %v5780, %v4567
  %v5843 = vsel %vm2653, %v5781, %v4569
  %v5844 = vsel %vm2653, %v5782, %v4571
  %v5845 = vsel %vm2653, %v5783, %v4573
  %v5846 = vsel %vm2653, %v5784, %v4575
  %v5847 = vsel %vm2653, %v5785, %v4577
  %v5848 = vsel %vm2653, %v5786, %v4579
  %v5849 = vsel %vm2653, %v5787, %v4581
  %v5850 = vsel %vm2653, %v5788, %v4583
  %v5851 = vsel %vm2653, %v5789, %v4585
  %v5852 = vsel %vm2653, %v5790, %v4587
  %v5853 = vsel %vm2653, %v5791, %v4589
  %v5854 = vsel %vm2653, %v5792, %v4591
  %v5855 = vsel %vm2653, %v5793, %v4593
  %v5856 = vsel %vm2653, %v5794, %v4595
  %v5857 = vsel %vm2653, %v5795, %v4597
  %v5858 = vsel %vm2653, %v5796, %v4599
  %v5859 = vsel %vm2653, %v5797, %v4601
  %v5860 = vsel %vm2653, %v5798, %v4603
  %v5861 = vsel %vm2653, %v5799, %v4605
  %v5862 = vsel %vm2653, %v5800, %v4607
  %v5863 = vsel %vm2653, %v5801, %v4609
  %v5864 = vsel %vm2653, %v5802, %v4611
  %v5865 = vsel %vm2653, %v5803, %v4613
  %v5866 = vsel %vm2653, %v5804, %v4615
  %v5867 = vsel %vm2653, %v5805, %v4617
  %v5868 = vsel %vm2653, %v5806, %v4619
  %v5869 = vsel %vm2653, %v5807, %v4621
  %v5870 = vsel %vm2653, %v5776, %v4623
  %v5871 = vsel %vm2653, %v5777, %v4625
  %v5872 = vsel %vm2653, %v5808, %v4627
  %v5873 = vsel %vm2653, %v5809, %v4629
  %v5874 = vsel %vm2653, %v5810, %v4631
  %v5875 = vsel %vm2653, %v5811, %v4633
  %v5876 = vsel %vm2653, %v5812, %v4635
  %v5877 = vsel %vm2653, %v5813, %v4637
  %v5878 = vsel %vm2653, %v5814, %v4639
  %v5879 = vsel %vm2653, %v5815, %v4641
  %v5880 = vsel %vm2653, %v5816, %v4643
  %v5881 = vsel %vm2653, %v5817, %v4645
  %v5882 = vsel %vm2653, %v5818, %v4647
  %v5883 = vsel %vm2653, %v5819, %v4649
  %v5884 = vsel %vm2653, %v5820, %v4651
  %v5885 = vsel %vm2653, %v5821, %v4653
  %v5886 = vsel %vm2653, %v5822, %v4655
  %v5887 = vsel %vm2653, %v5823, %v4657
  %v5888 = vsel %vm2653, %v5824, %v4659
  %v5889 = vsel %vm2653, %v5825, %v4661
  %v5890 = vsel %vm2653, %v5826, %v4663
  %v5891 = vsel %vm2653, %v5827, %v4665
  %v5892 = vsel %vm2653, %v5828, %v4667
  %v5893 = vsel %vm2653, %v5829, %v4669
  %v5894 = vsel %vm2653, %v5830, %v4671
  %v5895 = vsel %vm2653, %v5831, %v4673
  %v5896 = vsel %vm2653, %v5832, %v4675
  %v5897 = vsel %vm2653, %v5833, %v4677
  %v5898 = vsel %vm2653, %v5834, %v4679
  %v5899 = vsel %vm2653, %v5835, %v4681
  %v5900 = vsel %vm2653, %v5836, %v4683
  %v5901 = vsel %vm2653, %v5837, %v4685
  %v5902 = vsel %vm2783, %v5838, %v4763
  %v5903 = vsel %vm2783, %v5839, %v4765
  %v5904 = vsel %vm2783, %v5840, %v4767
  %v5905 = vsel %vm2783, %v5841, %v4769
  %v5906 = vsel %vm2783, %v5842, %v4771
  %v5907 = vsel %vm2783, %v5843, %v4773
  %v5908 = vsel %vm2783, %v5844, %v4775
  %v5909 = vsel %vm2783, %v5845, %v4777
  %v5910 = vsel %vm2783, %v5846, %v4779
  %v5911 = vsel %vm2783, %v5847, %v4781
  %v5912 = vsel %vm2783, %v5848, %v4783
  %v5913 = vsel %vm2783, %v5849, %v4785
  %v5914 = vsel %vm2783, %v5850, %v4787
  %v5915 = vsel %vm2783, %v5851, %v4789
  %v5916 = vsel %vm2783, %v5852, %v4791
  %v5917 = vsel %vm2783, %v5853, %v4793
  %v5918 = vsel %vm2783, %v5854, %v4795
  %v5919 = vsel %vm2783, %v5855, %v4797
  %v5920 = vsel %vm2783, %v5856, %v4799
  %v5921 = vsel %vm2783, %v5857, %v4801
  %v5922 = vsel %vm2783, %v5858, %v4803
  %v5923 = vsel %vm2783, %v5859, %v4805
  %v5924 = vsel %vm2783, %v5860, %v4807
  %v5925 = vsel %vm2783, %v5861, %v4809
  %v5926 = vsel %vm2783, %v5862, %v4811
  %v5927 = vsel %vm2783, %v5863, %v4813
  %v5928 = vsel %vm2783, %v5864, %v4815
  %v5929 = vsel %vm2783, %v5865, %v4817
  %v5930 = vsel %vm2783, %v5866, %v4819
  %v5931 = vsel %vm2783, %v5867, %v4821
  %v5932 = vsel %vm2783, %v5868, %v4823
  %v5933 = vsel %vm2783, %v5869, %v4825
  %v5934 = vsel %vm2783, %v5870, %v4827
  %v5935 = vsel %vm2783, %v5871, %v4829
  %v5936 = vsel %vm2783, %v5872, %v4831
  %v5937 = vsel %vm2783, %v5873, %v4833
  %v5938 = vsel %vm2783, %v5874, %v4835
  %v5939 = vsel %vm2783, %v5875, %v4837
  %v5940 = vsel %vm2783, %v5876, %v4839
  %v5941 = vsel %vm2783, %v5877, %v4841
  %v5942 = vsel %vm2783, %v5878, %v4843
  %v5943 = vsel %vm2783, %v5879, %v4845
  %v5944 = vsel %vm2783, %v5880, %v4847
  %v5945 = vsel %vm2783, %v5881, %v4849
  %v5946 = vsel %vm2783, %v5882, %v4851
  %v5947 = vsel %vm2783, %v5883, %v4853
  %v5948 = vsel %vm2783, %v5884, %v4855
  %v5949 = vsel %vm2783, %v5885, %v4857
  %v5950 = vsel %vm2783, %v5886, %v4859
  %v5951 = vsel %vm2783, %v5887, %v4861
  %v5952 = vsel %vm2783, %v5888, %v4863
  %v5953 = vsel %vm2783, %v5889, %v4865
  %v5954 = vsel %vm2783, %v5890, %v4867
  %v5955 = vsel %vm2783, %v5891, %v4869
  %v5956 = vsel %vm2783, %v5892, %v4871
  %v5957 = vsel %vm2783, %v5893, %v4873
  %v5958 = vsel %vm2783, %v5894, %v4875
  %v5959 = vsel %vm2783, %v5895, %v4877
  %v5960 = vsel %vm2783, %v5896, %v4879
  %v5961 = vsel %vm2783, %v5897, %v4881
  %v5962 = vsel %vm2783, %v5898, %v4883
  %v5963 = vsel %vm2783, %v5899, %v4885
  %v5964 = vsel %vm2783, %v5900, %v4887
  %v5965 = vsel %vm2783, %v5901, %v4889
  %vm5966 = vcmask 326656
  %v5967 = vsel %vm5966, %v5902, %v4965
  %v5968 = vsel %vm5966, %v5903, %v4967
  %v5969 = vsel %vm5966, %v5904, %v4969
  %v5970 = vsel %vm5966, %v5905, %v4971
  %v5971 = vsel %vm5966, %v5906, %v4973
  %v5972 = vsel %vm5966, %v5907, %v4975
  %v5973 = vsel %vm5966, %v5908, %v4977
  %v5974 = vsel %vm5966, %v5909, %v4979
  %v5975 = vsel %vm5966, %v5910, %v4981
  %v5976 = vsel %vm5966, %v5911, %v4983
  %v5977 = vsel %vm5966, %v5912, %v4985
  %v5978 = vsel %vm5966, %v5913, %v4987
  %v5979 = vsel %vm5966, %v5914, %v4989
  %v5980 = vsel %vm5966, %v5915, %v4991
  %v5981 = vsel %vm5966, %v5916, %v4993
  %v5982 = vsel %vm5966, %v5917, %v4995
  %v5983 = vsel %vm5966, %v5918, %v4997
  %v5984 = vsel %vm5966, %v5919, %v4999
  %v5985 = vsel %vm5966, %v5920, %v5001
  %v5986 = vsel %vm5966, %v5921, %v5003
  %v5987 = vsel %vm5966, %v5922, %v5005
  %v5988 = vsel %vm5966, %v5923, %v5007
  %v5989 = vsel %vm5966, %v5924, %v5009
  %v5990 = vsel %vm5966, %v5925, %v5011
  %v5991 = vsel %vm5966, %v5926, %v5013
  %v5992 = vsel %vm5966, %v5927, %v5015
  %v5993 = vsel %vm5966, %v5928, %v5017
  %v5994 = vsel %vm5966, %v5929, %v5019
  %v5995 = vsel %vm5966, %v5930, %v5021
  %v5996 = vsel %vm5966, %v5931, %v5023
  %v5997 = vsel %vm5966, %v5932, %v5025
  %v5998 = vsel %vm5966, %v5933, %v5027
  %v5999 = vsel %vm5966, %v5934, %v5029
  %v6000 = vsel %vm5966, %v5935, %v5031
  %v6001 = vsel %vm5966, %v5936, %v5033
  %v6002 = vsel %vm5966, %v5937, %v5035
  %v6003 = vsel %vm5966, %v5938, %v5037
  %v6004 = vsel %vm5966, %v5939, %v5039
  %v6005 = vsel %vm5966, %v5940, %v5041
  %v6006 = vsel %vm5966, %v5941, %v5043
  %v6007 = vsel %vm5966, %v5942, %v5045
  %v6008 = vsel %vm5966, %v5943, %v5047
  %v6009 = vsel %vm5966, %v5944, %v5049
  %v6010 = vsel %vm5966, %v5945, %v5051
  %v6011 = vsel %vm5966, %v5946, %v5053
  %v6012 = vsel %vm5966, %v5947, %v5055
  %v6013 = vsel %vm5966, %v5948, %v5057
  %v6014 = vsel %vm5966, %v5949, %v5059
  %v6015 = vsel %vm5966, %v5950, %v5061
  %v6016 = vsel %vm5966, %v5951, %v5063
  %v6017 = vsel %vm5966, %v5952, %v5065
  %v6018 = vsel %vm5966, %v5953, %v5067
  %v6019 = vsel %vm5966, %v5954, %v5069
  %v6020 = vsel %vm5966, %v5955, %v5071
  %v6021 = vsel %vm5966, %v5956, %v5073
  %v6022 = vsel %vm5966, %v5957, %v5075
  %v6023 = vsel %vm5966, %v5958, %v5077
  %v6024 = vsel %vm5966, %v5959, %v5079
  %v6025 = vsel %vm5966, %v5960, %v5081
  %v6026 = vsel %vm5966, %v5961, %v5083
  %v6027 = vsel %vm5966, %v5962, %v5085
  %v6028 = vsel %vm5966, %v5963, %v5087
  %v6029 = vsel %vm5966, %v5964, %v5089
  %v6030 = vsel %vm5966, %v5965, %v5091
  %vm6031 = vcmask 392192
  %v6032 = vsel %vm6031, %v5967, %v5157
  %v6033 = vsel %vm6031, %v5968, %v5159
  %v6034 = vsel %vm6031, %v5969, %v5161
  %v6035 = vsel %vm6031, %v5970, %v5163
  %v6036 = vsel %vm6031, %v5971, %v5165
  %v6037 = vsel %vm6031, %v5972, %v5167
  %v6038 = vsel %vm6031, %v5973, %v5169
  %v6039 = vsel %vm6031, %v5974, %v5171
  %v6040 = vsel %vm6031, %v5975, %v5173
  %v6041 = vsel %vm6031, %v5976, %v5175
  %v6042 = vsel %vm6031, %v5977, %v5177
  %v6043 = vsel %vm6031, %v5978, %v5179
  %v6044 = vsel %vm6031, %v5979, %v5181
  %v6045 = vsel %vm6031, %v5980, %v5183
  %v6046 = vsel %vm6031, %v5981, %v5185
  %v6047 = vsel %vm6031, %v5982, %v5187
  %v6048 = vsel %vm6031, %v5983, %v5189
  %v6049 = vsel %vm6031, %v5984, %v5191
  %v6050 = vsel %vm6031, %v5985, %v5193
  %v6051 = vsel %vm6031, %v5986, %v5195
  %v6052 = vsel %vm6031, %v5987, %v5197
  %v6053 = vsel %vm6031, %v5988, %v5199
  %v6054 = vsel %vm6031, %v5989, %v5201
  %v6055 = vsel %vm6031, %v5990, %v5203
  %v6056 = vsel %vm6031, %v5991, %v5205
  %v6057 = vsel %vm6031, %v5992, %v5207
  %v6058 = vsel %vm6031, %v5993, %v5209
  %v6059 = vsel %vm6031, %v5994, %v5211
  %v6060 = vsel %vm6031, %v5995, %v5213
  %v6061 = vsel %vm6031, %v5996, %v5215
  %v6062 = vsel %vm6031, %v5997, %v5217
  %v6063 = vsel %vm6031, %v5998, %v5219
  %v6064 = vsel %vm6031, %v5999, %v5221
  %v6065 = vsel %vm6031, %v6000, %v5223
  %v6066 = vsel %vm6031, %v6001, %v5225
  %v6067 = vsel %vm6031, %v6002, %v5227
  %v6068 = vsel %vm6031, %v6003, %v5229
  %v6069 = vsel %vm6031, %v6004, %v5231
  %v6070 = vsel %vm6031, %v6005, %v5233
  %v6071 = vsel %vm6031, %v6006, %v5235
  %v6072 = vsel %vm6031, %v6007, %v5237
  %v6073 = vsel %vm6031, %v6008, %v5239
  %v6074 = vsel %vm6031, %v6009, %v5241
  %v6075 = vsel %vm6031, %v6010, %v5243
  %v6076 = vsel %vm6031, %v6011, %v5245
  %v6077 = vsel %vm6031, %v6012, %v5247
  %v6078 = vsel %vm6031, %v6013, %v5249
  %v6079 = vsel %vm6031, %v6014, %v5251
  %v6080 = vsel %vm6031, %v6015, %v5253
  %v6081 = vsel %vm6031, %v6016, %v5255
  %v6082 = vsel %vm6031, %v6017, %v5257
  %v6083 = vsel %vm6031, %v6018, %v5259
  %v6084 = vsel %vm6031, %v6019, %v5261
  %v6085 = vsel %vm6031, %v6020, %v5263
  %v6086 = vsel %vm6031, %v6021, %v5265
  %v6087 = vsel %vm6031, %v6022, %v5267
  %v6088 = vsel %vm6031, %v6023, %v5269
  %v6089 = vsel %vm6031, %v6024, %v5271
  %v6090 = vsel %vm6031, %v6025, %v5273
  %v6091 = vsel %vm6031, %v6026, %v5275
  %v6092 = vsel %vm6031, %v6027, %v5277
  %v6093 = vsel %vm6031, %v6028, %v5279
  %v6094 = vsel %vm6031, %v6029, %v5217
  %v6095 = vsel %vm6031, %v6030, %v5219
  %vm6096 = vcmask 457728
  %v6097 = vsel %vm6096, %v6032, %v5343
  %v6098 = vsel %vm6096, %v6033, %v5345
  %v6099 = vsel %vm6096, %v6034, %v5347
  %v6100 = vsel %vm6096, %v6035, %v5349
  %v6101 = vsel %vm6096, %v6036, %v5351
  %v6102 = vsel %vm6096, %v6037, %v5353
  %v6103 = vsel %vm6096, %v6038, %v5355
  %v6104 = vsel %vm6096, %v6039, %v5357
  %v6105 = vsel %vm6096, %v6040, %v5359
  %v6106 = vsel %vm6096, %v6041, %v5361
  %v6107 = vsel %vm6096, %v6042, %v5363
  %v6108 = vsel %vm6096, %v6043, %v5365
  %v6109 = vsel %vm6096, %v6044, %v5367
  %v6110 = vsel %vm6096, %v6045, %v5369
  %v6111 = vsel %vm6096, %v6046, %v5371
  %v6112 = vsel %vm6096, %v6047, %v5373
  %v6113 = vsel %vm6096, %v6048, %v5375
  %v6114 = vsel %vm6096, %v6049, %v5377
  %v6115 = vsel %vm6096, %v6050, %v5379
  %v6116 = vsel %vm6096, %v6051, %v5381
  %v6117 = vsel %vm6096, %v6052, %v5383
  %v6118 = vsel %vm6096, %v6053, %v5385
  %v6119 = vsel %vm6096, %v6054, %v5387
  %v6120 = vsel %vm6096, %v6055, %v5389
  %v6121 = vsel %vm6096, %v6056, %v5391
  %v6122 = vsel %vm6096, %v6057, %v5393
  %v6123 = vsel %vm6096, %v6058, %v5395
  %v6124 = vsel %vm6096, %v6059, %v5397
  %v6125 = vsel %vm6096, %v6060, %v5399
  %v6126 = vsel %vm6096, %v6061, %v5401
  %v6127 = vsel %vm6096, %v6062, %v5403
  %v6128 = vsel %vm6096, %v6063, %v5405
  %v6129 = vsel %vm6096, %v6064, %v5407
  %v6130 = vsel %vm6096, %v6065, %v5409
  %v6131 = vsel %vm6096, %v6066, %v5411
  %v6132 = vsel %vm6096, %v6067, %v5413
  %v6133 = vsel %vm6096, %v6068, %v5415
  %v6134 = vsel %vm6096, %v6069, %v5417
  %v6135 = vsel %vm6096, %v6070, %v5419
  %v6136 = vsel %vm6096, %v6071, %v5421
  %v6137 = vsel %vm6096, %v6072, %v5423
  %v6138 = vsel %vm6096, %v6073, %v5425
  %v6139 = vsel %vm6096, %v6074, %v5427
  %v6140 = vsel %vm6096, %v6075, %v5429
  %v6141 = vsel %vm6096, %v6076, %v5431
  %v6142 = vsel %vm6096, %v6077, %v5433
  %v6143 = vsel %vm6096, %v6078, %v5435
  %v6144 = vsel %vm6096, %v6079, %v5437
  %v6145 = vsel %vm6096, %v6080, %v5439
  %v6146 = vsel %vm6096, %v6081, %v5441
  %v6147 = vsel %vm6096, %v6082, %v5443
  %v6148 = vsel %vm6096, %v6083, %v5445
  %v6149 = vsel %vm6096, %v6084, %v5447
  %v6150 = vsel %vm6096, %v6085, %v5449
  %v6151 = vsel %vm6096, %v6086, %v5451
  %v6152 = vsel %vm6096, %v6087, %v5453
  %v6153 = vsel %vm6096, %v6088, %v5455
  %v6154 = vsel %vm6096, %v6089, %v5457
  %v6155 = vsel %vm6096, %v6090, %v5459
  %v6156 = vsel %vm6096, %v6091, %v5461
  %v6157 = vsel %vm6096, %v6092, %v5463
  %v6158 = vsel %vm6096, %v6093, %v5465
  %v6159 = vsel %vm6096, %v6094, %v5403
  %v6160 = vsel %vm6096, %v6095, %v5405
  %vm6161 = vcmask 523264
  %v6162 = vsel %vm6161, %v6097, %v5529
  %v6163 = vsel %vm6161, %v6098, %v5531
  %v6164 = vsel %vm6161, %v6099, %v5533
  %v6165 = vsel %vm6161, %v6100, %v5535
  %v6166 = vsel %vm6161, %v6101, %v5537
  %v6167 = vsel %vm6161, %v6102, %v5539
  %v6168 = vsel %vm6161, %v6103, %v5541
  %v6169 = vsel %vm6161, %v6104, %v5543
  %v6170 = vsel %vm6161, %v6105, %v5545
  %v6171 = vsel %vm6161, %v6106, %v5547
  %v6172 = vsel %vm6161, %v6107, %v5549
  %v6173 = vsel %vm6161, %v6108, %v5551
  %v6174 = vsel %vm6161, %v6109, %v5553
  %v6175 = vsel %vm6161, %v6110, %v5555
  %v6176 = vsel %vm6161, %v6111, %v5557
  %v6177 = vsel %vm6161, %v6112, %v5559
  %v6178 = vsel %vm6161, %v6113, %v5561
  %v6179 = vsel %vm6161, %v6114, %v5563
  %v6180 = vsel %vm6161, %v6115, %v5565
  %v6181 = vsel %vm6161, %v6116, %v5567
  %v6182 = vsel %vm6161, %v6117, %v5569
  %v6183 = vsel %vm6161, %v6118, %v5571
  %v6184 = vsel %vm6161, %v6119, %v5573
  %v6185 = vsel %vm6161, %v6120, %v5575
  %v6186 = vsel %vm6161, %v6121, %v5577
  %v6187 = vsel %vm6161, %v6122, %v5579
  %v6188 = vsel %vm6161, %v6123, %v5581
  %v6189 = vsel %vm6161, %v6124, %v5583
  %v6190 = vsel %vm6161, %v6125, %v5585
  %v6191 = vsel %vm6161, %v6126, %v5587
  %v6192 = vsel %vm6161, %v6127, %v5589
  %v6193 = vsel %vm6161, %v6128, %v5591
  %v6194 = vsel %vm6161, %v6129, %v5593
  %v6195 = vsel %vm6161, %v6130, %v5595
  %v6196 = vsel %vm6161, %v6131, %v5597
  %v6197 = vsel %vm6161, %v6132, %v5599
  %v6198 = vsel %vm6161, %v6133, %v5601
  %v6199 = vsel %vm6161, %v6134, %v5603
  %v6200 = vsel %vm6161, %v6135, %v5605
  %v6201 = vsel %vm6161, %v6136, %v5607
  %v6202 = vsel %vm6161, %v6137, %v5609
  %v6203 = vsel %vm6161, %v6138, %v5611
  %v6204 = vsel %vm6161, %v6139, %v5613
  %v6205 = vsel %vm6161, %v6140, %v5615
  %v6206 = vsel %vm6161, %v6141, %v5617
  %v6207 = vsel %vm6161, %v6142, %v5619
  %v6208 = vsel %vm6161, %v6143, %v5621
  %v6209 = vsel %vm6161, %v6144, %v5623
  %v6210 = vsel %vm6161, %v6145, %v5625
  %v6211 = vsel %vm6161, %v6146, %v5627
  %v6212 = vsel %vm6161, %v6147, %v5629
  %v6213 = vsel %vm6161, %v6148, %v5631
  %v6214 = vsel %vm6161, %v6149, %v5633
  %v6215 = vsel %vm6161, %v6150, %v5635
  %v6216 = vsel %vm6161, %v6151, %v5637
  %v6217 = vsel %vm6161, %v6152, %v5639
  %v6218 = vsel %vm6161, %v6153, %v5641
  %v6219 = vsel %vm6161, %v6154, %v5643
  %v6220 = vsel %vm6161, %v6155, %v5645
  %v6221 = vsel %vm6161, %v6156, %v5647
  %v6222 = vsel %vm6161, %v6157, %v5649
  %v6223 = vsel %vm6161, %v6158, %v5651
  %v6224 = vsel %vm6161, %v6159, %v5589
  %v6225 = vsel %vm6161, %v6160, %v5591
  %v6226 = vld [vmem:[%s3] sm:$0xff]
  %v6227 = vld [vmem:[%s3 + $0x8] sm:$0xff]
  %v6228 = vld [vmem:[%s3 + $0x10] sm:$0xff]
  %v6229 = vld [vmem:[%s3 + $0x18] sm:$0xff]
  %v6230 = vld [vmem:[%s3 + $0x20] sm:$0xff]
  %v6231 = vld [vmem:[%s3 + $0x28] sm:$0xff]
  %v6232 = vld [vmem:[%s3 + $0x30] sm:$0xff]
  %v6233 = vld [vmem:[%s3 + $0x38] sm:$0xff]
  %v6234 = vld [vmem:[%s3 + $0x40] sm:$0xff]
  %v6235 = vld [vmem:[%s4] sm:$0x1]
  %v6237 = vlaneseq
  %v6238 = vshrl.u32 %v6237, 7
  %v6239 = vsub.s32 0, %v6238
  %v6240 = vrot.slane %v6235, %v6239
  %vm6242 = vcmask 588800
  %v6244 = vsel %vm6242, %v6162, 0
  %v6247 = vsel %vm6242, %v6163, 0
  %v6250 = vsel %vm6242, %v6164, 0
  %v6253 = vsel %vm6242, %v6165, 0
  %v6256 = vsel %vm6242, %v6166, 0
  %v6259 = vsel %vm6242, %v6167, 0
  %v6262 = vsel %vm6242, %v6168, 0
  %v6265 = vsel %vm6242, %v6169, 0
  %v6268 = vsel %vm6242, %v6170, 0
  %v6271 = vsel %vm6242, %v6171, 0
  %v6274 = vsel %vm6242, %v6172, 0
  %v6277 = vsel %vm6242, %v6173, 0
  %v6280 = vsel %vm6242, %v6174, 0
  %v6283 = vsel %vm6242, %v6175, 0
  %v6286 = vsel %vm6242, %v6176, 0
  %v6289 = vsel %vm6242, %v6177, 0
  %v6292 = vsel %vm6242, %v6178, 0
  %v6295 = vsel %vm6242, %v6179, 0
  %v6298 = vsel %vm6242, %v6180, 0
  %v6301 = vsel %vm6242, %v6181, 0
  %v6304 = vsel %vm6242, %v6182, 0
  %v6307 = vsel %vm6242, %v6183, 0
  %v6310 = vsel %vm6242, %v6184, 0
  %v6313 = vsel %vm6242, %v6185, 0
  %v6316 = vsel %vm6242, %v6186, 0
  %v6319 = vsel %vm6242, %v6187, 0
  %v6322 = vsel %vm6242, %v6188, 0
  %v6325 = vsel %vm6242, %v6189, 0
  %v6328 = vsel %vm6242, %v6190, 0
  %v6331 = vsel %vm6242, %v6191, 0
  %v6334 = vsel %vm6242, %v6192, 0
  %v6337 = vsel %vm6242, %v6193, 0
  %v6340 = vsel %vm6242, %v6194, 0
  %v6343 = vsel %vm6242, %v6195, 0
  %v6346 = vsel %vm6242, %v6196, 0
  %v6349 = vsel %vm6242, %v6197, 0
  %v6352 = vsel %vm6242, %v6198, 0
  %v6355 = vsel %vm6242, %v6199, 0
  %v6358 = vsel %vm6242, %v6200, 0
  %v6361 = vsel %vm6242, %v6201, 0
  %v6364 = vsel %vm6242, %v6202, 0
  %v6367 = vsel %vm6242, %v6203, 0
  %v6370 = vsel %vm6242, %v6204, 0
  %v6373 = vsel %vm6242, %v6205, 0
  %v6376 = vsel %vm6242, %v6206, 0
  %v6379 = vsel %vm6242, %v6207, 0
  %v6382 = vsel %vm6242, %v6208, 0
  %v6385 = vsel %vm6242, %v6209, 0
  %v6388 = vsel %vm6242, %v6210, 0
  %v6391 = vsel %vm6242, %v6211, 0
  %v6394 = vsel %vm6242, %v6212, 0
  %v6397 = vsel %vm6242, %v6213, 0
  %v6400 = vsel %vm6242, %v6214, 0
  %v6403 = vsel %vm6242, %v6215, 0
  %v6406 = vsel %vm6242, %v6216, 0
  %v6409 = vsel %vm6242, %v6217, 0
  %v6412 = vsel %vm6242, %v6218, 0
  %v6415 = vsel %vm6242, %v6219, 0
  %v6418 = vsel %vm6242, %v6220, 0
  %v6421 = vsel %vm6242, %v6221, 0
  %v6424 = vsel %vm6242, %v6222, 0
  %v6427 = vsel %vm6242, %v6223, 0
  %v6430 = vsel %vm6242, %v6224, 0
  %v6433 = vsel %vm6242, %v6225, 0
  %6435 = vmatprep.subr.mxu0 0.0
  %6436 = vmatpush1.msra.mxu0 %v6226
  %6437 = vmatprep.subr.mxu0 0.0
  %6438 = vmatpush1.msra.mxu0 %v6227
  %6439 = vmatprep.subr.mxu0 0.0
  %6440 = vmatpush1.msra.mxu0 %v6228
  %6441 = vmatprep.subr.mxu0 0.0
  %6442 = vmatpush1.msra.mxu0 %v6229
  %6443 = vmatprep.subr.mxu0 0.0
  %6444 = vmatpush1.msra.mxu0 %v6230
  %6445 = vmatprep.subr.mxu0 0.0
  %6446 = vmatpush1.msra.mxu0 %v6231
  %6447 = vmatprep.subr.mxu0 0.0
  %6448 = vmatpush1.msra.mxu0 %v6232
  %6449 = vmatprep.subr.mxu0 0.0
  %6450 = vmatpush1.msra.mxu0 %v6233
  %6451 = vmatprep.subr.mxu0 0.0
  %6452 = vmatpush1.msra.mxu0 %v6234
  %6453 = vmatprep.subr.mxu0 0.0
  %6454 = vmatpush1.msra.mxu0 0.0
  %6455 = vmatprep.subr.mxu0 0.0
  %6456 = vmatpush1.msra.mxu0 0.0
  %6457 = vmatprep.subr.mxu0 0.0
  %6458 = vmatpush1.msra.mxu0 0.0
  %6459 = vmatprep.subr.mxu0 0.0
  %6460 = vmatpush1.msra.mxu0 0.0
  %6461 = vmatprep.subr.mxu0 0.0
  %6462 = vmatpush1.msra.mxu0 0.0
  %6463 = vmatprep.subr.mxu0 0.0
  %6464 = vmatpush1.msra.mxu0 0.0
  %6465 = vmatprep.subr.mxu0 0.0
  %6466 = vmatpush1.msra.mxu0 0.0
  %6467 = vmatprep.subr.mxu0 0.0
  %6468 = vmatpush1.msra.mxu0 0.0
  %6469 = vmatprep.subr.mxu0 0.0
  %6470 = vmatpush1.msra.mxu0 0.0
  %6471 = vmatprep.subr.mxu0 0.0
  %6472 = vmatpush1.msra.mxu0 0.0
  %6473 = vmatprep.subr.mxu0 0.0
  %6474 = vmatpush1.msra.mxu0 0.0
  %6475 = vmatprep.subr.mxu0 0.0
  %6476 = vmatpush1.msra.mxu0 0.0
  %6477 = vmatprep.subr.mxu0 0.0
  %6478 = vmatpush1.msra.mxu0 0.0
  %6479 = vmatprep.subr.mxu0 0.0
  %6480 = vmatpush1.msra.mxu0 0.0
  %6481 = vmatprep.subr.mxu0 0.0
  %6482 = vmatpush1.msra.mxu0 0.0
  %6483 = vmatprep.subr.mxu0 0.0
  %6484 = vmatpush1.msra.mxu0 0.0
  %6485 = vmatprep.subr.mxu0 0.0
  %6486 = vmatpush1.msra.mxu0 0.0
  %6487 = vmatprep.subr.mxu0 0.0
  %6488 = vmatpush1.msra.mxu0 0.0
  %6489 = vmatprep.subr.mxu0 0.0
  %6490 = vmatpush1.msra.mxu0 0.0
  %6491 = vmatprep.subr.mxu0 0.0
  %6492 = vmatpush1.msra.mxu0 0.0
  %6493 = vmatprep.subr.mxu0 0.0
  %6494 = vmatpush1.msra.mxu0 0.0
  %6495 = vmatprep.subr.mxu0 0.0
  %6496 = vmatpush1.msra.mxu0 0.0
  %6497 = vmatprep.subr.mxu0 0.0
  %6498 = vmatpush1.msra.mxu0 0.0
  %6499 = vmatprep.mubr.f32.mxu0 0.0
  %6500 = vmatmul.mubr.f32.gmra.mrb[0].mxu0 %v6244
  %v6501 = vpop.f32.mrb[0].mxu0
  %v6502 = vadd.f32 %v6240, %v6501
  %v6503 = vpop.f32.mrb[0].mxu0
  %6504 = vmatprep.mubr.f32.mxu0 0.0
  %6505 = vmatmul.mubr.f32.gmra.mrb[0].mxu0 %v6247
  %v6506 = vpop.f32.mrb[0].mxu0
  %v6507 = vadd.f32 %v6240, %v6506
  %v6508 = vpop.f32.mrb[0].mxu0
  %6509 = vmatprep.mubr.f32.mxu0 0.0
  %6510 = vmatmul.mubr.f32.gmra.mrb[0].mxu0 %v6250
  %v6511 = vpop.f32.mrb[0].mxu0
  %v6512 = vadd.f32 %v6240, %v6511
  %v6513 = vpop.f32.mrb[0].mxu0
  %6514 = vmatprep.mubr.f32.mxu0 0.0
  %6515 = vmatmul.mubr.f32.gmra.mrb[0].mxu0 %v6253
  %v6516 = vpop.f32.mrb[0].mxu0
  %v6517 = vadd.f32 %v6240, %v6516
  %v6518 = vpop.f32.mrb[0].mxu0
  %6519 = vmatprep.mubr.f32.mxu0 0.0
  %6520 = vmatmul.mubr.f32.gmra.mrb[0].mxu0 %v6256
  %v6521 = vpop.f32.mrb[0].mxu0
  %v6522 = vadd.f32 %v6240, %v6521
  %v6523 = vpop.f32.mrb[0].mxu0
  %6524 = vmatprep.mubr.f32.mxu0 0.0
  %6525 = vmatmul.mubr.f32.gmra.mrb[0].mxu0 %v6259
  %v6526 = vpop.f32.mrb[0].mxu0
  %v6527 = vadd.f32 %v6240, %v6526
  %v6528 = vpop.f32.mrb[0].mxu0
  %6529 = vmatprep.mubr.f32.mxu0 0.0
  %6530 = vmatmul.mubr.f32.gmra.mrb[0].mxu0 %v6262
  %v6531 = vpop.f32.mrb[0].mxu0
  %v6532 = vadd.f32 %v6240, %v6531
  %v6533 = vpop.f32.mrb[0].mxu0
  %6534 = vmatprep.mubr.f32.mxu0 0.0
  %6535 = vmatmul.mubr.f32.gmra.mrb[0].mxu0 %v6265
  %v6536 = vpop.f32.mrb[0].mxu0
  %v6537 = vadd.f32 %v6240, %v6536
  %v6538 = vpop.f32.mrb[0].mxu0
  %6539 = vmatprep.mubr.f32.mxu0 0.0
  %6540 = vmatmul.mubr.f32.gmra.mrb[0].mxu0 %v6268
  %v6541 = vpop.f32.mrb[0].mxu0
  %v6542 = vadd.f32 %v6240, %v6541
  %v6543 = vpop.f32.mrb[0].mxu0
  %6544 = vmatprep.mubr.f32.mxu0 0.0
  %6545 = vmatmul.mubr.f32.gmra.mrb[0].mxu0 %v6271
  %v6546 = vpop.f32.mrb[0].mxu0
  %v6547 = vadd.f32 %v6240, %v6546
  %v6548 = vpop.f32.mrb[0].mxu0
  %6549 = vmatprep.mubr.f32.mxu0 0.0
  %6550 = vmatmul.mubr.f32.gmra.mrb[0].mxu0 %v6274
  %v6551 = vpop.f32.mrb[0].mxu0
  %v6552 = vadd.f32 %v6240, %v6551
  %v6553 = vpop.f32.mrb[0].mxu0
  %6554 = vmatprep.mubr.f32.mxu0 0.0
  %6555 = vmatmul.mubr.f32.gmra.mrb[0].mxu0 %v6277
  %v6556 = vpop.f32.mrb[0].mxu0
  %v6557 = vadd.f32 %v6240, %v6556
  %v6558 = vpop.f32.mrb[0].mxu0
  %6559 = vmatprep.mubr.f32.mxu0 0.0
  %6560 = vmatmul.mubr.f32.gmra.mrb[0].mxu0 %v6280
  %v6561 = vpop.f32.mrb[0].mxu0
  %v6562 = vadd.f32 %v6240, %v6561
  %v6563 = vpop.f32.mrb[0].mxu0
  %6564 = vmatprep.mubr.f32.mxu0 0.0
  %6565 = vmatmul.mubr.f32.gmra.mrb[0].mxu0 %v6283
  %v6566 = vpop.f32.mrb[0].mxu0
  %v6567 = vadd.f32 %v6240, %v6566
  %v6568 = vpop.f32.mrb[0].mxu0
  %6569 = vmatprep.mubr.f32.mxu0 0.0
  %6570 = vmatmul.mubr.f32.gmra.mrb[0].mxu0 %v6286
  %v6571 = vpop.f32.mrb[0].mxu0
  %v6572 = vadd.f32 %v6240, %v6571
  %v6573 = vpop.f32.mrb[0].mxu0
  %6574 = vmatprep.mubr.f32.mxu0 0.0
  %6575 = vmatmul.mubr.f32.gmra.mrb[0].mxu0 %v6289
  %v6576 = vpop.f32.mrb[0].mxu0
  %v6577 = vadd.f32 %v6240, %v6576
  %v6578 = vpop.f32.mrb[0].mxu0
  %6579 = vmatprep.mubr.f32.mxu0 0.0
  %6580 = vmatmul.mubr.f32.gmra.mrb[0].mxu0 %v6292
  %v6581 = vpop.f32.mrb[0].mxu0
  %v6582 = vadd.f32 %v6240, %v6581
  %v6583 = vpop.f32.mrb[0].mxu0
  %6584 = vmatprep.mubr.f32.mxu0 0.0
  %6585 = vmatmul.mubr.f32.gmra.mrb[0].mxu0 %v6295
  %v6586 = vpop.f32.mrb[0].mxu0
  %v6587 = vadd.f32 %v6240, %v6586
  %v6588 = vpop.f32.mrb[0].mxu0
  %6589 = vmatprep.mubr.f32.mxu0 0.0
  %6590 = vmatmul.mubr.f32.gmra.mrb[0].mxu0 %v6298
  %v6591 = vpop.f32.mrb[0].mxu0
  %v6592 = vadd.f32 %v6240, %v6591
  %v6593 = vpop.f32.mrb[0].mxu0
  %6594 = vmatprep.mubr.f32.mxu0 0.0
  %6595 = vmatmul.mubr.f32.gmra.mrb[0].mxu0 %v6301
  %v6596 = vpop.f32.mrb[0].mxu0
  %v6597 = vadd.f32 %v6240, %v6596
  %v6598 = vpop.f32.mrb[0].mxu0
  %6599 = vmatprep.mubr.f32.mxu0 0.0
  %6600 = vmatmul.mubr.f32.gmra.mrb[0].mxu0 %v6304
  %v6601 = vpop.f32.mrb[0].mxu0
  %v6602 = vadd.f32 %v6240, %v6601
  %v6603 = vpop.f32.mrb[0].mxu0
  %6604 = vmatprep.mubr.f32.mxu0 0.0
  %6605 = vmatmul.mubr.f32.gmra.mrb[0].mxu0 %v6307
  %v6606 = vpop.f32.mrb[0].mxu0
  %v6607 = vadd.f32 %v6240, %v6606
  %v6608 = vpop.f32.mrb[0].mxu0
  %6609 = vmatprep.mubr.f32.mxu0 0.0
  %6610 = vmatmul.mubr.f32.gmra.mrb[0].mxu0 %v6310
  %v6611 = vpop.f32.mrb[0].mxu0
  %v6612 = vadd.f32 %v6240, %v6611
  %v6613 = vpop.f32.mrb[0].mxu0
  %6614 = vmatprep.mubr.f32.mxu0 0.0
  %6615 = vmatmul.mubr.f32.gmra.mrb[0].mxu0 %v6313
  %v6616 = vpop.f32.mrb[0].mxu0
  %v6617 = vadd.f32 %v6240, %v6616
  %v6618 = vpop.f32.mrb[0].mxu0
  %6619 = vmatprep.mubr.f32.mxu0 0.0
  %6620 = vmatmul.mubr.f32.gmra.mrb[0].mxu0 %v6316
  %v6621 = vpop.f32.mrb[0].mxu0
  %v6622 = vadd.f32 %v6240, %v6621
  %v6623 = vpop.f32.mrb[0].mxu0
  %6624 = vmatprep.mubr.f32.mxu0 0.0
  %6625 = vmatmul.mubr.f32.gmra.mrb[0].mxu0 %v6319
  %v6626 = vpop.f32.mrb[0].mxu0
  %v6627 = vadd.f32 %v6240, %v6626
  %v6628 = vpop.f32.mrb[0].mxu0
  %6629 = vmatprep.mubr.f32.mxu0 0.0
  %6630 = vmatmul.mubr.f32.gmra.mrb[0].mxu0 %v6322
  %v6631 = vpop.f32.mrb[0].mxu0
  %v6632 = vadd.f32 %v6240, %v6631
  %v6633 = vpop.f32.mrb[0].mxu0
  %6634 = vmatprep.mubr.f32.mxu0 0.0
  %6635 = vmatmul.mubr.f32.gmra.mrb[0].mxu0 %v6325
  %v6636 = vpop.f32.mrb[0].mxu0
  %v6637 = vadd.f32 %v6240, %v6636
  %v6638 = vpop.f32.mrb[0].mxu0
  %6639 = vmatprep.mubr.f32.mxu0 0.0
  %6640 = vmatmul.mubr.f32.gmra.mrb[0].mxu0 %v6328
  %v6641 = vpop.f32.mrb[0].mxu0
  %v6642 = vadd.f32 %v6240, %v6641
  %v6643 = vpop.f32.mrb[0].mxu0
  %6644 = vmatprep.mubr.f32.mxu0 0.0
  %6645 = vmatmul.mubr.f32.gmra.mrb[0].mxu0 %v6331
  %v6646 = vpop.f32.mrb[0].mxu0
  %v6647 = vadd.f32 %v6240, %v6646
  %v6648 = vpop.f32.mrb[0].mxu0
  %6649 = vmatprep.mubr.f32.mxu0 0.0
  %6650 = vmatmul.mubr.f32.gmra.mrb[0].mxu0 %v6334
  %v6651 = vpop.f32.mrb[0].mxu0
  %v6652 = vadd.f32 %v6240, %v6651
  %v6653 = vpop.f32.mrb[0].mxu0
  %6654 = vmatprep.mubr.f32.mxu0 0.0
  %6655 = vmatmul.mubr.f32.gmra.mrb[0].mxu0 %v6337
  %v6656 = vpop.f32.mrb[0].mxu0
  %v6657 = vadd.f32 %v6240, %v6656
  %v6658 = vpop.f32.mrb[0].mxu0
  %6659 = vmatprep.mubr.f32.mxu0 0.0
  %6660 = vmatmul.mubr.f32.gmra.mrb[0].mxu0 %v6340
  %v6661 = vpop.f32.mrb[0].mxu0
  %v6662 = vadd.f32 %v6240, %v6661
  %v6663 = vpop.f32.mrb[0].mxu0
  %6664 = vmatprep.mubr.f32.mxu0 0.0
  %6665 = vmatmul.mubr.f32.gmra.mrb[0].mxu0 %v6343
  %v6666 = vpop.f32.mrb[0].mxu0
  %v6667 = vadd.f32 %v6240, %v6666
  %v6668 = vpop.f32.mrb[0].mxu0
  %6669 = vmatprep.mubr.f32.mxu0 0.0
  %6670 = vmatmul.mubr.f32.gmra.mrb[0].mxu0 %v6346
  %v6671 = vpop.f32.mrb[0].mxu0
  %v6672 = vadd.f32 %v6240, %v6671
  %v6673 = vpop.f32.mrb[0].mxu0
  %6674 = vmatprep.mubr.f32.mxu0 0.0
  %6675 = vmatmul.mubr.f32.gmra.mrb[0].mxu0 %v6349
  %v6676 = vpop.f32.mrb[0].mxu0
  %v6677 = vadd.f32 %v6240, %v6676
  %v6678 = vpop.f32.mrb[0].mxu0
  %6679 = vmatprep.mubr.f32.mxu0 0.0
  %6680 = vmatmul.mubr.f32.gmra.mrb[0].mxu0 %v6352
  %v6681 = vpop.f32.mrb[0].mxu0
  %v6682 = vadd.f32 %v6240, %v6681
  %v6683 = vpop.f32.mrb[0].mxu0
  %6684 = vmatprep.mubr.f32.mxu0 0.0
  %6685 = vmatmul.mubr.f32.gmra.mrb[0].mxu0 %v6355
  %v6686 = vpop.f32.mrb[0].mxu0
  %v6687 = vadd.f32 %v6240, %v6686
  %v6688 = vpop.f32.mrb[0].mxu0
  %6689 = vmatprep.mubr.f32.mxu0 0.0
  %6690 = vmatmul.mubr.f32.gmra.mrb[0].mxu0 %v6358
  %v6691 = vpop.f32.mrb[0].mxu0
  %v6692 = vadd.f32 %v6240, %v6691
  %v6693 = vpop.f32.mrb[0].mxu0
  %6694 = vmatprep.mubr.f32.mxu0 0.0
  %6695 = vmatmul.mubr.f32.gmra.mrb[0].mxu0 %v6361
  %v6696 = vpop.f32.mrb[0].mxu0
  %v6697 = vadd.f32 %v6240, %v6696
  %v6698 = vpop.f32.mrb[0].mxu0
  %6699 = vmatprep.mubr.f32.mxu0 0.0
  %6700 = vmatmul.mubr.f32.gmra.mrb[0].mxu0 %v6364
  %v6701 = vpop.f32.mrb[0].mxu0
  %v6702 = vadd.f32 %v6240, %v6701
  %v6703 = vpop.f32.mrb[0].mxu0
  %6704 = vmatprep.mubr.f32.mxu0 0.0
  %6705 = vmatmul.mubr.f32.gmra.mrb[0].mxu0 %v6367
  %v6706 = vpop.f32.mrb[0].mxu0
  %v6707 = vadd.f32 %v6240, %v6706
  %v6708 = vpop.f32.mrb[0].mxu0
  %6709 = vmatprep.mubr.f32.mxu0 0.0
  %6710 = vmatmul.mubr.f32.gmra.mrb[0].mxu0 %v6370
  %v6711 = vpop.f32.mrb[0].mxu0
  %v6712 = vadd.f32 %v6240, %v6711
  %v6713 = vpop.f32.mrb[0].mxu0
  %6714 = vmatprep.mubr.f32.mxu0 0.0
  %6715 = vmatmul.mubr.f32.gmra.mrb[0].mxu0 %v6373
  %v6716 = vpop.f32.mrb[0].mxu0
  %v6717 = vadd.f32 %v6240, %v6716
  %v6718 = vpop.f32.mrb[0].mxu0
  %6719 = vmatprep.mubr.f32.mxu0 0.0
  %6720 = vmatmul.mubr.f32.gmra.mrb[0].mxu0 %v6376
  %v6721 = vpop.f32.mrb[0].mxu0
  %v6722 = vadd.f32 %v6240, %v6721
  %v6723 = vpop.f32.mrb[0].mxu0
  %6724 = vmatprep.mubr.f32.mxu0 0.0
  %6725 = vmatmul.mubr.f32.gmra.mrb[0].mxu0 %v6379
  %v6726 = vpop.f32.mrb[0].mxu0
  %v6727 = vadd.f32 %v6240, %v6726
  %v6728 = vpop.f32.mrb[0].mxu0
  %6729 = vmatprep.mubr.f32.mxu0 0.0
  %6730 = vmatmul.mubr.f32.gmra.mrb[0].mxu0 %v6382
  %v6731 = vpop.f32.mrb[0].mxu0
  %v6732 = vadd.f32 %v6240, %v6731
  %v6733 = vpop.f32.mrb[0].mxu0
  %6734 = vmatprep.mubr.f32.mxu0 0.0
  %6735 = vmatmul.mubr.f32.gmra.mrb[0].mxu0 %v6385
  %v6736 = vpop.f32.mrb[0].mxu0
  %v6737 = vadd.f32 %v6240, %v6736
  %v6738 = vpop.f32.mrb[0].mxu0
  %6739 = vmatprep.mubr.f32.mxu0 0.0
  %6740 = vmatmul.mubr.f32.gmra.mrb[0].mxu0 %v6388
  %v6741 = vpop.f32.mrb[0].mxu0
  %v6742 = vadd.f32 %v6240, %v6741
  %v6743 = vpop.f32.mrb[0].mxu0
  %6744 = vmatprep.mubr.f32.mxu0 0.0
  %6745 = vmatmul.mubr.f32.gmra.mrb[0].mxu0 %v6391
  %v6746 = vpop.f32.mrb[0].mxu0
  %v6747 = vadd.f32 %v6240, %v6746
  %v6748 = vpop.f32.mrb[0].mxu0
  %6749 = vmatprep.mubr.f32.mxu0 0.0
  %6750 = vmatmul.mubr.f32.gmra.mrb[0].mxu0 %v6394
  %v6751 = vpop.f32.mrb[0].mxu0
  %v6752 = vadd.f32 %v6240, %v6751
  %v6753 = vpop.f32.mrb[0].mxu0
  %6754 = vmatprep.mubr.f32.mxu0 0.0
  %6755 = vmatmul.mubr.f32.gmra.mrb[0].mxu0 %v6397
  %v6756 = vpop.f32.mrb[0].mxu0
  %v6757 = vadd.f32 %v6240, %v6756
  %v6758 = vpop.f32.mrb[0].mxu0
  %6759 = vmatprep.mubr.f32.mxu0 0.0
  %6760 = vmatmul.mubr.f32.gmra.mrb[0].mxu0 %v6400
  %v6761 = vpop.f32.mrb[0].mxu0
  %v6762 = vadd.f32 %v6240, %v6761
  %v6763 = vpop.f32.mrb[0].mxu0
  %6764 = vmatprep.mubr.f32.mxu0 0.0
  %6765 = vmatmul.mubr.f32.gmra.mrb[0].mxu0 %v6403
  %v6766 = vpop.f32.mrb[0].mxu0
  %v6767 = vadd.f32 %v6240, %v6766
  %v6768 = vpop.f32.mrb[0].mxu0
  %6769 = vmatprep.mubr.f32.mxu0 0.0
  %6770 = vmatmul.mubr.f32.gmra.mrb[0].mxu0 %v6406
  %v6771 = vpop.f32.mrb[0].mxu0
  %v6772 = vadd.f32 %v6240, %v6771
  %v6773 = vpop.f32.mrb[0].mxu0
  %6774 = vmatprep.mubr.f32.mxu0 0.0
  %6775 = vmatmul.mubr.f32.gmra.mrb[0].mxu0 %v6409
  %v6776 = vpop.f32.mrb[0].mxu0
  %v6777 = vadd.f32 %v6240, %v6776
  %v6778 = vpop.f32.mrb[0].mxu0
  %6779 = vmatprep.mubr.f32.mxu0 0.0
  %6780 = vmatmul.mubr.f32.gmra.mrb[0].mxu0 %v6412
  %v6781 = vpop.f32.mrb[0].mxu0
  %v6782 = vadd.f32 %v6240, %v6781
  %v6783 = vpop.f32.mrb[0].mxu0
  %6784 = vmatprep.mubr.f32.mxu0 0.0
  %6785 = vmatmul.mubr.f32.gmra.mrb[0].mxu0 %v6415
  %v6786 = vpop.f32.mrb[0].mxu0
  %v6787 = vadd.f32 %v6240, %v6786
  %v6788 = vpop.f32.mrb[0].mxu0
  %6789 = vmatprep.mubr.f32.mxu0 0.0
  %6790 = vmatmul.mubr.f32.gmra.mrb[0].mxu0 %v6418
  %v6791 = vpop.f32.mrb[0].mxu0
  %v6792 = vadd.f32 %v6240, %v6791
  %v6793 = vpop.f32.mrb[0].mxu0
  %6794 = vmatprep.mubr.f32.mxu0 0.0
  %6795 = vmatmul.mubr.f32.gmra.mrb[0].mxu0 %v6421
  %v6796 = vpop.f32.mrb[0].mxu0
  %v6797 = vadd.f32 %v6240, %v6796
  %v6798 = vpop.f32.mrb[0].mxu0
  %6799 = vmatprep.mubr.f32.mxu0 0.0
  %6800 = vmatmul.mubr.f32.gmra.mrb[0].mxu0 %v6424
  %v6801 = vpop.f32.mrb[0].mxu0
  %v6802 = vadd.f32 %v6240, %v6801
  %v6803 = vpop.f32.mrb[0].mxu0
  %6804 = vmatprep.mubr.f32.mxu0 0.0
  %6805 = vmatmul.mubr.f32.gmra.mrb[0].mxu0 %v6427
  %v6806 = vpop.f32.mrb[0].mxu0
  %v6807 = vadd.f32 %v6240, %v6806
  %v6808 = vpop.f32.mrb[0].mxu0
  %6809 = vmatprep.mubr.f32.mxu0 0.0
  %6810 = vmatmul.mubr.f32.gmra.mrb[0].mxu0 %v6430
  %v6811 = vpop.f32.mrb[0].mxu0
  %v6812 = vadd.f32 %v6240, %v6811
  %v6813 = vpop.f32.mrb[0].mxu0
  %6814 = vmatprep.mubr.f32.mxu0 0.0
  %6815 = vmatmul.mubr.f32.gmra.mrb[0].mxu0 %v6433
  %v6816 = vpop.f32.mrb[0].mxu0
  %v6817 = vadd.f32 %v6240, %v6816
  %v6818 = vpop.f32.mrb[0].mxu0
  %6819 = vdwg.mxu0
  %v6820 = vmax.f32 %v6502, 0.0
  %v6821 = vmax.f32 %v6507, 0.0
  %v6822 = vmax.f32 %v6512, 0.0
  %v6823 = vmax.f32 %v6517, 0.0
  %v6824 = vmax.f32 %v6522, 0.0
  %v6825 = vmax.f32 %v6527, 0.0
  %v6826 = vmax.f32 %v6532, 0.0
  %v6827 = vmax.f32 %v6537, 0.0
  %v6828 = vmax.f32 %v6542, 0.0
  %v6829 = vmax.f32 %v6547, 0.0
  %v6830 = vmax.f32 %v6552, 0.0
  %v6831 = vmax.f32 %v6557, 0.0
  %v6832 = vmax.f32 %v6562, 0.0
  %v6833 = vmax.f32 %v6567, 0.0
  %v6834 = vmax.f32 %v6572, 0.0
  %v6835 = vmax.f32 %v6577, 0.0
  %v6836 = vmax.f32 %v6582, 0.0
  %v6837 = vmax.f32 %v6587, 0.0
  %v6838 = vmax.f32 %v6592, 0.0
  %v6839 = vmax.f32 %v6597, 0.0
  %v6840 = vmax.f32 %v6602, 0.0
  %v6841 = vmax.f32 %v6607, 0.0
  %v6842 = vmax.f32 %v6612, 0.0
  %v6843 = vmax.f32 %v6617, 0.0
  %v6844 = vmax.f32 %v6622, 0.0
  %v6845 = vmax.f32 %v6627, 0.0
  %v6846 = vmax.f32 %v6632, 0.0
  %v6847 = vmax.f32 %v6637, 0.0
  %v6848 = vmax.f32 %v6642, 0.0
  %v6849 = vmax.f32 %v6647, 0.0
  %v6850 = vmax.f32 %v6652, 0.0
  %v6851 = vmax.f32 %v6657, 0.0
  %v6852 = vmax.f32 %v6662, 0.0
  %v6853 = vmax.f32 %v6667, 0.0
  %v6854 = vmax.f32 %v6672, 0.0
  %v6855 = vmax.f32 %v6677, 0.0
  %v6856 = vmax.f32 %v6682, 0.0
  %v6857 = vmax.f32 %v6687, 0.0
  %v6858 = vmax.f32 %v6692, 0.0
  %v6859 = vmax.f32 %v6697, 0.0
  %v6860 = vmax.f32 %v6702, 0.0
  %v6861 = vmax.f32 %v6707, 0.0
  %v6862 = vmax.f32 %v6712, 0.0
  %v6863 = vmax.f32 %v6717, 0.0
  %v6864 = vmax.f32 %v6722, 0.0
  %v6865 = vmax.f32 %v6727, 0.0
  %v6866 = vmax.f32 %v6732, 0.0
  %v6867 = vmax.f32 %v6737, 0.0
  %v6868 = vmax.f32 %v6742, 0.0
  %v6869 = vmax.f32 %v6747, 0.0
  %v6870 = vmax.f32 %v6752, 0.0
  %v6871 = vmax.f32 %v6757, 0.0
  %v6872 = vmax.f32 %v6762, 0.0
  %v6873 = vmax.f32 %v6767, 0.0
  %v6874 = vmax.f32 %v6772, 0.0
  %v6875 = vmax.f32 %v6777, 0.0
  %v6876 = vmax.f32 %v6782, 0.0
  %v6877 = vmax.f32 %v6787, 0.0
  %v6878 = vmax.f32 %v6792, 0.0
  %v6879 = vmax.f32 %v6797, 0.0
  %v6880 = vmax.f32 %v6802, 0.0
  %v6881 = vmax.f32 %v6807, 0.0
  %v6882 = vmax.f32 %v6812, 0.0
  %v6883 = vmax.f32 %v6817, 0.0
  %v6884 = vsel %vm2523, %v6820, 0.0
  %v6885 = vsel %vm2523, %v6821, 0.0
  %v6886 = vadd.f32 %v6884, %v6885
  %v6887 = vsel %vm2523, %v6822, 0.0
  %v6888 = vadd.f32 %v6886, %v6887
  %v6889 = vsel %vm2523, %v6823, 0.0
  %v6890 = vadd.f32 %v6888, %v6889
  %v6891 = vsel %vm2523, %v6824, 0.0
  %v6892 = vadd.f32 %v6890, %v6891
  %v6893 = vsel %vm2523, %v6825, 0.0
  %v6894 = vadd.f32 %v6892, %v6893
  %v6895 = vsel %vm2523, %v6826, 0.0
  %v6896 = vadd.f32 %v6894, %v6895
  %v6897 = vsel %vm2523, %v6827, 0.0
  %v6898 = vadd.f32 %v6896, %v6897
  %v6899 = vsel %vm2523, %v6828, 0.0
  %v6900 = vadd.f32 %v6898, %v6899
  %v6901 = vsel %vm2523, %v6829, 0.0
  %v6902 = vadd.f32 %v6900, %v6901
  %v6903 = vsel %vm2523, %v6830, 0.0
  %v6904 = vadd.f32 %v6902, %v6903
  %v6905 = vsel %vm2523, %v6831, 0.0
  %v6906 = vadd.f32 %v6904, %v6905
  %v6907 = vsel %vm2523, %v6832, 0.0
  %v6908 = vadd.f32 %v6906, %v6907
  %v6909 = vsel %vm2523, %v6833, 0.0
  %v6910 = vadd.f32 %v6908, %v6909
  %v6911 = vsel %vm2523, %v6834, 0.0
  %v6912 = vadd.f32 %v6910, %v6911
  %v6913 = vsel %vm2523, %v6835, 0.0
  %v6914 = vadd.f32 %v6912, %v6913
  %v6915 = vsel %vm2523, %v6836, 0.0
  %v6916 = vadd.f32 %v6914, %v6915
  %v6917 = vsel %vm2523, %v6837, 0.0
  %v6918 = vadd.f32 %v6916, %v6917
  %v6919 = vsel %vm2523, %v6838, 0.0
  %v6920 = vadd.f32 %v6918, %v6919
  %v6921 = vsel %vm2523, %v6839, 0.0
  %v6922 = vadd.f32 %v6920, %v6921
  %v6923 = vsel %vm2523, %v6840, 0.0
  %v6924 = vadd.f32 %v6922, %v6923
  %v6925 = vsel %vm2523, %v6841, 0.0
  %v6926 = vadd.f32 %v6924, %v6925
  %v6927 = vsel %vm2523, %v6842, 0.0
  %v6928 = vadd.f32 %v6926, %v6927
  %v6929 = vsel %vm2523, %v6843, 0.0
  %v6930 = vadd.f32 %v6928, %v6929
  %v6931 = vsel %vm2523, %v6844, 0.0
  %v6932 = vadd.f32 %v6930, %v6931
  %v6933 = vsel %vm2523, %v6845, 0.0
  %v6934 = vadd.f32 %v6932, %v6933
  %v6935 = vsel %vm2523, %v6846, 0.0
  %v6936 = vadd.f32 %v6934, %v6935
  %v6937 = vsel %vm2523, %v6847, 0.0
  %v6938 = vadd.f32 %v6936, %v6937
  %v6939 = vsel %vm2523, %v6848, 0.0
  %v6940 = vadd.f32 %v6938, %v6939
  %v6941 = vsel %vm2523, %v6849, 0.0
  %v6942 = vadd.f32 %v6940, %v6941
  %v6943 = vsel %vm2523, %v6850, 0.0
  %v6944 = vadd.f32 %v6942, %v6943
  %v6945 = vsel %vm2523, %v6851, 0.0
  %v6946 = vadd.f32 %v6944, %v6945
  %v6947 = vrot.slane %v6946, 4
  %v6948 = vadd.f32 %v6946, %v6947
  %v6949 = vrot.slane %v6948, 2
  %v6950 = vadd.f32 %v6948, %v6949
  %v6951 = vrot.slane %v6950, 1
  %v6952 = vadd.f32 %v6950, %v6951
  %v6953 = vsel %vm2523, %v6852, 0.0
  %v6954 = vsel %vm2523, %v6853, 0.0
  %v6955 = vadd.f32 %v6953, %v6954
  %v6956 = vsel %vm2523, %v6854, 0.0
  %v6957 = vadd.f32 %v6955, %v6956
  %v6958 = vsel %vm2523, %v6855, 0.0
  %v6959 = vadd.f32 %v6957, %v6958
  %v6960 = vsel %vm2523, %v6856, 0.0
  %v6961 = vadd.f32 %v6959, %v6960
  %v6962 = vsel %vm2523, %v6857, 0.0
  %v6963 = vadd.f32 %v6961, %v6962
  %v6964 = vsel %vm2523, %v6858, 0.0
  %v6965 = vadd.f32 %v6963, %v6964
  %v6966 = vsel %vm2523, %v6859, 0.0
  %v6967 = vadd.f32 %v6965, %v6966
  %v6968 = vsel %vm2523, %v6860, 0.0
  %v6969 = vadd.f32 %v6967, %v6968
  %v6970 = vsel %vm2523, %v6861, 0.0
  %v6971 = vadd.f32 %v6969, %v6970
  %v6972 = vsel %vm2523, %v6862, 0.0
  %v6973 = vadd.f32 %v6971, %v6972
  %v6974 = vsel %vm2523, %v6863, 0.0
  %v6975 = vadd.f32 %v6973, %v6974
  %v6976 = vsel %vm2523, %v6864, 0.0
  %v6977 = vadd.f32 %v6975, %v6976
  %v6978 = vsel %vm2523, %v6865, 0.0
  %v6979 = vadd.f32 %v6977, %v6978
  %v6980 = vsel %vm2523, %v6866, 0.0
  %v6981 = vadd.f32 %v6979, %v6980
  %v6982 = vsel %vm2523, %v6867, 0.0
  %v6983 = vadd.f32 %v6981, %v6982
  %v6984 = vsel %vm2523, %v6868, 0.0
  %v6985 = vadd.f32 %v6983, %v6984
  %v6986 = vsel %vm2523, %v6869, 0.0
  %v6987 = vadd.f32 %v6985, %v6986
  %v6988 = vsel %vm2523, %v6870, 0.0
  %v6989 = vadd.f32 %v6987, %v6988
  %v6990 = vsel %vm2523, %v6871, 0.0
  %v6991 = vadd.f32 %v6989, %v6990
  %v6992 = vsel %vm2523, %v6872, 0.0
  %v6993 = vadd.f32 %v6991, %v6992
  %v6994 = vsel %vm2523, %v6873, 0.0
  %v6995 = vadd.f32 %v6993, %v6994
  %v6996 = vsel %vm2523, %v6874, 0.0
  %v6997 = vadd.f32 %v6995, %v6996
  %v6998 = vsel %vm2523, %v6875, 0.0
  %v6999 = vadd.f32 %v6997, %v6998
  %v7000 = vsel %vm2523, %v6876, 0.0
  %v7001 = vadd.f32 %v6999, %v7000
  %v7002 = vsel %vm2523, %v6877, 0.0
  %v7003 = vadd.f32 %v7001, %v7002
  %v7004 = vsel %vm2523, %v6878, 0.0
  %v7005 = vadd.f32 %v7003, %v7004
  %v7006 = vsel %vm2523, %v6879, 0.0
  %v7007 = vadd.f32 %v7005, %v7006
  %v7008 = vsel %vm2523, %v6880, 0.0
  %v7009 = vadd.f32 %v7007, %v7008
  %v7010 = vsel %vm2523, %v6881, 0.0
  %v7011 = vadd.f32 %v7009, %v7010
  %v7012 = vsel %vm2523, %v6882, 0.0
  %v7013 = vadd.f32 %v7011, %v7012
  %v7014 = vsel %vm2523, %v6883, 0.0
  %v7015 = vadd.f32 %v7013, %v7014
  %v7016 = vrot.slane %v7015, 4
  %v7017 = vadd.f32 %v7015, %v7016
  %v7018 = vrot.slane %v7017, 2
  %v7019 = vadd.f32 %v7017, %v7018
  %v7020 = vrot.slane %v7019, 1
  %v7021 = vadd.f32 %v7019, %v7020
  %v7022 = vsel %vm167, %v6952, %v7021
  %v7023 = vld [vmem:[%s5] sm:$0xff]
  %v7024 = vld [vmem:[%s5 + $0x8] sm:$0xff]
  %v7025 = vld [vmem:[%s6] sm:$0x1]
  %v7027 = vlaneseq
  %v7028 = vshrl.u32 %v7027, 7
  %v7029 = vsub.s32 0, %v7028
  %v7030 = vrot.slane %v7025, %v7029
  %v7033 = vsel %vm2523, %v7022, 0
  %7035 = vmatprep.subr.mxu0 0.0
  %7036 = vmatpush1.msra.mxu0 %v7023
  %7037 = vmatprep.subr.mxu0 0.0
  %7038 = vmatpush1.msra.mxu0 %v7024
  %7039 = vmatprep.subr.mxu0 0.0
  %7040 = vmatpush1.msra.mxu0 0.0
  %7041 = vmatprep.subr.mxu0 0.0
  %7042 = vmatpush1.msra.mxu0 0.0
  %7043 = vmatprep.subr.mxu0 0.0
  %7044 = vmatpush1.msra.mxu0 0.0
  %7045 = vmatprep.subr.mxu0 0.0
  %7046 = vmatpush1.msra.mxu0 0.0
  %7047 = vmatprep.subr.mxu0 0.0
  %7048 = vmatpush1.msra.mxu0 0.0
  %7049 = vmatprep.subr.mxu0 0.0
  %7050 = vmatpush1.msra.mxu0 0.0
  %7051 = vmatprep.subr.mxu0 0.0
  %7052 = vmatpush1.msra.mxu0 0.0
  %7053 = vmatprep.subr.mxu0 0.0
  %7054 = vmatpush1.msra.mxu0 0.0
  %7055 = vmatprep.subr.mxu0 0.0
  %7056 = vmatpush1.msra.mxu0 0.0
  %7057 = vmatprep.subr.mxu0 0.0
  %7058 = vmatpush1.msra.mxu0 0.0
  %7059 = vmatprep.subr.mxu0 0.0
  %7060 = vmatpush1.msra.mxu0 0.0
  %7061 = vmatprep.subr.mxu0 0.0
  %7062 = vmatpush1.msra.mxu0 0.0
  %7063 = vmatprep.subr.mxu0 0.0
  %7064 = vmatpush1.msra.mxu0 0.0
  %7065 = vmatprep.subr.mxu0 0.0
  %7066 = vmatpush1.msra.mxu0 0.0
  %7067 = vmatprep.subr.mxu0 0.0
  %7068 = vmatpush1.msra.mxu0 0.0
  %7069 = vmatprep.subr.mxu0 0.0
  %7070 = vmatpush1.msra.mxu0 0.0
  %7071 = vmatprep.subr.mxu0 0.0
  %7072 = vmatpush1.msra.mxu0 0.0
  %7073 = vmatprep.subr.mxu0 0.0
  %7074 = vmatpush1.msra.mxu0 0.0
  %7075 = vmatprep.subr.mxu0 0.0
  %7076 = vmatpush1.msra.mxu0 0.0
  %7077 = vmatprep.subr.mxu0 0.0
  %7078 = vmatpush1.msra.mxu0 0.0
  %7079 = vmatprep.subr.mxu0 0.0
  %7080 = vmatpush1.msra.mxu0 0.0
  %7081 = vmatprep.subr.mxu0 0.0
  %7082 = vmatpush1.msra.mxu0 0.0
  %7083 = vmatprep.subr.mxu0 0.0
  %7084 = vmatpush1.msra.mxu0 0.0
  %7085 = vmatprep.subr.mxu0 0.0
  %7086 = vmatpush1.msra.mxu0 0.0
  %7087 = vmatprep.subr.mxu0 0.0
  %7088 = vmatpush1.msra.mxu0 0.0
  %7089 = vmatprep.subr.mxu0 0.0
  %7090 = vmatpush1.msra.mxu0 0.0
  %7091 = vmatprep.subr.mxu0 0.0
  %7092 = vmatpush1.msra.mxu0 0.0
  %7093 = vmatprep.subr.mxu0 0.0
  %7094 = vmatpush1.msra.mxu0 0.0
  %7095 = vmatprep.subr.mxu0 0.0
  %7096 = vmatpush1.msra.mxu0 0.0
  %7097 = vmatprep.subr.mxu0 0.0
  %7098 = vmatpush1.msra.mxu0 0.0
  %7099 = vmatprep.mubr.f32.mxu0 0.0
  %7100 = vmatmul.mubr.f32.gmra.mrb[0].mxu0 %v7033
  %v7101 = vpop.f32.mrb[0].mxu0
  %v7102 = vadd.f32 %v7030, %v7101
  %v7103 = vpop.f32.mrb[0].mxu0
  %7104 = vdwg.mxu0
  %v7105 = vmax.f32 %v7102, 0.0
  %v7106 = vld [vmem:[%s7] sm:$0xff]
  %v7107 = vld [vmem:[%s7 + $0x8] sm:$0xff]
  %v7108 = vld [vmem:[%s7 + $0x10] sm:$0xff]
  %v7109 = vld [vmem:[%s7 + $0x18] sm:$0xff]
  %v7110 = vld [vmem:[%s8] sm:$0x1]
  %v7112 = vlaneseq
  %v7113 = vshrl.u32 %v7112, 7
  %v7114 = vsub.s32 0, %v7113
  %v7115 = vrot.slane %v7110, %v7114
  %v7118 = vsel %vm2783, %v7105, 0
  %7120 = vmatprep.subr.mxu0 0.0
  %7121 = vmatpush1.msra.mxu0 %v7106
  %7122 = vmatprep.subr.mxu0 0.0
  %7123 = vmatpush1.msra.mxu0 %v7107
  %7124 = vmatprep.subr.mxu0 0.0
  %7125 = vmatpush1.msra.mxu0 %v7108
  %7126 = vmatprep.subr.mxu0 0.0
  %7127 = vmatpush1.msra.mxu0 %v7109
  %7128 = vmatprep.subr.mxu0 0.0
  %7129 = vmatpush1.msra.mxu0 0.0
  %7130 = vmatprep.subr.mxu0 0.0
  %7131 = vmatpush1.msra.mxu0 0.0
  %7132 = vmatprep.subr.mxu0 0.0
  %7133 = vmatpush1.msra.mxu0 0.0
  %7134 = vmatprep.subr.mxu0 0.0
  %7135 = vmatpush1.msra.mxu0 0.0
  %7136 = vmatprep.subr.mxu0 0.0
  %7137 = vmatpush1.msra.mxu0 0.0
  %7138 = vmatprep.subr.mxu0 0.0
  %7139 = vmatpush1.msra.mxu0 0.0
  %7140 = vmatprep.subr.mxu0 0.0
  %7141 = vmatpush1.msra.mxu0 0.0
  %7142 = vmatprep.subr.mxu0 0.0
  %7143 = vmatpush1.msra.mxu0 0.0
  %7144 = vmatprep.subr.mxu0 0.0
  %7145 = vmatpush1.msra.mxu0 0.0
  %7146 = vmatprep.subr.mxu0 0.0
  %7147 = vmatpush1.msra.mxu0 0.0
  %7148 = vmatprep.subr.mxu0 0.0
  %7149 = vmatpush1.msra.mxu0 0.0
  %7150 = vmatprep.subr.mxu0 0.0
  %7151 = vmatpush1.msra.mxu0 0.0
  %7152 = vmatprep.subr.mxu0 0.0
  %7153 = vmatpush1.msra.mxu0 0.0
  %7154 = vmatprep.subr.mxu0 0.0
  %7155 = vmatpush1.msra.mxu0 0.0
  %7156 = vmatprep.subr.mxu0 0.0
  %7157 = vmatpush1.msra.mxu0 0.0
  %7158 = vmatprep.subr.mxu0 0.0
  %7159 = vmatpush1.msra.mxu0 0.0
  %7160 = vmatprep.subr.mxu0 0.0
  %7161 = vmatpush1.msra.mxu0 0.0
  %7162 = vmatprep.subr.mxu0 0.0
  %7163 = vmatpush1.msra.mxu0 0.0
  %7164 = vmatprep.subr.mxu0 0.0
  %7165 = vmatpush1.msra.mxu0 0.0
  %7166 = vmatprep.subr.mxu0 0.0
  %7167 = vmatpush1.msra.mxu0 0.0
  %7168 = vmatprep.subr.mxu0 0.0
  %7169 = vmatpush1.msra.mxu0 0.0
  %7170 = vmatprep.subr.mxu0 0.0
  %7171 = vmatpush1.msra.mxu0 0.0
  %7172 = vmatprep.subr.mxu0 0.0
  %7173 = vmatpush1.msra.mxu0 0.0
  %7174 = vmatprep.subr.mxu0 0.0
  %7175 = vmatpush1.msra.mxu0 0.0
  %7176 = vmatprep.subr.mxu0 0.0
  %7177 = vmatpush1.msra.mxu0 0.0
  %7178 = vmatprep.subr.mxu0 0.0
  %7179 = vmatpush1.msra.mxu0 0.0
  %7180 = vmatprep.subr.mxu0 0.0
  %7181 = vmatpush1.msra.mxu0 0.0
  %7182 = vmatprep.subr.mxu0 0.0
  %7183 = vmatpush1.msra.mxu0 0.0
  %7184 = vmatprep.mubr.f32.mxu0 0.0
  %7185 = vmatmul.mubr.f32.gmra.mrb[0].mxu0 %v7118
  %v7186 = vpop.f32.mrb[0].mxu0
  %v7187 = vadd.f32 %v7115, %v7186
  %v7188 = vpop.f32.mrb[0].mxu0
  %7189 = vdwg.mxu0
  %v7190 = vmax.f32 %v7187, 0.0
  %v7191 = vld [vmem:[%s9] sm:$0xff]
  %v7192 = vld [vmem:[%s9 + $0x8] sm:$0xff]
  %v7193 = vld [vmem:[%s10] sm:$0x1]
  %v7195 = vlaneseq
  %v7196 = vshrl.u32 %v7195, 7
  %v7197 = vsub.s32 0, %v7196
  %v7198 = vrot.slane %v7193, %v7197
  %7201 = vrot.lane.b32.xlu0 %v7190, 118
  %v7202 = vpop.permute.xlu0 %7201
  %v7203 = vsel %vm2523, %v7202, 0
  %7205 = vmatprep.subr.mxu0 0.0
  %7206 = vmatpush1.msra.mxu0 %v7191
  %7207 = vmatprep.subr.mxu0 0.0
  %7208 = vmatpush1.msra.mxu0 %v7192
  %7209 = vmatprep.subr.mxu0 0.0
  %7210 = vmatpush1.msra.mxu0 0.0
  %7211 = vmatprep.subr.mxu0 0.0
  %7212 = vmatpush1.msra.mxu0 0.0
  %7213 = vmatprep.subr.mxu0 0.0
  %7214 = vmatpush1.msra.mxu0 0.0
  %7215 = vmatprep.subr.mxu0 0.0
  %7216 = vmatpush1.msra.mxu0 0.0
  %7217 = vmatprep.subr.mxu0 0.0
  %7218 = vmatpush1.msra.mxu0 0.0
  %7219 = vmatprep.subr.mxu0 0.0
  %7220 = vmatpush1.msra.mxu0 0.0
  %7221 = vmatprep.subr.mxu0 0.0
  %7222 = vmatpush1.msra.mxu0 0.0
  %7223 = vmatprep.subr.mxu0 0.0
  %7224 = vmatpush1.msra.mxu0 0.0
  %7225 = vmatprep.subr.mxu0 0.0
  %7226 = vmatpush1.msra.mxu0 0.0
  %7227 = vmatprep.subr.mxu0 0.0
  %7228 = vmatpush1.msra.mxu0 0.0
  %7229 = vmatprep.subr.mxu0 0.0
  %7230 = vmatpush1.msra.mxu0 0.0
  %7231 = vmatprep.subr.mxu0 0.0
  %7232 = vmatpush1.msra.mxu0 0.0
  %7233 = vmatprep.subr.mxu0 0.0
  %7234 = vmatpush1.msra.mxu0 0.0
  %7235 = vmatprep.subr.mxu0 0.0
  %7236 = vmatpush1.msra.mxu0 0.0
  %7237 = vmatprep.subr.mxu0 0.0
  %7238 = vmatpush1.msra.mxu0 0.0
  %7239 = vmatprep.subr.mxu0 0.0
  %7240 = vmatpush1.msra.mxu0 0.0
  %7241 = vmatprep.subr.mxu0 0.0
  %7242 = vmatpush1.msra.mxu0 0.0
  %7243 = vmatprep.subr.mxu0 0.0
  %7244 = vmatpush1.msra.mxu0 0.0
  %7245 = vmatprep.subr.mxu0 0.0
  %7246 = vmatpush1.msra.mxu0 0.0
  %7247 = vmatprep.subr.mxu0 0.0
  %7248 = vmatpush1.msra.mxu0 0.0
  %7249 = vmatprep.subr.mxu0 0.0
  %7250 = vmatpush1.msra.mxu0 0.0
  %7251 = vmatprep.subr.mxu0 0.0
  %7252 = vmatpush1.msra.mxu0 0.0
  %7253 = vmatprep.subr.mxu0 0.0
  %7254 = vmatpush1.msra.mxu0 0.0
  %7255 = vmatprep.subr.mxu0 0.0
  %7256 = vmatpush1.msra.mxu0 0.0
  %7257 = vmatprep.subr.mxu0 0.0
  %7258 = vmatpush1.msra.mxu0 0.0
  %7259 = vmatprep.subr.mxu0 0.0
  %7260 = vmatpush1.msra.mxu0 0.0
  %7261 = vmatprep.subr.mxu0 0.0
  %7262 = vmatpush1.msra.mxu0 0.0
  %7263 = vmatprep.subr.mxu0 0.0
  %7264 = vmatpush1.msra.mxu0 0.0
  %7265 = vmatprep.subr.mxu0 0.0
  %7266 = vmatpush1.msra.mxu0 0.0
  %7267 = vmatprep.subr.mxu0 0.0
  %7268 = vmatpush1.msra.mxu0 0.0
  %7269 = vmatprep.mubr.f32.mxu0 0.0
  %7270 = vmatmul.mubr.f32.gmra.mrb[0].mxu0 %v7203
  %v7271 = vpop.f32.mrb[0].mxu0
  %v7272 = vadd.f32 %v7198, %v7271
  %v7273 = vpop.f32.mrb[0].mxu0
  %7274 = vdwg.mxu0
  %7276 = vrot.lane.b32.xlu0 %v7187, 32
  %v7277 = vpop.permute.xlu0 %7276
  %7280 = vrot.lane.b32.xlu0 %v7272, 42
  %v7281 = vpop.permute.xlu0 %7280
  %v7283 = vsel %vm2783, %v7105, %v7277
  %vm7284 = vcmask 343040
  %v7285 = vsel %vm7284, %v7283, %v7281
  %vm7286 = vcmask 359424
  %v7287 = vsel %vm7286, %v7285, 0.0
  %7288 = vst [vmem:[%s11] sm:$0x3] %v7287
  // Predicated region
  $region46: #{dann_forward.1} parent=0 // pred_check
    _
  $region47: #{dann_forward.1} parent=0 // pred_check_branch
    %7290 = sbr.rel (0) target = $region49
  $region48: #{dann_forward.1} parent=0 // pred_region
    _
  $region49: #{dann_forward.1} parent=0 // pred_fallthru
    _
  // Predicated region
  $region50: #{dann_forward.1} parent=0 // pred_check
    _
  $region51: #{dann_forward.1} parent=0 // pred_check_branch
    %7292 = sbr.rel (0) target = $region53
  $region52: #{dann_forward.1} parent=0 // pred_region
    _
  $region53: #{dann_forward.1} parent=0 // pred_fallthru
    _

</llo_original>
